<compile_context>
chip_gen: v6e
topology: v6e:2x2x1
jax: 0.10.0
libtpu: 0.0.40
codegen_flags: <defaults>
</compile_context>

<pallas_src>
import math

import jax
import jax.numpy as jnp
from jax import lax
from jax.experimental import pallas as pl
from jax.experimental.pallas import tpu as pltpu

# ---- module constants (from InterpretableCNN.__init__) ----
C_IN = 30      # pointwise conv in-channels
C_MID = 16     # pointwise out-channels == depthwise groups
C_OUT = 32     # depthwise out-channels (2 per group)
KS = 64        # depthwise kernel size
PAD = 31       # depthwise padding
N_CLS = 2      # fc out features
BN_EPS = 1e-5

OUT_PAD = 128            # padded class dim for the FC matmul
BT_MAX = 32              # max batch samples per grid step
VMEM_BUDGET = 40 * 2**20 # per-step VMEM budget (headroom under v7x 64 MiB)


def _round_up(n, m):
    return -(-n // m) * m


def _depthwise_geometry(L):
    LOUT = L + 2 * PAD - KS + 1          # = L - 1 for this module
    assert LOUT >= 1, "sequence too short for the depthwise conv"
    CH = min(256, _round_up(LOUT, 128))  # output-lane chunk (<= 256 lanes)
    n_chunks = -(-LOUT // CH)
    WPAD = n_chunks * CH + 128           # padded per-sample buffer width
    return LOUT, CH, n_chunks, WPAD


def _vmem_bytes(bt, L):
    _, _, _, WPAD = _depthwise_geometry(L)
    lb = bt * L
    return (C_IN * lb * 2 * 2            # x block (bf16, double buffered)
            + C_MID * lb * 4             # y1 scratch
            + C_MID * WPAD * 4           # padded-sample scratch
            + OUT_PAD * bt * 4 * 2       # out block
            + 64 * 1024)                 # params


def _choose_bt(B, L):
    # smallest Bt such that (Bt * L) % 128 == 0 (lane alignment of the x block)
    lane_mult = 128 // math.gcd(L, 128)
    if B <= lane_mult:
        return B                         # single grid step -> full-extent block
    bt = lane_mult
    while bt * 2 <= BT_MAX:              # amortize the ~0.35us per-step overhead
        bt *= 2
    while bt > lane_mult and -(-B // bt) < 2:   # v7x megacore: >= 2 grid steps
        bt //= 2
    while bt > lane_mult and _vmem_bytes(bt, L) > VMEM_BUDGET:
        bt //= 2
    return bt


def _make_kernel(Bt, L):
    LOUT, CH, n_chunks, WPAD = _depthwise_geometry(L)

    def kernel(x_ref, w1_ref, b1_ref, w2_ref, b2_ref, fcw_ref, fcb_ref,
               out_ref, y1_ref, pbuf_ref):
        # ---- hoisted per-step loads / constants ----
        w2v = w2_ref[...]                      # (16, 128): [even taps | odd taps]
        b2e = b2_ref[:, 0:1]                   # (16, 1) bias, even output channels
        b2o = b2_ref[:, 1:2]                   # (16, 1) bias, odd output channels
        col_iota = lax.broadcasted_iota(jnp.int32, (1, Bt), 1)
        last_mask = None
        if n_chunks * CH > LOUT:
            lane = lax.broadcasted_iota(jnp.int32, (1, CH), 1)
            last_base = (n_chunks - 1) * CH
            last_mask = (lane < (LOUT - last_base)).astype(jnp.float32)

        # zero the padded per-sample buffer every grid step (scratch is per-core;
        # do NOT gate this on program_id == 0, grid steps may shard across TCs)
        pbuf_ref[...] = jnp.zeros((C_MID, WPAD), jnp.float32)

        # ---- pointwise conv (kernel_size=1): ONE MXU call for the whole tile ----
        y1_ref[...] = (jnp.dot(w1_ref[...], x_ref[...],
                               preferred_element_type=jnp.float32)
                       + b1_ref[...])          # (16, Bt*L) f32

        # ---- per-sample depthwise conv + ReLU + masked GAP (BN folded into FC) ----
        def one_sample(b, m_e, m_o):
            off = b * L
            if L % 128 == 0:
                off = pl.multiple_of(off, 128)
            # padded signal: pbuf[j] = y1_b[j - PAD], zeros elsewhere act as the
            # conv zero-padding.  Junk lanes t >= LOUT still see real data near the
            # right edge, so they MUST be masked before the GAP sum (never remove).
            pbuf_ref[:, PAD:PAD + L] = y1_ref[:, pl.ds(off, L)]

            sum_e = jnp.zeros((C_MID, 1), jnp.float32)
            sum_o = jnp.zeros((C_MID, 1), jnp.float32)
            for c in range(n_chunks):                      # static chunk loop
                base = c * CH
                win = pbuf_ref[:, base:base + CH + 128]    # (16, CH+128), aligned load
                pe = [jnp.zeros((C_MID, CH), jnp.float32) for _ in range(2)]
                po = [jnp.zeros((C_MID, CH), jnp.float32) for _ in range(2)]
                for k in range(KS):                        # static, fully unrolled
                    s = win[:, k:k + CH]                   # sliding window, static slice
                    pe[k & 1] = pe[k & 1] + w2v[:, k:k + 1] * s
                    po[k & 1] = po[k & 1] + w2v[:, KS + k:KS + k + 1] * s
                y_e = jnp.maximum(pe[0] + pe[1] + b2e, 0.0)
                y_o = jnp.maximum(po[0] + po[1] + b2o, 0.0)
                if base + CH > LOUT:                       # last chunk only
                    y_e = y_e * last_mask
                    y_o = y_o * last_mask
                sum_e = sum_e + jnp.sum(y_e, axis=-1, keepdims=True)
                sum_o = sum_o + jnp.sum(y_o, axis=-1, keepdims=True)

            onehot = (col_iota == b).astype(jnp.float32)   # select column b
            return m_e + sum_e * onehot, m_o + sum_o * onehot

        U = 2 if (Bt % 2 == 0 and Bt >= 4) else 1

        def sample_group(g, carry):
            m_e, m_o = carry
            for u in range(U):                             # static inner unroll
                m_e, m_o = one_sample(g * U + u, m_e, m_o)
            return m_e, m_o

        m_e, m_o = lax.fori_loop(
            0, Bt // U, sample_group,
            (jnp.zeros((C_MID, Bt), jnp.float32),
             jnp.zeros((C_MID, Bt), jnp.float32)))

        # ---- FC head on the MXU (BN scale/shift and 1/LOUT pre-folded) ----
        m_all = jnp.concatenate([m_e, m_o], axis=0)        # (32, Bt) pooled sums
        logits_t = jnp.dot(fcw_ref[...], m_all,
                           preferred_element_type=jnp.float32)   # (128, Bt)
        out_ref[0] = logits_t + fcb_ref[...]

    return kernel


def _prepare_params(params, LOUT):
    w1 = params["w1"].astype(jnp.bfloat16)                       # (16, 30)
    b1 = params["b1"].reshape(C_MID, 1).astype(jnp.float32)      # (16, 1)

    w2 = params["w2"].astype(jnp.float32)                        # (32, 64)
    b2 = params["b2"].astype(jnp.float32)                        # (32,)
    # even output channels (2c) in lanes [0,64), odd (2c+1) in lanes [64,128)
    w2v = jnp.concatenate([w2[0::2], w2[1::2]], axis=1)          # (16, 128)
    b2r = jnp.stack([b2[0::2], b2[1::2]], axis=-1)               # (16, 2)

    # eval-mode BatchNorm folded through the (linear) GAP + FC: exact
    scale = params["gamma"] / jnp.sqrt(params["rvar"] + BN_EPS)  # (32,)
    shift = params["beta"] - params["rmean"] * scale             # (32,)
    fcw = params["fcw"].astype(jnp.float32)                      # (2, 32)
    fcb = params["fcb"].astype(jnp.float32)                      # (2,)
    fcw_eff = fcw * scale[None, :] / LOUT                        # GAP 1/LOUT folded in
    fcb_eff = fcb + fcw @ shift
    # reorder channels to [even | odd] to match the kernel's pooled-sum layout,
    # transposed + zero-padded so the FC runs as (128, 32) @ (32, Bt) on the MXU
    fcw_re = jnp.concatenate([fcw_eff[:, 0::2], fcw_eff[:, 1::2]], axis=1)  # (2, 32)
    fcwT = jnp.zeros((OUT_PAD, C_OUT), jnp.float32).at[:N_CLS, :].set(fcw_re)
    fcbT = jnp.zeros((OUT_PAD, 1), jnp.float32).at[:N_CLS, 0].set(fcb_eff)
    return w1, b1, w2v, b2r, fcwT, fcbT


def interpretable_cnn_forward(x, params):
    B, cin, L = x.shape
    assert cin == C_IN
    LOUT = L + 2 * PAD - KS + 1
    Bt = _choose_bt(B, L)
    B_pad = _round_up(B, Bt)
    n_steps = B_pad // Bt

    xp = jnp.asarray(x, jnp.float32)
    if B_pad != B:
        xp = jnp.pad(xp, ((0, B_pad - B), (0, 0), (0, 0)))
    # lane-dense layout for one fused pointwise matmul per grid step; bf16 halves
    # the HBM traffic of the dominant input stream
    x2 = jnp.transpose(xp, (1, 0, 2)).reshape(C_IN, B_pad * L).astype(jnp.bfloat16)

    w1, b1, w2v, b2r, fcwT, fcbT = _prepare_params(params, LOUT)
    kernel = _make_kernel(Bt, L)
    WPAD = _depthwise_geometry(L)[3]

    out = pl.pallas_call(
        kernel,
        out_shape=jax.ShapeDtypeStruct((n_steps, OUT_PAD, Bt), jnp.float32),
        grid_spec=pltpu.PrefetchScalarGridSpec(
            num_scalar_prefetch=0,
            grid=(n_steps,),
            in_specs=[
                pl.BlockSpec((C_IN, Bt * L), lambda i: (0, i)),
                pl.BlockSpec((C_MID, C_IN), lambda i: (0, 0)),
                pl.BlockSpec((C_MID, 1), lambda i: (0, 0)),
                pl.BlockSpec((C_MID, 2 * KS), lambda i: (0, 0)),
                pl.BlockSpec((C_MID, 2), lambda i: (0, 0)),
                pl.BlockSpec((OUT_PAD, C_OUT), lambda i: (0, 0)),
                pl.BlockSpec((OUT_PAD, 1), lambda i: (0, 0)),
            ],
            out_specs=pl.BlockSpec((1, OUT_PAD, Bt), lambda i: (i, 0, 0)),
            scratch_shapes=[
                pltpu.VMEM((C_MID, Bt * L), jnp.float32),   # pointwise output slab
                pltpu.VMEM((C_MID, WPAD), jnp.float32),     # padded per-sample buffer
            ]),
        compiler_params=pltpu.CompilerParams(
            dimension_semantics=("parallel",),
            vmem_limit_bytes=int(min(56 * 2**20,
                                     max(32 * 2**20, 2 * _vmem_bytes(Bt, L))))),
    )(x2, w1, b1, w2v, b2r, fcwT, fcbT)

    # (n_steps, 128, Bt) -> (B_pad, 128) -> (B, 2)
    out = jnp.transpose(out, (0, 2, 1)).reshape(B_pad, OUT_PAD)
    return out[:B, :N_CLS]


def init_params(key):
    # deterministic, PyTorch-default-style (uniform +- 1/sqrt(fan_in)) init
    ks = jax.random.split(key, 10)
    k_pw = 1.0 / jnp.sqrt(jnp.float32(C_IN * 1))
    k_dw = 1.0 / jnp.sqrt(jnp.float32(1 * KS))
    k_fc = 1.0 / jnp.sqrt(jnp.float32(C_OUT))
    return dict(
        w1=jax.random.uniform(ks[0], (C_MID, C_IN), jnp.float32, -k_pw, k_pw),
        b1=jax.random.uniform(ks[1], (C_MID,), jnp.float32, -k_pw, k_pw),
        w2=jax.random.uniform(ks[2], (C_OUT, KS), jnp.float32, -k_dw, k_dw),
        b2=jax.random.uniform(ks[3], (C_OUT,), jnp.float32, -k_dw, k_dw),
        gamma=jax.random.uniform(ks[4], (C_OUT,), jnp.float32, 0.5, 1.5),
        beta=0.1 * jax.random.normal(ks[5], (C_OUT,), jnp.float32),
        rmean=0.1 * jax.random.normal(ks[6], (C_OUT,), jnp.float32),
        rvar=jax.random.uniform(ks[7], (C_OUT,), jnp.float32, 0.5, 1.5),
        fcw=jax.random.uniform(ks[8], (N_CLS, C_OUT), jnp.float32, -k_fc, k_fc),
        fcb=jax.random.uniform(ks[9], (N_CLS,), jnp.float32, -k_fc, k_fc),
    )


def reference_forward(x, params):
    # pure-JAX reference (PyTorch eval-mode semantics) for a correctness check
    B, _, L = x.shape
    LOUT = L + 2 * PAD - KS + 1
    y1 = jnp.einsum("oc,bcl->bol", params["w1"], x) + params["b1"][None, :, None]
    xp = jnp.pad(y1, ((0, 0), (0, 0), (PAD, PAD)))
    xp32 = jnp.repeat(xp, 2, axis=1)                 # out-channel co reads group co//2
    y2 = jnp.zeros((B, C_OUT, LOUT), jnp.float32)
    for k in range(KS):
        y2 = y2 + params["w2"][None, :, k:k + 1] * xp32[:, :, k:k + LOUT]
    y2 = jnp.maximum(y2 + params["b2"][None, :, None], 0.0)
    scale = params["gamma"] / jnp.sqrt(params["rvar"] + BN_EPS)
    shift = params["beta"] - params["rmean"] * scale
    y3 = y2 * scale[None, :, None] + shift[None, :, None]
    g = jnp.mean(y3, axis=-1)
    return g @ params["fcw"].T + params["fcb"][None, :]


if __name__ == "__main__":
    key = jax.random.PRNGKey(0)
    k_x, k_p = jax.random.split(key)
    B, L = 2, 128
    x = jax.random.normal(k_x, (B, C_IN, L), jnp.float32)
    params = init_params(k_p)

    out = jax.block_until_ready(interpretable_cnn_forward(x, params))
    assert out.shape == (B, N_CLS), out.shape

    ref = reference_forward(x, params)
    err = float(jnp.max(jnp.abs(out - ref)))
    # tolerance covers the intentional bf16 cast of x/w1 (perf-review item) plus
    # bf16 MXU passes inside both the kernel and the XLA reference einsum
    if err > 2e-2:
        raise AssertionError(f"kernel mismatch vs reference, max abs err = {err}")
    print("KERNEL_OK")
</pallas_src>

<mosaic_0001>
module attributes {stable_mosaic.version = 11 : i64} {
  func.func @kernel(%arg0: i32, %arg1: memref<30x128xbf16, #tpu.memory_space<vmem>>, %arg2: memref<16x30xbf16, #tpu.memory_space<vmem>>, %arg3: memref<16x1xf32, #tpu.memory_space<vmem>>, %arg4: memref<16x128xf32, #tpu.memory_space<vmem>>, %arg5: memref<16x2xf32, #tpu.memory_space<vmem>>, %arg6: memref<128x32xf32, #tpu.memory_space<vmem>>, %arg7: memref<128x1xf32, #tpu.memory_space<vmem>>, %arg8: memref<1x128x1xf32, #tpu.memory_space<vmem>>, %arg9: memref<16x128xf32, #tpu.memory_space<vmem>>, %arg10: memref<16x256xf32, #tpu.memory_space<vmem>>) attributes {dimension_semantics = [#tpu.dimension_semantics<parallel>], iteration_bounds = array<i64: 2>, scalar_prefetch = 0 : i64, scratch_operands = 2 : i64, tpu.core_type = #tpu.core_type<tc>, window_params = [{transform_indices = @transform_0, window_bounds = array<i64: 30, 128>}, {pipeline_mode = #tpu.pipeline_mode<synchronous>, transform_indices = @transform_1, window_bounds = array<i64: 16, 30>}, {pipeline_mode = #tpu.pipeline_mode<synchronous>, transform_indices = @transform_2, window_bounds = array<i64: 16, 1>}, {pipeline_mode = #tpu.pipeline_mode<synchronous>, transform_indices = @transform_3, window_bounds = array<i64: 16, 128>}, {pipeline_mode = #tpu.pipeline_mode<synchronous>, transform_indices = @transform_4, window_bounds = array<i64: 16, 2>}, {pipeline_mode = #tpu.pipeline_mode<synchronous>, transform_indices = @transform_5, window_bounds = array<i64: 128, 32>}, {pipeline_mode = #tpu.pipeline_mode<synchronous>, transform_indices = @transform_6, window_bounds = array<i64: 128, 1>}, {transform_indices = @transform_7, window_bounds = array<i64: 1, 128, 1>}]} {
    %c0 = arith.constant 0 : index
    %c0_0 = arith.constant 0 : index
    %0 = vector.load %arg4[%c0, %c0_0] : memref<16x128xf32, #tpu.memory_space<vmem>>, vector<16x128xf32>
    %c0_1 = arith.constant 0 : index
    %c0_2 = arith.constant 0 : index
    %1 = vector.load %arg5[%c0_1, %c0_2] : memref<16x2xf32, #tpu.memory_space<vmem>>, vector<16x1xf32>
    %c0_3 = arith.constant 0 : index
    %c1 = arith.constant 1 : index
    %2 = vector.load %arg5[%c0_3, %c1] : memref<16x2xf32, #tpu.memory_space<vmem>>, vector<16x1xf32>
    %3 = tpu.iota {dimensions = array<i32: 1>} : vector<1x1xi32>
    %4 = tpu.iota {dimensions = array<i32: 1>} : vector<1x128xi32>
    %c127_i32 = arith.constant 127 : i32
    %5 = vector.broadcast %c127_i32 : i32 to vector<1x128xi32>
    %6 = arith.cmpi slt, %4, %5 : vector<1x128xi32>
    %7 = arith.extui %6 : vector<1x128xi1> to vector<1x128xi32>
    %8 = arith.sitofp %7 : vector<1x128xi32> to vector<1x128xf32>
    %cst = arith.constant 0.000000e+00 : f32
    %9 = vector.broadcast %cst : f32 to vector<16x256xf32>
    %c0_4 = arith.constant 0 : index
    %c0_5 = arith.constant 0 : index
    %10 = vector.load %arg10[%c0_4, %c0_5] : memref<16x256xf32, #tpu.memory_space<vmem>>, vector<16x256xf32>
    tpu.vector_store %arg10[%c0_4, %c0_5], %9 {strides = array<i32>} : memref<16x256xf32, #tpu.memory_space<vmem>>, vector<16x256xf32>,
    %c0_6 = arith.constant 0 : index
    %c0_7 = arith.constant 0 : index
    %11 = vector.load %arg2[%c0_6, %c0_7] : memref<16x30xbf16, #tpu.memory_space<vmem>>, vector<16x30xbf16>
    %c0_8 = arith.constant 0 : index
    %c0_9 = arith.constant 0 : index
    %12 = vector.load %arg1[%c0_8, %c0_9] : memref<30x128xbf16, #tpu.memory_space<vmem>>, vector<30x128xbf16>
    %cst_10 = arith.constant dense<0.000000e+00> : vector<16x128xf32>
    %13 = tpu.matmul %11, %12, %cst_10 {dimension_numbers = #tpu.dot_dimension_numbers<[1], [0], [0], [1], [0, 0, 1, 1], [], []>} : vector<16x30xbf16>, vector<30x128xbf16>, vector<16x128xf32> -> vector<16x128xf32>
    %c0_11 = arith.constant 0 : index
    %c0_12 = arith.constant 0 : index
    %14 = vector.load %arg3[%c0_11, %c0_12] : memref<16x1xf32, #tpu.memory_space<vmem>>, vector<16x1xf32>
    %15 = vector.broadcast %14 : vector<16x1xf32> to vector<16x128xf32>
    %16 = arith.addf %13, %15 : vector<16x128xf32>
    %c0_13 = arith.constant 0 : index
    %c0_14 = arith.constant 0 : index
    %17 = vector.load %arg9[%c0_13, %c0_14] : memref<16x128xf32, #tpu.memory_space<vmem>>, vector<16x128xf32>
    tpu.vector_store %arg9[%c0_13, %c0_14], %16 {strides = array<i32>} : memref<16x128xf32, #tpu.memory_space<vmem>>, vector<16x128xf32>,
    %cst_15 = arith.constant 0.000000e+00 : f32
    %18 = vector.broadcast %cst_15 : f32 to vector<16x1xf32>
    %cst_16 = arith.constant 0.000000e+00 : f32
    %19 = vector.broadcast %cst_16 : f32 to vector<16x1xf32>
    %c0_i32 = arith.constant 0 : i32
    %c1_i32 = arith.constant 1 : i32
    %20 = arith.muli %c0_i32, %c1_i32 : i32
    %c0_i32_17 = arith.constant 0 : i32
    %21 = arith.addi %20, %c0_i32_17 : i32
    %c128_i32 = arith.constant 128 : i32
    %22 = arith.muli %21, %c128_i32 : i32
    %23 = tpu.assume_multiple %22, 128 : i32
    %c0_18 = arith.constant 0 : index
    %24 = arith.index_cast %23 : i32 to index
    %25 = vector.load %arg9[%c0_18, %24] : memref<16x128xf32, #tpu.memory_space<vmem>>, vector<16x128xf32>
    %c0_19 = arith.constant 0 : index
    %c31 = arith.constant 31 : index
    %26 = vector.load %arg10[%c0_19, %c31] : memref<16x256xf32, #tpu.memory_space<vmem>>, vector<16x128xf32>
    tpu.vector_store %arg10[%c0_19, %c31], %25 {strides = array<i32>} : memref<16x256xf32, #tpu.memory_space<vmem>>, vector<16x128xf32>,
    %cst_20 = arith.constant 0.000000e+00 : f32
    %27 = vector.broadcast %cst_20 : f32 to vector<16x1xf32>
    %cst_21 = arith.constant 0.000000e+00 : f32
    %28 = vector.broadcast %cst_21 : f32 to vector<16x1xf32>
    %c0_22 = arith.constant 0 : index
    %c0_23 = arith.constant 0 : index
    %29 = vector.load %arg10[%c0_22, %c0_23] : memref<16x256xf32, #tpu.memory_space<vmem>>, vector<16x256xf32>
    %cst_24 = arith.constant 0.000000e+00 : f32
    %30 = vector.broadcast %cst_24 : f32 to vector<16x128xf32>
    %cst_25 = arith.constant 0.000000e+00 : f32
    %31 = vector.broadcast %cst_25 : f32 to vector<16x128xf32>
    %cst_26 = arith.constant 0.000000e+00 : f32
    %32 = vector.broadcast %cst_26 : f32 to vector<16x128xf32>
    %cst_27 = arith.constant 0.000000e+00 : f32
    %33 = vector.broadcast %cst_27 : f32 to vector<16x128xf32>
    %34 = vector.extract_strided_slice %29 {offsets = [0, 0], sizes = [16, 128], strides = [1, 1]} : vector<16x256xf32> to vector<16x128xf32>
    %35 = vector.extract_strided_slice %0 {offsets = [0, 0], sizes = [16, 1], strides = [1, 1]} : vector<16x128xf32> to vector<16x1xf32>
    %36 = vector.broadcast %35 : vector<16x1xf32> to vector<16x128xf32>
    %37 = arith.mulf %36, %34 : vector<16x128xf32>
    %38 = arith.addf %30, %37 : vector<16x128xf32>
    %39 = vector.extract_strided_slice %0 {offsets = [0, 64], sizes = [16, 1], strides = [1, 1]} : vector<16x128xf32> to vector<16x1xf32>
    %40 = vector.broadcast %39 : vector<16x1xf32> to vector<16x128xf32>
    %41 = arith.mulf %40, %34 : vector<16x128xf32>
    %42 = arith.addf %32, %41 : vector<16x128xf32>
    %43 = vector.extract_strided_slice %29 {offsets = [0, 1], sizes = [16, 128], strides = [1, 1]} : vector<16x256xf32> to vector<16x128xf32>
    %44 = vector.extract_strided_slice %0 {offsets = [0, 1], sizes = [16, 1], strides = [1, 1]} : vector<16x128xf32> to vector<16x1xf32>
    %45 = vector.broadcast %44 : vector<16x1xf32> to vector<16x128xf32>
    %46 = arith.mulf %45, %43 : vector<16x128xf32>
    %47 = arith.addf %31, %46 : vector<16x128xf32>
    %48 = vector.extract_strided_slice %0 {offsets = [0, 65], sizes = [16, 1], strides = [1, 1]} : vector<16x128xf32> to vector<16x1xf32>
    %49 = vector.broadcast %48 : vector<16x1xf32> to vector<16x128xf32>
    %50 = arith.mulf %49, %43 : vector<16x128xf32>
    %51 = arith.addf %33, %50 : vector<16x128xf32>
    %52 = vector.extract_strided_slice %29 {offsets = [0, 2], sizes = [16, 128], strides = [1, 1]} : vector<16x256xf32> to vector<16x128xf32>
    %53 = vector.extract_strided_slice %0 {offsets = [0, 2], sizes = [16, 1], strides = [1, 1]} : vector<16x128xf32> to vector<16x1xf32>
    %54 = vector.broadcast %53 : vector<16x1xf32> to vector<16x128xf32>
    %55 = arith.mulf %54, %52 : vector<16x128xf32>
    %56 = arith.addf %38, %55 : vector<16x128xf32>
    %57 = vector.extract_strided_slice %0 {offsets = [0, 66], sizes = [16, 1], strides = [1, 1]} : vector<16x128xf32> to vector<16x1xf32>
    %58 = vector.broadcast %57 : vector<16x1xf32> to vector<16x128xf32>
    %59 = arith.mulf %58, %52 : vector<16x128xf32>
    %60 = arith.addf %42, %59 : vector<16x128xf32>
    %61 = vector.extract_strided_slice %29 {offsets = [0, 3], sizes = [16, 128], strides = [1, 1]} : vector<16x256xf32> to vector<16x128xf32>
    %62 = vector.extract_strided_slice %0 {offsets = [0, 3], sizes = [16, 1], strides = [1, 1]} : vector<16x128xf32> to vector<16x1xf32>
    %63 = vector.broadcast %62 : vector<16x1xf32> to vector<16x128xf32>
    %64 = arith.mulf %63, %61 : vector<16x128xf32>
    %65 = arith.addf %47, %64 : vector<16x128xf32>
    %66 = vector.extract_strided_slice %0 {offsets = [0, 67], sizes = [16, 1], strides = [1, 1]} : vector<16x128xf32> to vector<16x1xf32>
    %67 = vector.broadcast %66 : vector<16x1xf32> to vector<16x128xf32>
    %68 = arith.mulf %67, %61 : vector<16x128xf32>
    %69 = arith.addf %51, %68 : vector<16x128xf32>
    %70 = vector.extract_strided_slice %29 {offsets = [0, 4], sizes = [16, 128], strides = [1, 1]} : vector<16x256xf32> to vector<16x128xf32>
    %71 = vector.extract_strided_slice %0 {offsets = [0, 4], sizes = [16, 1], strides = [1, 1]} : vector<16x128xf32> to vector<16x1xf32>
    %72 = vector.broadcast %71 : vector<16x1xf32> to vector<16x128xf32>
    %73 = arith.mulf %72, %70 : vector<16x128xf32>
    %74 = arith.addf %56, %73 : vector<16x128xf32>
    %75 = vector.extract_strided_slice %0 {offsets = [0, 68], sizes = [16, 1], strides = [1, 1]} : vector<16x128xf32> to vector<16x1xf32>
    %76 = vector.broadcast %75 : vector<16x1xf32> to vector<16x128xf32>
    %77 = arith.mulf %76, %70 : vector<16x128xf32>
    %78 = arith.addf %60, %77 : vector<16x128xf32>
    %79 = vector.extract_strided_slice %29 {offsets = [0, 5], sizes = [16, 128], strides = [1, 1]} : vector<16x256xf32> to vector<16x128xf32>
    %80 = vector.extract_strided_slice %0 {offsets = [0, 5], sizes = [16, 1], strides = [1, 1]} : vector<16x128xf32> to vector<16x1xf32>
    %81 = vector.broadcast %80 : vector<16x1xf32> to vector<16x128xf32>
    %82 = arith.mulf %81, %79 : vector<16x128xf32>
    %83 = arith.addf %65, %82 : vector<16x128xf32>
    %84 = vector.extract_strided_slice %0 {offsets = [0, 69], sizes = [16, 1], strides = [1, 1]} : vector<16x128xf32> to vector<16x1xf32>
    %85 = vector.broadcast %84 : vector<16x1xf32> to vector<16x128xf32>
    %86 = arith.mulf %85, %79 : vector<16x128xf32>
    %87 = arith.addf %69, %86 : vector<16x128xf32>
    %88 = vector.extract_strided_slice %29 {offsets = [0, 6], sizes = [16, 128], strides = [1, 1]} : vector<16x256xf32> to vector<16x128xf32>
    %89 = vector.extract_strided_slice %0 {offsets = [0, 6], sizes = [16, 1], strides = [1, 1]} : vector<16x128xf32> to vector<16x1xf32>
    %90 = vector.broadcast %89 : vector<16x1xf32> to vector<16x128xf32>
    %91 = arith.mulf %90, %88 : vector<16x128xf32>
    %92 = arith.addf %74, %91 : vector<16x128xf32>
    %93 = vector.extract_strided_slice %0 {offsets = [0, 70], sizes = [16, 1], strides = [1, 1]} : vector<16x128xf32> to vector<16x1xf32>
    %94 = vector.broadcast %93 : vector<16x1xf32> to vector<16x128xf32>
    %95 = arith.mulf %94, %88 : vector<16x128xf32>
    %96 = arith.addf %78, %95 : vector<16x128xf32>
    %97 = vector.extract_strided_slice %29 {offsets = [0, 7], sizes = [16, 128], strides = [1, 1]} : vector<16x256xf32> to vector<16x128xf32>
    %98 = vector.extract_strided_slice %0 {offsets = [0, 7], sizes = [16, 1], strides = [1, 1]} : vector<16x128xf32> to vector<16x1xf32>
    %99 = vector.broadcast %98 : vector<16x1xf32> to vector<16x128xf32>
    %100 = arith.mulf %99, %97 : vector<16x128xf32>
    %101 = arith.addf %83, %100 : vector<16x128xf32>
    %102 = vector.extract_strided_slice %0 {offsets = [0, 71], sizes = [16, 1], strides = [1, 1]} : vector<16x128xf32> to vector<16x1xf32>
    %103 = vector.broadcast %102 : vector<16x1xf32> to vector<16x128xf32>
    %104 = arith.mulf %103, %97 : vector<16x128xf32>
    %105 = arith.addf %87, %104 : vector<16x128xf32>
    %106 = vector.extract_strided_slice %29 {offsets = [0, 8], sizes = [16, 128], strides = [1, 1]} : vector<16x256xf32> to vector<16x128xf32>
    %107 = vector.extract_strided_slice %0 {offsets = [0, 8], sizes = [16, 1], strides = [1, 1]} : vector<16x128xf32> to vector<16x1xf32>
    %108 = vector.broadcast %107 : vector<16x1xf32> to vector<16x128xf32>
    %109 = arith.mulf %108, %106 : vector<16x128xf32>
    %110 = arith.addf %92, %109 : vector<16x128xf32>
    %111 = vector.extract_strided_slice %0 {offsets = [0, 72], sizes = [16, 1], strides = [1, 1]} : vector<16x128xf32> to vector<16x1xf32>
    %112 = vector.broadcast %111 : vector<16x1xf32> to vector<16x128xf32>
    %113 = arith.mulf %112, %106 : vector<16x128xf32>
    %114 = arith.addf %96, %113 : vector<16x128xf32>
    %115 = vector.extract_strided_slice %29 {offsets = [0, 9], sizes = [16, 128], strides = [1, 1]} : vector<16x256xf32> to vector<16x128xf32>
    %116 = vector.extract_strided_slice %0 {offsets = [0, 9], sizes = [16, 1], strides = [1, 1]} : vector<16x128xf32> to vector<16x1xf32>
    %117 = vector.broadcast %116 : vector<16x1xf32> to vector<16x128xf32>
    %118 = arith.mulf %117, %115 : vector<16x128xf32>
    %119 = arith.addf %101, %118 : vector<16x128xf32>
    %120 = vector.extract_strided_slice %0 {offsets = [0, 73], sizes = [16, 1], strides = [1, 1]} : vector<16x128xf32> to vector<16x1xf32>
    %121 = vector.broadcast %120 : vector<16x1xf32> to vector<16x128xf32>
    %122 = arith.mulf %121, %115 : vector<16x128xf32>
    %123 = arith.addf %105, %122 : vector<16x128xf32>
    %124 = vector.extract_strided_slice %29 {offsets = [0, 10], sizes = [16, 128], strides = [1, 1]} : vector<16x256xf32> to vector<16x128xf32>
    %125 = vector.extract_strided_slice %0 {offsets = [0, 10], sizes = [16, 1], strides = [1, 1]} : vector<16x128xf32> to vector<16x1xf32>
    %126 = vector.broadcast %125 : vector<16x1xf32> to vector<16x128xf32>
    %127 = arith.mulf %126, %124 : vector<16x128xf32>
    %128 = arith.addf %110, %127 : vector<16x128xf32>
    %129 = vector.extract_strided_slice %0 {offsets = [0, 74], sizes = [16, 1], strides = [1, 1]} : vector<16x128xf32> to vector<16x1xf32>
    %130 = vector.broadcast %129 : vector<16x1xf32> to vector<16x128xf32>
    %131 = arith.mulf %130, %124 : vector<16x128xf32>
    %132 = arith.addf %114, %131 : vector<16x128xf32>
    %133 = vector.extract_strided_slice %29 {offsets = [0, 11], sizes = [16, 128], strides = [1, 1]} : vector<16x256xf32> to vector<16x128xf32>
    %134 = vector.extract_strided_slice %0 {offsets = [0, 11], sizes = [16, 1], strides = [1, 1]} : vector<16x128xf32> to vector<16x1xf32>
    %135 = vector.broadcast %134 : vector<16x1xf32> to vector<16x128xf32>
    %136 = arith.mulf %135, %133 : vector<16x128xf32>
    %137 = arith.addf %119, %136 : vector<16x128xf32>
    %138 = vector.extract_strided_slice %0 {offsets = [0, 75], sizes = [16, 1], strides = [1, 1]} : vector<16x128xf32> to vector<16x1xf32>
    %139 = vector.broadcast %138 : vector<16x1xf32> to vector<16x128xf32>
    %140 = arith.mulf %139, %133 : vector<16x128xf32>
    %141 = arith.addf %123, %140 : vector<16x128xf32>
    %142 = vector.extract_strided_slice %29 {offsets = [0, 12], sizes = [16, 128], strides = [1, 1]} : vector<16x256xf32> to vector<16x128xf32>
    %143 = vector.extract_strided_slice %0 {offsets = [0, 12], sizes = [16, 1], strides = [1, 1]} : vector<16x128xf32> to vector<16x1xf32>
    %144 = vector.broadcast %143 : vector<16x1xf32> to vector<16x128xf32>
    %145 = arith.mulf %144, %142 : vector<16x128xf32>
    %146 = arith.addf %128, %145 : vector<16x128xf32>
    %147 = vector.extract_strided_slice %0 {offsets = [0, 76], sizes = [16, 1], strides = [1, 1]} : vector<16x128xf32> to vector<16x1xf32>
    %148 = vector.broadcast %147 : vector<16x1xf32> to vector<16x128xf32>
    %149 = arith.mulf %148, %142 : vector<16x128xf32>
    %150 = arith.addf %132, %149 : vector<16x128xf32>
    %151 = vector.extract_strided_slice %29 {offsets = [0, 13], sizes = [16, 128], strides = [1, 1]} : vector<16x256xf32> to vector<16x128xf32>
    %152 = vector.extract_strided_slice %0 {offsets = [0, 13], sizes = [16, 1], strides = [1, 1]} : vector<16x128xf32> to vector<16x1xf32>
    %153 = vector.broadcast %152 : vector<16x1xf32> to vector<16x128xf32>
    %154 = arith.mulf %153, %151 : vector<16x128xf32>
    %155 = arith.addf %137, %154 : vector<16x128xf32>
    %156 = vector.extract_strided_slice %0 {offsets = [0, 77], sizes = [16, 1], strides = [1, 1]} : vector<16x128xf32> to vector<16x1xf32>
    %157 = vector.broadcast %156 : vector<16x1xf32> to vector<16x128xf32>
    %158 = arith.mulf %157, %151 : vector<16x128xf32>
    %159 = arith.addf %141, %158 : vector<16x128xf32>
    %160 = vector.extract_strided_slice %29 {offsets = [0, 14], sizes = [16, 128], strides = [1, 1]} : vector<16x256xf32> to vector<16x128xf32>
    %161 = vector.extract_strided_slice %0 {offsets = [0, 14], sizes = [16, 1], strides = [1, 1]} : vector<16x128xf32> to vector<16x1xf32>
    %162 = vector.broadcast %161 : vector<16x1xf32> to vector<16x128xf32>
    %163 = arith.mulf %162, %160 : vector<16x128xf32>
    %164 = arith.addf %146, %163 : vector<16x128xf32>
    %165 = vector.extract_strided_slice %0 {offsets = [0, 78], sizes = [16, 1], strides = [1, 1]} : vector<16x128xf32> to vector<16x1xf32>
    %166 = vector.broadcast %165 : vector<16x1xf32> to vector<16x128xf32>
    %167 = arith.mulf %166, %160 : vector<16x128xf32>
    %168 = arith.addf %150, %167 : vector<16x128xf32>
    %169 = vector.extract_strided_slice %29 {offsets = [0, 15], sizes = [16, 128], strides = [1, 1]} : vector<16x256xf32> to vector<16x128xf32>
    %170 = vector.extract_strided_slice %0 {offsets = [0, 15], sizes = [16, 1], strides = [1, 1]} : vector<16x128xf32> to vector<16x1xf32>
    %171 = vector.broadcast %170 : vector<16x1xf32> to vector<16x128xf32>
    %172 = arith.mulf %171, %169 : vector<16x128xf32>
    %173 = arith.addf %155, %172 : vector<16x128xf32>
    %174 = vector.extract_strided_slice %0 {offsets = [0, 79], sizes = [16, 1], strides = [1, 1]} : vector<16x128xf32> to vector<16x1xf32>
    %175 = vector.broadcast %174 : vector<16x1xf32> to vector<16x128xf32>
    %176 = arith.mulf %175, %169 : vector<16x128xf32>
    %177 = arith.addf %159, %176 : vector<16x128xf32>
    %178 = vector.extract_strided_slice %29 {offsets = [0, 16], sizes = [16, 128], strides = [1, 1]} : vector<16x256xf32> to vector<16x128xf32>
    %179 = vector.extract_strided_slice %0 {offsets = [0, 16], sizes = [16, 1], strides = [1, 1]} : vector<16x128xf32> to vector<16x1xf32>
    %180 = vector.broadcast %179 : vector<16x1xf32> to vector<16x128xf32>
    %181 = arith.mulf %180, %178 : vector<16x128xf32>
    %182 = arith.addf %164, %181 : vector<16x128xf32>
    %183 = vector.extract_strided_slice %0 {offsets = [0, 80], sizes = [16, 1], strides = [1, 1]} : vector<16x128xf32> to vector<16x1xf32>
    %184 = vector.broadcast %183 : vector<16x1xf32> to vector<16x128xf32>
    %185 = arith.mulf %184, %178 : vector<16x128xf32>
    %186 = arith.addf %168, %185 : vector<16x128xf32>
    %187 = vector.extract_strided_slice %29 {offsets = [0, 17], sizes = [16, 128], strides = [1, 1]} : vector<16x256xf32> to vector<16x128xf32>
    %188 = vector.extract_strided_slice %0 {offsets = [0, 17], sizes = [16, 1], strides = [1, 1]} : vector<16x128xf32> to vector<16x1xf32>
    %189 = vector.broadcast %188 : vector<16x1xf32> to vector<16x128xf32>
    %190 = arith.mulf %189, %187 : vector<16x128xf32>
    %191 = arith.addf %173, %190 : vector<16x128xf32>
    %192 = vector.extract_strided_slice %0 {offsets = [0, 81], sizes = [16, 1], strides = [1, 1]} : vector<16x128xf32> to vector<16x1xf32>
    %193 = vector.broadcast %192 : vector<16x1xf32> to vector<16x128xf32>
    %194 = arith.mulf %193, %187 : vector<16x128xf32>
    %195 = arith.addf %177, %194 : vector<16x128xf32>
    %196 = vector.extract_strided_slice %29 {offsets = [0, 18], sizes = [16, 128], strides = [1, 1]} : vector<16x256xf32> to vector<16x128xf32>
    %197 = vector.extract_strided_slice %0 {offsets = [0, 18], sizes = [16, 1], strides = [1, 1]} : vector<16x128xf32> to vector<16x1xf32>
    %198 = vector.broadcast %197 : vector<16x1xf32> to vector<16x128xf32>
    %199 = arith.mulf %198, %196 : vector<16x128xf32>
    %200 = arith.addf %182, %199 : vector<16x128xf32>
    %201 = vector.extract_strided_slice %0 {offsets = [0, 82], sizes = [16, 1], strides = [1, 1]} : vector<16x128xf32> to vector<16x1xf32>
    %202 = vector.broadcast %201 : vector<16x1xf32> to vector<16x128xf32>
    %203 = arith.mulf %202, %196 : vector<16x128xf32>
    %204 = arith.addf %186, %203 : vector<16x128xf32>
    %205 = vector.extract_strided_slice %29 {offsets = [0, 19], sizes = [16, 128], strides = [1, 1]} : vector<16x256xf32> to vector<16x128xf32>
    %206 = vector.extract_strided_slice %0 {offsets = [0, 19], sizes = [16, 1], strides = [1, 1]} : vector<16x128xf32> to vector<16x1xf32>
    %207 = vector.broadcast %206 : vector<16x1xf32> to vector<16x128xf32>
    %208 = arith.mulf %207, %205 : vector<16x128xf32>
    %209 = arith.addf %191, %208 : vector<16x128xf32>
    %210 = vector.extract_strided_slice %0 {offsets = [0, 83], sizes = [16, 1], strides = [1, 1]} : vector<16x128xf32> to vector<16x1xf32>
    %211 = vector.broadcast %210 : vector<16x1xf32> to vector<16x128xf32>
    %212 = arith.mulf %211, %205 : vector<16x128xf32>
    %213 = arith.addf %195, %212 : vector<16x128xf32>
    %214 = vector.extract_strided_slice %29 {offsets = [0, 20], sizes = [16, 128], strides = [1, 1]} : vector<16x256xf32> to vector<16x128xf32>
    %215 = vector.extract_strided_slice %0 {offsets = [0, 20], sizes = [16, 1], strides = [1, 1]} : vector<16x128xf32> to vector<16x1xf32>
    %216 = vector.broadcast %215 : vector<16x1xf32> to vector<16x128xf32>
    %217 = arith.mulf %216, %214 : vector<16x128xf32>
    %218 = arith.addf %200, %217 : vector<16x128xf32>
    %219 = vector.extract_strided_slice %0 {offsets = [0, 84], sizes = [16, 1], strides = [1, 1]} : vector<16x128xf32> to vector<16x1xf32>
    %220 = vector.broadcast %219 : vector<16x1xf32> to vector<16x128xf32>
    %221 = arith.mulf %220, %214 : vector<16x128xf32>
    %222 = arith.addf %204, %221 : vector<16x128xf32>
    %223 = vector.extract_strided_slice %29 {offsets = [0, 21], sizes = [16, 128], strides = [1, 1]} : vector<16x256xf32> to vector<16x128xf32>
    %224 = vector.extract_strided_slice %0 {offsets = [0, 21], sizes = [16, 1], strides = [1, 1]} : vector<16x128xf32> to vector<16x1xf32>
    %225 = vector.broadcast %224 : vector<16x1xf32> to vector<16x128xf32>
    %226 = arith.mulf %225, %223 : vector<16x128xf32>
    %227 = arith.addf %209, %226 : vector<16x128xf32>
    %228 = vector.extract_strided_slice %0 {offsets = [0, 85], sizes = [16, 1], strides = [1, 1]} : vector<16x128xf32> to vector<16x1xf32>
    %229 = vector.broadcast %228 : vector<16x1xf32> to vector<16x128xf32>
    %230 = arith.mulf %229, %223 : vector<16x128xf32>
    %231 = arith.addf %213, %230 : vector<16x128xf32>
    %232 = vector.extract_strided_slice %29 {offsets = [0, 22], sizes = [16, 128], strides = [1, 1]} : vector<16x256xf32> to vector<16x128xf32>
    %233 = vector.extract_strided_slice %0 {offsets = [0, 22], sizes = [16, 1], strides = [1, 1]} : vector<16x128xf32> to vector<16x1xf32>
    %234 = vector.broadcast %233 : vector<16x1xf32> to vector<16x128xf32>
    %235 = arith.mulf %234, %232 : vector<16x128xf32>
    %236 = arith.addf %218, %235 : vector<16x128xf32>
    %237 = vector.extract_strided_slice %0 {offsets = [0, 86], sizes = [16, 1], strides = [1, 1]} : vector<16x128xf32> to vector<16x1xf32>
    %238 = vector.broadcast %237 : vector<16x1xf32> to vector<16x128xf32>
    %239 = arith.mulf %238, %232 : vector<16x128xf32>
    %240 = arith.addf %222, %239 : vector<16x128xf32>
    %241 = vector.extract_strided_slice %29 {offsets = [0, 23], sizes = [16, 128], strides = [1, 1]} : vector<16x256xf32> to vector<16x128xf32>
    %242 = vector.extract_strided_slice %0 {offsets = [0, 23], sizes = [16, 1], strides = [1, 1]} : vector<16x128xf32> to vector<16x1xf32>
    %243 = vector.broadcast %242 : vector<16x1xf32> to vector<16x128xf32>
    %244 = arith.mulf %243, %241 : vector<16x128xf32>
    %245 = arith.addf %227, %244 : vector<16x128xf32>
    %246 = vector.extract_strided_slice %0 {offsets = [0, 87], sizes = [16, 1], strides = [1, 1]} : vector<16x128xf32> to vector<16x1xf32>
    %247 = vector.broadcast %246 : vector<16x1xf32> to vector<16x128xf32>
    %248 = arith.mulf %247, %241 : vector<16x128xf32>
    %249 = arith.addf %231, %248 : vector<16x128xf32>
    %250 = vector.extract_strided_slice %29 {offsets = [0, 24], sizes = [16, 128], strides = [1, 1]} : vector<16x256xf32> to vector<16x128xf32>
    %251 = vector.extract_strided_slice %0 {offsets = [0, 24], sizes = [16, 1], strides = [1, 1]} : vector<16x128xf32> to vector<16x1xf32>
    %252 = vector.broadcast %251 : vector<16x1xf32> to vector<16x128xf32>
    %253 = arith.mulf %252, %250 : vector<16x128xf32>
    %254 = arith.addf %236, %253 : vector<16x128xf32>
    %255 = vector.extract_strided_slice %0 {offsets = [0, 88], sizes = [16, 1], strides = [1, 1]} : vector<16x128xf32> to vector<16x1xf32>
    %256 = vector.broadcast %255 : vector<16x1xf32> to vector<16x128xf32>
    %257 = arith.mulf %256, %250 : vector<16x128xf32>
    %258 = arith.addf %240, %257 : vector<16x128xf32>
    %259 = vector.extract_strided_slice %29 {offsets = [0, 25], sizes = [16, 128], strides = [1, 1]} : vector<16x256xf32> to vector<16x128xf32>
    %260 = vector.extract_strided_slice %0 {offsets = [0, 25], sizes = [16, 1], strides = [1, 1]} : vector<16x128xf32> to vector<16x1xf32>
    %261 = vector.broadcast %260 : vector<16x1xf32> to vector<16x128xf32>
    %262 = arith.mulf %261, %259 : vector<16x128xf32>
    %263 = arith.addf %245, %262 : vector<16x128xf32>
    %264 = vector.extract_strided_slice %0 {offsets = [0, 89], sizes = [16, 1], strides = [1, 1]} : vector<16x128xf32> to vector<16x1xf32>
    %265 = vector.broadcast %264 : vector<16x1xf32> to vector<16x128xf32>
    %266 = arith.mulf %265, %259 : vector<16x128xf32>
    %267 = arith.addf %249, %266 : vector<16x128xf32>
    %268 = vector.extract_strided_slice %29 {offsets = [0, 26], sizes = [16, 128], strides = [1, 1]} : vector<16x256xf32> to vector<16x128xf32>
    %269 = vector.extract_strided_slice %0 {offsets = [0, 26], sizes = [16, 1], strides = [1, 1]} : vector<16x128xf32> to vector<16x1xf32>
    %270 = vector.broadcast %269 : vector<16x1xf32> to vector<16x128xf32>
    %271 = arith.mulf %270, %268 : vector<16x128xf32>
    %272 = arith.addf %254, %271 : vector<16x128xf32>
    %273 = vector.extract_strided_slice %0 {offsets = [0, 90], sizes = [16, 1], strides = [1, 1]} : vector<16x128xf32> to vector<16x1xf32>
    %274 = vector.broadcast %273 : vector<16x1xf32> to vector<16x128xf32>
    %275 = arith.mulf %274, %268 : vector<16x128xf32>
    %276 = arith.addf %258, %275 : vector<16x128xf32>
    %277 = vector.extract_strided_slice %29 {offsets = [0, 27], sizes = [16, 128], strides = [1, 1]} : vector<16x256xf32> to vector<16x128xf32>
    %278 = vector.extract_strided_slice %0 {offsets = [0, 27], sizes = [16, 1], strides = [1, 1]} : vector<16x128xf32> to vector<16x1xf32>
    %279 = vector.broadcast %278 : vector<16x1xf32> to vector<16x128xf32>
    %280 = arith.mulf %279, %277 : vector<16x128xf32>
    %281 = arith.addf %263, %280 : vector<16x128xf32>
    %282 = vector.extract_strided_slice %0 {offsets = [0, 91], sizes = [16, 1], strides = [1, 1]} : vector<16x128xf32> to vector<16x1xf32>
    %283 = vector.broadcast %282 : vector<16x1xf32> to vector<16x128xf32>
    %284 = arith.mulf %283, %277 : vector<16x128xf32>
    %285 = arith.addf %267, %284 : vector<16x128xf32>
    %286 = vector.extract_strided_slice %29 {offsets = [0, 28], sizes = [16, 128], strides = [1, 1]} : vector<16x256xf32> to vector<16x128xf32>
    %287 = vector.extract_strided_slice %0 {offsets = [0, 28], sizes = [16, 1], strides = [1, 1]} : vector<16x128xf32> to vector<16x1xf32>
    %288 = vector.broadcast %287 : vector<16x1xf32> to vector<16x128xf32>
    %289 = arith.mulf %288, %286 : vector<16x128xf32>
    %290 = arith.addf %272, %289 : vector<16x128xf32>
    %291 = vector.extract_strided_slice %0 {offsets = [0, 92], sizes = [16, 1], strides = [1, 1]} : vector<16x128xf32> to vector<16x1xf32>
    %292 = vector.broadcast %291 : vector<16x1xf32> to vector<16x128xf32>
    %293 = arith.mulf %292, %286 : vector<16x128xf32>
    %294 = arith.addf %276, %293 : vector<16x128xf32>
    %295 = vector.extract_strided_slice %29 {offsets = [0, 29], sizes = [16, 128], strides = [1, 1]} : vector<16x256xf32> to vector<16x128xf32>
    %296 = vector.extract_strided_slice %0 {offsets = [0, 29], sizes = [16, 1], strides = [1, 1]} : vector<16x128xf32> to vector<16x1xf32>
    %297 = vector.broadcast %296 : vector<16x1xf32> to vector<16x128xf32>
    %298 = arith.mulf %297, %295 : vector<16x128xf32>
    %299 = arith.addf %281, %298 : vector<16x128xf32>
    %300 = vector.extract_strided_slice %0 {offsets = [0, 93], sizes = [16, 1], strides = [1, 1]} : vector<16x128xf32> to vector<16x1xf32>
    %301 = vector.broadcast %300 : vector<16x1xf32> to vector<16x128xf32>
    %302 = arith.mulf %301, %295 : vector<16x128xf32>
    %303 = arith.addf %285, %302 : vector<16x128xf32>
    %304 = vector.extract_strided_slice %29 {offsets = [0, 30], sizes = [16, 128], strides = [1, 1]} : vector<16x256xf32> to vector<16x128xf32>
    %305 = vector.extract_strided_slice %0 {offsets = [0, 30], sizes = [16, 1], strides = [1, 1]} : vector<16x128xf32> to vector<16x1xf32>
    %306 = vector.broadcast %305 : vector<16x1xf32> to vector<16x128xf32>
    %307 = arith.mulf %306, %304 : vector<16x128xf32>
    %308 = arith.addf %290, %307 : vector<16x128xf32>
    %309 = vector.extract_strided_slice %0 {offsets = [0, 94], sizes = [16, 1], strides = [1, 1]} : vector<16x128xf32> to vector<16x1xf32>
    %310 = vector.broadcast %309 : vector<16x1xf32> to vector<16x128xf32>
    %311 = arith.mulf %310, %304 : vector<16x128xf32>
    %312 = arith.addf %294, %311 : vector<16x128xf32>
    %313 = vector.extract_strided_slice %29 {offsets = [0, 31], sizes = [16, 128], strides = [1, 1]} : vector<16x256xf32> to vector<16x128xf32>
    %314 = vector.extract_strided_slice %0 {offsets = [0, 31], sizes = [16, 1], strides = [1, 1]} : vector<16x128xf32> to vector<16x1xf32>
    %315 = vector.broadcast %314 : vector<16x1xf32> to vector<16x128xf32>
    %316 = arith.mulf %315, %313 : vector<16x128xf32>
    %317 = arith.addf %299, %316 : vector<16x128xf32>
    %318 = vector.extract_strided_slice %0 {offsets = [0, 95], sizes = [16, 1], strides = [1, 1]} : vector<16x128xf32> to vector<16x1xf32>
    %319 = vector.broadcast %318 : vector<16x1xf32> to vector<16x128xf32>
    %320 = arith.mulf %319, %313 : vector<16x128xf32>
    %321 = arith.addf %303, %320 : vector<16x128xf32>
    %322 = vector.extract_strided_slice %29 {offsets = [0, 32], sizes = [16, 128], strides = [1, 1]} : vector<16x256xf32> to vector<16x128xf32>
    %323 = vector.extract_strided_slice %0 {offsets = [0, 32], sizes = [16, 1], strides = [1, 1]} : vector<16x128xf32> to vector<16x1xf32>
    %324 = vector.broadcast %323 : vector<16x1xf32> to vector<16x128xf32>
    %325 = arith.mulf %324, %322 : vector<16x128xf32>
    %326 = arith.addf %308, %325 : vector<16x128xf32>
    %327 = vector.extract_strided_slice %0 {offsets = [0, 96], sizes = [16, 1], strides = [1, 1]} : vector<16x128xf32> to vector<16x1xf32>
    %328 = vector.broadcast %327 : vector<16x1xf32> to vector<16x128xf32>
    %329 = arith.mulf %328, %322 : vector<16x128xf32>
    %330 = arith.addf %312, %329 : vector<16x128xf32>
    %331 = vector.extract_strided_slice %29 {offsets = [0, 33], sizes = [16, 128], strides = [1, 1]} : vector<16x256xf32> to vector<16x128xf32>
    %332 = vector.extract_strided_slice %0 {offsets = [0, 33], sizes = [16, 1], strides = [1, 1]} : vector<16x128xf32> to vector<16x1xf32>
    %333 = vector.broadcast %332 : vector<16x1xf32> to vector<16x128xf32>
    %334 = arith.mulf %333, %331 : vector<16x128xf32>
    %335 = arith.addf %317, %334 : vector<16x128xf32>
    %336 = vector.extract_strided_slice %0 {offsets = [0, 97], sizes = [16, 1], strides = [1, 1]} : vector<16x128xf32> to vector<16x1xf32>
    %337 = vector.broadcast %336 : vector<16x1xf32> to vector<16x128xf32>
    %338 = arith.mulf %337, %331 : vector<16x128xf32>
    %339 = arith.addf %321, %338 : vector<16x128xf32>
    %340 = vector.extract_strided_slice %29 {offsets = [0, 34], sizes = [16, 128], strides = [1, 1]} : vector<16x256xf32> to vector<16x128xf32>
    %341 = vector.extract_strided_slice %0 {offsets = [0, 34], sizes = [16, 1], strides = [1, 1]} : vector<16x128xf32> to vector<16x1xf32>
    %342 = vector.broadcast %341 : vector<16x1xf32> to vector<16x128xf32>
    %343 = arith.mulf %342, %340 : vector<16x128xf32>
    %344 = arith.addf %326, %343 : vector<16x128xf32>
    %345 = vector.extract_strided_slice %0 {offsets = [0, 98], sizes = [16, 1], strides = [1, 1]} : vector<16x128xf32> to vector<16x1xf32>
    %346 = vector.broadcast %345 : vector<16x1xf32> to vector<16x128xf32>
    %347 = arith.mulf %346, %340 : vector<16x128xf32>
    %348 = arith.addf %330, %347 : vector<16x128xf32>
    %349 = vector.extract_strided_slice %29 {offsets = [0, 35], sizes = [16, 128], strides = [1, 1]} : vector<16x256xf32> to vector<16x128xf32>
    %350 = vector.extract_strided_slice %0 {offsets = [0, 35], sizes = [16, 1], strides = [1, 1]} : vector<16x128xf32> to vector<16x1xf32>
    %351 = vector.broadcast %350 : vector<16x1xf32> to vector<16x128xf32>
    %352 = arith.mulf %351, %349 : vector<16x128xf32>
    %353 = arith.addf %335, %352 : vector<16x128xf32>
    %354 = vector.extract_strided_slice %0 {offsets = [0, 99], sizes = [16, 1], strides = [1, 1]} : vector<16x128xf32> to vector<16x1xf32>
    %355 = vector.broadcast %354 : vector<16x1xf32> to vector<16x128xf32>
    %356 = arith.mulf %355, %349 : vector<16x128xf32>
    %357 = arith.addf %339, %356 : vector<16x128xf32>
    %358 = vector.extract_strided_slice %29 {offsets = [0, 36], sizes = [16, 128], strides = [1, 1]} : vector<16x256xf32> to vector<16x128xf32>
    %359 = vector.extract_strided_slice %0 {offsets = [0, 36], sizes = [16, 1], strides = [1, 1]} : vector<16x128xf32> to vector<16x1xf32>
    %360 = vector.broadcast %359 : vector<16x1xf32> to vector<16x128xf32>
    %361 = arith.mulf %360, %358 : vector<16x128xf32>
    %362 = arith.addf %344, %361 : vector<16x128xf32>
    %363 = vector.extract_strided_slice %0 {offsets = [0, 100], sizes = [16, 1], strides = [1, 1]} : vector<16x128xf32> to vector<16x1xf32>
    %364 = vector.broadcast %363 : vector<16x1xf32> to vector<16x128xf32>
    %365 = arith.mulf %364, %358 : vector<16x128xf32>
    %366 = arith.addf %348, %365 : vector<16x128xf32>
    %367 = vector.extract_strided_slice %29 {offsets = [0, 37], sizes = [16, 128], strides = [1, 1]} : vector<16x256xf32> to vector<16x128xf32>
    %368 = vector.extract_strided_slice %0 {offsets = [0, 37], sizes = [16, 1], strides = [1, 1]} : vector<16x128xf32> to vector<16x1xf32>
    %369 = vector.broadcast %368 : vector<16x1xf32> to vector<16x128xf32>
    %370 = arith.mulf %369, %367 : vector<16x128xf32>
    %371 = arith.addf %353, %370 : vector<16x128xf32>
    %372 = vector.extract_strided_slice %0 {offsets = [0, 101], sizes = [16, 1], strides = [1, 1]} : vector<16x128xf32> to vector<16x1xf32>
    %373 = vector.broadcast %372 : vector<16x1xf32> to vector<16x128xf32>
    %374 = arith.mulf %373, %367 : vector<16x128xf32>
    %375 = arith.addf %357, %374 : vector<16x128xf32>
    %376 = vector.extract_strided_slice %29 {offsets = [0, 38], sizes = [16, 128], strides = [1, 1]} : vector<16x256xf32> to vector<16x128xf32>
    %377 = vector.extract_strided_slice %0 {offsets = [0, 38], sizes = [16, 1], strides = [1, 1]} : vector<16x128xf32> to vector<16x1xf32>
    %378 = vector.broadcast %377 : vector<16x1xf32> to vector<16x128xf32>
    %379 = arith.mulf %378, %376 : vector<16x128xf32>
    %380 = arith.addf %362, %379 : vector<16x128xf32>
    %381 = vector.extract_strided_slice %0 {offsets = [0, 102], sizes = [16, 1], strides = [1, 1]} : vector<16x128xf32> to vector<16x1xf32>
    %382 = vector.broadcast %381 : vector<16x1xf32> to vector<16x128xf32>
    %383 = arith.mulf %382, %376 : vector<16x128xf32>
    %384 = arith.addf %366, %383 : vector<16x128xf32>
    %385 = vector.extract_strided_slice %29 {offsets = [0, 39], sizes = [16, 128], strides = [1, 1]} : vector<16x256xf32> to vector<16x128xf32>
    %386 = vector.extract_strided_slice %0 {offsets = [0, 39], sizes = [16, 1], strides = [1, 1]} : vector<16x128xf32> to vector<16x1xf32>
    %387 = vector.broadcast %386 : vector<16x1xf32> to vector<16x128xf32>
    %388 = arith.mulf %387, %385 : vector<16x128xf32>
    %389 = arith.addf %371, %388 : vector<16x128xf32>
    %390 = vector.extract_strided_slice %0 {offsets = [0, 103], sizes = [16, 1], strides = [1, 1]} : vector<16x128xf32> to vector<16x1xf32>
    %391 = vector.broadcast %390 : vector<16x1xf32> to vector<16x128xf32>
    %392 = arith.mulf %391, %385 : vector<16x128xf32>
    %393 = arith.addf %375, %392 : vector<16x128xf32>
    %394 = vector.extract_strided_slice %29 {offsets = [0, 40], sizes = [16, 128], strides = [1, 1]} : vector<16x256xf32> to vector<16x128xf32>
    %395 = vector.extract_strided_slice %0 {offsets = [0, 40], sizes = [16, 1], strides = [1, 1]} : vector<16x128xf32> to vector<16x1xf32>
    %396 = vector.broadcast %395 : vector<16x1xf32> to vector<16x128xf32>
    %397 = arith.mulf %396, %394 : vector<16x128xf32>
    %398 = arith.addf %380, %397 : vector<16x128xf32>
    %399 = vector.extract_strided_slice %0 {offsets = [0, 104], sizes = [16, 1], strides = [1, 1]} : vector<16x128xf32> to vector<16x1xf32>
    %400 = vector.broadcast %399 : vector<16x1xf32> to vector<16x128xf32>
    %401 = arith.mulf %400, %394 : vector<16x128xf32>
    %402 = arith.addf %384, %401 : vector<16x128xf32>
    %403 = vector.extract_strided_slice %29 {offsets = [0, 41], sizes = [16, 128], strides = [1, 1]} : vector<16x256xf32> to vector<16x128xf32>
    %404 = vector.extract_strided_slice %0 {offsets = [0, 41], sizes = [16, 1], strides = [1, 1]} : vector<16x128xf32> to vector<16x1xf32>
    %405 = vector.broadcast %404 : vector<16x1xf32> to vector<16x128xf32>
    %406 = arith.mulf %405, %403 : vector<16x128xf32>
    %407 = arith.addf %389, %406 : vector<16x128xf32>
    %408 = vector.extract_strided_slice %0 {offsets = [0, 105], sizes = [16, 1], strides = [1, 1]} : vector<16x128xf32> to vector<16x1xf32>
    %409 = vector.broadcast %408 : vector<16x1xf32> to vector<16x128xf32>
    %410 = arith.mulf %409, %403 : vector<16x128xf32>
    %411 = arith.addf %393, %410 : vector<16x128xf32>
    %412 = vector.extract_strided_slice %29 {offsets = [0, 42], sizes = [16, 128], strides = [1, 1]} : vector<16x256xf32> to vector<16x128xf32>
    %413 = vector.extract_strided_slice %0 {offsets = [0, 42], sizes = [16, 1], strides = [1, 1]} : vector<16x128xf32> to vector<16x1xf32>
    %414 = vector.broadcast %413 : vector<16x1xf32> to vector<16x128xf32>
    %415 = arith.mulf %414, %412 : vector<16x128xf32>
    %416 = arith.addf %398, %415 : vector<16x128xf32>
    %417 = vector.extract_strided_slice %0 {offsets = [0, 106], sizes = [16, 1], strides = [1, 1]} : vector<16x128xf32> to vector<16x1xf32>
    %418 = vector.broadcast %417 : vector<16x1xf32> to vector<16x128xf32>
    %419 = arith.mulf %418, %412 : vector<16x128xf32>
    %420 = arith.addf %402, %419 : vector<16x128xf32>
    %421 = vector.extract_strided_slice %29 {offsets = [0, 43], sizes = [16, 128], strides = [1, 1]} : vector<16x256xf32> to vector<16x128xf32>
    %422 = vector.extract_strided_slice %0 {offsets = [0, 43], sizes = [16, 1], strides = [1, 1]} : vector<16x128xf32> to vector<16x1xf32>
    %423 = vector.broadcast %422 : vector<16x1xf32> to vector<16x128xf32>
    %424 = arith.mulf %423, %421 : vector<16x128xf32>
    %425 = arith.addf %407, %424 : vector<16x128xf32>
    %426 = vector.extract_strided_slice %0 {offsets = [0, 107], sizes = [16, 1], strides = [1, 1]} : vector<16x128xf32> to vector<16x1xf32>
    %427 = vector.broadcast %426 : vector<16x1xf32> to vector<16x128xf32>
    %428 = arith.mulf %427, %421 : vector<16x128xf32>
    %429 = arith.addf %411, %428 : vector<16x128xf32>
    %430 = vector.extract_strided_slice %29 {offsets = [0, 44], sizes = [16, 128], strides = [1, 1]} : vector<16x256xf32> to vector<16x128xf32>
    %431 = vector.extract_strided_slice %0 {offsets = [0, 44], sizes = [16, 1], strides = [1, 1]} : vector<16x128xf32> to vector<16x1xf32>
    %432 = vector.broadcast %431 : vector<16x1xf32> to vector<16x128xf32>
    %433 = arith.mulf %432, %430 : vector<16x128xf32>
    %434 = arith.addf %416, %433 : vector<16x128xf32>
    %435 = vector.extract_strided_slice %0 {offsets = [0, 108], sizes = [16, 1], strides = [1, 1]} : vector<16x128xf32> to vector<16x1xf32>
    %436 = vector.broadcast %435 : vector<16x1xf32> to vector<16x128xf32>
    %437 = arith.mulf %436, %430 : vector<16x128xf32>
    %438 = arith.addf %420, %437 : vector<16x128xf32>
    %439 = vector.extract_strided_slice %29 {offsets = [0, 45], sizes = [16, 128], strides = [1, 1]} : vector<16x256xf32> to vector<16x128xf32>
    %440 = vector.extract_strided_slice %0 {offsets = [0, 45], sizes = [16, 1], strides = [1, 1]} : vector<16x128xf32> to vector<16x1xf32>
    %441 = vector.broadcast %440 : vector<16x1xf32> to vector<16x128xf32>
    %442 = arith.mulf %441, %439 : vector<16x128xf32>
    %443 = arith.addf %425, %442 : vector<16x128xf32>
    %444 = vector.extract_strided_slice %0 {offsets = [0, 109], sizes = [16, 1], strides = [1, 1]} : vector<16x128xf32> to vector<16x1xf32>
    %445 = vector.broadcast %444 : vector<16x1xf32> to vector<16x128xf32>
    %446 = arith.mulf %445, %439 : vector<16x128xf32>
    %447 = arith.addf %429, %446 : vector<16x128xf32>
    %448 = vector.extract_strided_slice %29 {offsets = [0, 46], sizes = [16, 128], strides = [1, 1]} : vector<16x256xf32> to vector<16x128xf32>
    %449 = vector.extract_strided_slice %0 {offsets = [0, 46], sizes = [16, 1], strides = [1, 1]} : vector<16x128xf32> to vector<16x1xf32>
    %450 = vector.broadcast %449 : vector<16x1xf32> to vector<16x128xf32>
    %451 = arith.mulf %450, %448 : vector<16x128xf32>
    %452 = arith.addf %434, %451 : vector<16x128xf32>
    %453 = vector.extract_strided_slice %0 {offsets = [0, 110], sizes = [16, 1], strides = [1, 1]} : vector<16x128xf32> to vector<16x1xf32>
    %454 = vector.broadcast %453 : vector<16x1xf32> to vector<16x128xf32>
    %455 = arith.mulf %454, %448 : vector<16x128xf32>
    %456 = arith.addf %438, %455 : vector<16x128xf32>
    %457 = vector.extract_strided_slice %29 {offsets = [0, 47], sizes = [16, 128], strides = [1, 1]} : vector<16x256xf32> to vector<16x128xf32>
    %458 = vector.extract_strided_slice %0 {offsets = [0, 47], sizes = [16, 1], strides = [1, 1]} : vector<16x128xf32> to vector<16x1xf32>
    %459 = vector.broadcast %458 : vector<16x1xf32> to vector<16x128xf32>
    %460 = arith.mulf %459, %457 : vector<16x128xf32>
    %461 = arith.addf %443, %460 : vector<16x128xf32>
    %462 = vector.extract_strided_slice %0 {offsets = [0, 111], sizes = [16, 1], strides = [1, 1]} : vector<16x128xf32> to vector<16x1xf32>
    %463 = vector.broadcast %462 : vector<16x1xf32> to vector<16x128xf32>
    %464 = arith.mulf %463, %457 : vector<16x128xf32>
    %465 = arith.addf %447, %464 : vector<16x128xf32>
    %466 = vector.extract_strided_slice %29 {offsets = [0, 48], sizes = [16, 128], strides = [1, 1]} : vector<16x256xf32> to vector<16x128xf32>
    %467 = vector.extract_strided_slice %0 {offsets = [0, 48], sizes = [16, 1], strides = [1, 1]} : vector<16x128xf32> to vector<16x1xf32>
    %468 = vector.broadcast %467 : vector<16x1xf32> to vector<16x128xf32>
    %469 = arith.mulf %468, %466 : vector<16x128xf32>
    %470 = arith.addf %452, %469 : vector<16x128xf32>
    %471 = vector.extract_strided_slice %0 {offsets = [0, 112], sizes = [16, 1], strides = [1, 1]} : vector<16x128xf32> to vector<16x1xf32>
    %472 = vector.broadcast %471 : vector<16x1xf32> to vector<16x128xf32>
    %473 = arith.mulf %472, %466 : vector<16x128xf32>
    %474 = arith.addf %456, %473 : vector<16x128xf32>
    %475 = vector.extract_strided_slice %29 {offsets = [0, 49], sizes = [16, 128], strides = [1, 1]} : vector<16x256xf32> to vector<16x128xf32>
    %476 = vector.extract_strided_slice %0 {offsets = [0, 49], sizes = [16, 1], strides = [1, 1]} : vector<16x128xf32> to vector<16x1xf32>
    %477 = vector.broadcast %476 : vector<16x1xf32> to vector<16x128xf32>
    %478 = arith.mulf %477, %475 : vector<16x128xf32>
    %479 = arith.addf %461, %478 : vector<16x128xf32>
    %480 = vector.extract_strided_slice %0 {offsets = [0, 113], sizes = [16, 1], strides = [1, 1]} : vector<16x128xf32> to vector<16x1xf32>
    %481 = vector.broadcast %480 : vector<16x1xf32> to vector<16x128xf32>
    %482 = arith.mulf %481, %475 : vector<16x128xf32>
    %483 = arith.addf %465, %482 : vector<16x128xf32>
    %484 = vector.extract_strided_slice %29 {offsets = [0, 50], sizes = [16, 128], strides = [1, 1]} : vector<16x256xf32> to vector<16x128xf32>
    %485 = vector.extract_strided_slice %0 {offsets = [0, 50], sizes = [16, 1], strides = [1, 1]} : vector<16x128xf32> to vector<16x1xf32>
    %486 = vector.broadcast %485 : vector<16x1xf32> to vector<16x128xf32>
    %487 = arith.mulf %486, %484 : vector<16x128xf32>
    %488 = arith.addf %470, %487 : vector<16x128xf32>
    %489 = vector.extract_strided_slice %0 {offsets = [0, 114], sizes = [16, 1], strides = [1, 1]} : vector<16x128xf32> to vector<16x1xf32>
    %490 = vector.broadcast %489 : vector<16x1xf32> to vector<16x128xf32>
    %491 = arith.mulf %490, %484 : vector<16x128xf32>
    %492 = arith.addf %474, %491 : vector<16x128xf32>
    %493 = vector.extract_strided_slice %29 {offsets = [0, 51], sizes = [16, 128], strides = [1, 1]} : vector<16x256xf32> to vector<16x128xf32>
    %494 = vector.extract_strided_slice %0 {offsets = [0, 51], sizes = [16, 1], strides = [1, 1]} : vector<16x128xf32> to vector<16x1xf32>
    %495 = vector.broadcast %494 : vector<16x1xf32> to vector<16x128xf32>
    %496 = arith.mulf %495, %493 : vector<16x128xf32>
    %497 = arith.addf %479, %496 : vector<16x128xf32>
    %498 = vector.extract_strided_slice %0 {offsets = [0, 115], sizes = [16, 1], strides = [1, 1]} : vector<16x128xf32> to vector<16x1xf32>
    %499 = vector.broadcast %498 : vector<16x1xf32> to vector<16x128xf32>
    %500 = arith.mulf %499, %493 : vector<16x128xf32>
    %501 = arith.addf %483, %500 : vector<16x128xf32>
    %502 = vector.extract_strided_slice %29 {offsets = [0, 52], sizes = [16, 128], strides = [1, 1]} : vector<16x256xf32> to vector<16x128xf32>
    %503 = vector.extract_strided_slice %0 {offsets = [0, 52], sizes = [16, 1], strides = [1, 1]} : vector<16x128xf32> to vector<16x1xf32>
    %504 = vector.broadcast %503 : vector<16x1xf32> to vector<16x128xf32>
    %505 = arith.mulf %504, %502 : vector<16x128xf32>
    %506 = arith.addf %488, %505 : vector<16x128xf32>
    %507 = vector.extract_strided_slice %0 {offsets = [0, 116], sizes = [16, 1], strides = [1, 1]} : vector<16x128xf32> to vector<16x1xf32>
    %508 = vector.broadcast %507 : vector<16x1xf32> to vector<16x128xf32>
    %509 = arith.mulf %508, %502 : vector<16x128xf32>
    %510 = arith.addf %492, %509 : vector<16x128xf32>
    %511 = vector.extract_strided_slice %29 {offsets = [0, 53], sizes = [16, 128], strides = [1, 1]} : vector<16x256xf32> to vector<16x128xf32>
    %512 = vector.extract_strided_slice %0 {offsets = [0, 53], sizes = [16, 1], strides = [1, 1]} : vector<16x128xf32> to vector<16x1xf32>
    %513 = vector.broadcast %512 : vector<16x1xf32> to vector<16x128xf32>
    %514 = arith.mulf %513, %511 : vector<16x128xf32>
    %515 = arith.addf %497, %514 : vector<16x128xf32>
    %516 = vector.extract_strided_slice %0 {offsets = [0, 117], sizes = [16, 1], strides = [1, 1]} : vector<16x128xf32> to vector<16x1xf32>
    %517 = vector.broadcast %516 : vector<16x1xf32> to vector<16x128xf32>
    %518 = arith.mulf %517, %511 : vector<16x128xf32>
    %519 = arith.addf %501, %518 : vector<16x128xf32>
    %520 = vector.extract_strided_slice %29 {offsets = [0, 54], sizes = [16, 128], strides = [1, 1]} : vector<16x256xf32> to vector<16x128xf32>
    %521 = vector.extract_strided_slice %0 {offsets = [0, 54], sizes = [16, 1], strides = [1, 1]} : vector<16x128xf32> to vector<16x1xf32>
    %522 = vector.broadcast %521 : vector<16x1xf32> to vector<16x128xf32>
    %523 = arith.mulf %522, %520 : vector<16x128xf32>
    %524 = arith.addf %506, %523 : vector<16x128xf32>
    %525 = vector.extract_strided_slice %0 {offsets = [0, 118], sizes = [16, 1], strides = [1, 1]} : vector<16x128xf32> to vector<16x1xf32>
    %526 = vector.broadcast %525 : vector<16x1xf32> to vector<16x128xf32>
    %527 = arith.mulf %526, %520 : vector<16x128xf32>
    %528 = arith.addf %510, %527 : vector<16x128xf32>
    %529 = vector.extract_strided_slice %29 {offsets = [0, 55], sizes = [16, 128], strides = [1, 1]} : vector<16x256xf32> to vector<16x128xf32>
    %530 = vector.extract_strided_slice %0 {offsets = [0, 55], sizes = [16, 1], strides = [1, 1]} : vector<16x128xf32> to vector<16x1xf32>
    %531 = vector.broadcast %530 : vector<16x1xf32> to vector<16x128xf32>
    %532 = arith.mulf %531, %529 : vector<16x128xf32>
    %533 = arith.addf %515, %532 : vector<16x128xf32>
    %534 = vector.extract_strided_slice %0 {offsets = [0, 119], sizes = [16, 1], strides = [1, 1]} : vector<16x128xf32> to vector<16x1xf32>
    %535 = vector.broadcast %534 : vector<16x1xf32> to vector<16x128xf32>
    %536 = arith.mulf %535, %529 : vector<16x128xf32>
    %537 = arith.addf %519, %536 : vector<16x128xf32>
    %538 = vector.extract_strided_slice %29 {offsets = [0, 56], sizes = [16, 128], strides = [1, 1]} : vector<16x256xf32> to vector<16x128xf32>
    %539 = vector.extract_strided_slice %0 {offsets = [0, 56], sizes = [16, 1], strides = [1, 1]} : vector<16x128xf32> to vector<16x1xf32>
    %540 = vector.broadcast %539 : vector<16x1xf32> to vector<16x128xf32>
    %541 = arith.mulf %540, %538 : vector<16x128xf32>
    %542 = arith.addf %524, %541 : vector<16x128xf32>
    %543 = vector.extract_strided_slice %0 {offsets = [0, 120], sizes = [16, 1], strides = [1, 1]} : vector<16x128xf32> to vector<16x1xf32>
    %544 = vector.broadcast %543 : vector<16x1xf32> to vector<16x128xf32>
    %545 = arith.mulf %544, %538 : vector<16x128xf32>
    %546 = arith.addf %528, %545 : vector<16x128xf32>
    %547 = vector.extract_strided_slice %29 {offsets = [0, 57], sizes = [16, 128], strides = [1, 1]} : vector<16x256xf32> to vector<16x128xf32>
    %548 = vector.extract_strided_slice %0 {offsets = [0, 57], sizes = [16, 1], strides = [1, 1]} : vector<16x128xf32> to vector<16x1xf32>
    %549 = vector.broadcast %548 : vector<16x1xf32> to vector<16x128xf32>
    %550 = arith.mulf %549, %547 : vector<16x128xf32>
    %551 = arith.addf %533, %550 : vector<16x128xf32>
    %552 = vector.extract_strided_slice %0 {offsets = [0, 121], sizes = [16, 1], strides = [1, 1]} : vector<16x128xf32> to vector<16x1xf32>
    %553 = vector.broadcast %552 : vector<16x1xf32> to vector<16x128xf32>
    %554 = arith.mulf %553, %547 : vector<16x128xf32>
    %555 = arith.addf %537, %554 : vector<16x128xf32>
    %556 = vector.extract_strided_slice %29 {offsets = [0, 58], sizes = [16, 128], strides = [1, 1]} : vector<16x256xf32> to vector<16x128xf32>
    %557 = vector.extract_strided_slice %0 {offsets = [0, 58], sizes = [16, 1], strides = [1, 1]} : vector<16x128xf32> to vector<16x1xf32>
    %558 = vector.broadcast %557 : vector<16x1xf32> to vector<16x128xf32>
    %559 = arith.mulf %558, %556 : vector<16x128xf32>
    %560 = arith.addf %542, %559 : vector<16x128xf32>
    %561 = vector.extract_strided_slice %0 {offsets = [0, 122], sizes = [16, 1], strides = [1, 1]} : vector<16x128xf32> to vector<16x1xf32>
    %562 = vector.broadcast %561 : vector<16x1xf32> to vector<16x128xf32>
    %563 = arith.mulf %562, %556 : vector<16x128xf32>
    %564 = arith.addf %546, %563 : vector<16x128xf32>
    %565 = vector.extract_strided_slice %29 {offsets = [0, 59], sizes = [16, 128], strides = [1, 1]} : vector<16x256xf32> to vector<16x128xf32>
    %566 = vector.extract_strided_slice %0 {offsets = [0, 59], sizes = [16, 1], strides = [1, 1]} : vector<16x128xf32> to vector<16x1xf32>
    %567 = vector.broadcast %566 : vector<16x1xf32> to vector<16x128xf32>
    %568 = arith.mulf %567, %565 : vector<16x128xf32>
    %569 = arith.addf %551, %568 : vector<16x128xf32>
    %570 = vector.extract_strided_slice %0 {offsets = [0, 123], sizes = [16, 1], strides = [1, 1]} : vector<16x128xf32> to vector<16x1xf32>
    %571 = vector.broadcast %570 : vector<16x1xf32> to vector<16x128xf32>
    %572 = arith.mulf %571, %565 : vector<16x128xf32>
    %573 = arith.addf %555, %572 : vector<16x128xf32>
    %574 = vector.extract_strided_slice %29 {offsets = [0, 60], sizes = [16, 128], strides = [1, 1]} : vector<16x256xf32> to vector<16x128xf32>
    %575 = vector.extract_strided_slice %0 {offsets = [0, 60], sizes = [16, 1], strides = [1, 1]} : vector<16x128xf32> to vector<16x1xf32>
    %576 = vector.broadcast %575 : vector<16x1xf32> to vector<16x128xf32>
    %577 = arith.mulf %576, %574 : vector<16x128xf32>
    %578 = arith.addf %560, %577 : vector<16x128xf32>
    %579 = vector.extract_strided_slice %0 {offsets = [0, 124], sizes = [16, 1], strides = [1, 1]} : vector<16x128xf32> to vector<16x1xf32>
    %580 = vector.broadcast %579 : vector<16x1xf32> to vector<16x128xf32>
    %581 = arith.mulf %580, %574 : vector<16x128xf32>
    %582 = arith.addf %564, %581 : vector<16x128xf32>
    %583 = vector.extract_strided_slice %29 {offsets = [0, 61], sizes = [16, 128], strides = [1, 1]} : vector<16x256xf32> to vector<16x128xf32>
    %584 = vector.extract_strided_slice %0 {offsets = [0, 61], sizes = [16, 1], strides = [1, 1]} : vector<16x128xf32> to vector<16x1xf32>
    %585 = vector.broadcast %584 : vector<16x1xf32> to vector<16x128xf32>
    %586 = arith.mulf %585, %583 : vector<16x128xf32>
    %587 = arith.addf %569, %586 : vector<16x128xf32>
    %588 = vector.extract_strided_slice %0 {offsets = [0, 125], sizes = [16, 1], strides = [1, 1]} : vector<16x128xf32> to vector<16x1xf32>
    %589 = vector.broadcast %588 : vector<16x1xf32> to vector<16x128xf32>
    %590 = arith.mulf %589, %583 : vector<16x128xf32>
    %591 = arith.addf %573, %590 : vector<16x128xf32>
    %592 = vector.extract_strided_slice %29 {offsets = [0, 62], sizes = [16, 128], strides = [1, 1]} : vector<16x256xf32> to vector<16x128xf32>
    %593 = vector.extract_strided_slice %0 {offsets = [0, 62], sizes = [16, 1], strides = [1, 1]} : vector<16x128xf32> to vector<16x1xf32>
    %594 = vector.broadcast %593 : vector<16x1xf32> to vector<16x128xf32>
    %595 = arith.mulf %594, %592 : vector<16x128xf32>
    %596 = arith.addf %578, %595 : vector<16x128xf32>
    %597 = vector.extract_strided_slice %0 {offsets = [0, 126], sizes = [16, 1], strides = [1, 1]} : vector<16x128xf32> to vector<16x1xf32>
    %598 = vector.broadcast %597 : vector<16x1xf32> to vector<16x128xf32>
    %599 = arith.mulf %598, %592 : vector<16x128xf32>
    %600 = arith.addf %582, %599 : vector<16x128xf32>
    %601 = vector.extract_strided_slice %29 {offsets = [0, 63], sizes = [16, 128], strides = [1, 1]} : vector<16x256xf32> to vector<16x128xf32>
    %602 = vector.extract_strided_slice %0 {offsets = [0, 63], sizes = [16, 1], strides = [1, 1]} : vector<16x128xf32> to vector<16x1xf32>
    %603 = vector.broadcast %602 : vector<16x1xf32> to vector<16x128xf32>
    %604 = arith.mulf %603, %601 : vector<16x128xf32>
    %605 = arith.addf %587, %604 : vector<16x128xf32>
    %606 = vector.extract_strided_slice %0 {offsets = [0, 127], sizes = [16, 1], strides = [1, 1]} : vector<16x128xf32> to vector<16x1xf32>
    %607 = vector.broadcast %606 : vector<16x1xf32> to vector<16x128xf32>
    %608 = arith.mulf %607, %601 : vector<16x128xf32>
    %609 = arith.addf %591, %608 : vector<16x128xf32>
    %610 = arith.addf %596, %605 : vector<16x128xf32>
    %611 = vector.broadcast %1 : vector<16x1xf32> to vector<16x128xf32>
    %612 = arith.addf %610, %611 : vector<16x128xf32>
    %cst_28 = arith.constant 0.000000e+00 : f32
    %613 = vector.broadcast %cst_28 : f32 to vector<16x128xf32>
    %614 = arith.maximumf %612, %613 : vector<16x128xf32>
    %615 = arith.addf %600, %609 : vector<16x128xf32>
    %616 = vector.broadcast %2 : vector<16x1xf32> to vector<16x128xf32>
    %617 = arith.addf %615, %616 : vector<16x128xf32>
    %cst_29 = arith.constant 0.000000e+00 : f32
    %618 = vector.broadcast %cst_29 : f32 to vector<16x128xf32>
    %619 = arith.maximumf %617, %618 : vector<16x128xf32>
    %620 = vector.broadcast %8 : vector<1x128xf32> to vector<16x128xf32>
    %621 = arith.mulf %614, %620 : vector<16x128xf32>
    %622 = vector.broadcast %8 : vector<1x128xf32> to vector<16x128xf32>
    %623 = arith.mulf %619, %622 : vector<16x128xf32>
    %cst_30 = arith.constant dense<0.000000e+00> : vector<16xf32>
    %624 = vector.multi_reduction <add>, %621, %cst_30 [1] : vector<16x128xf32> to vector<16xf32>
    %625 = vector.shape_cast %624 : vector<16xf32> to vector<16x1xf32>
    %626 = arith.addf %27, %625 : vector<16x1xf32>
    %cst_31 = arith.constant dense<0.000000e+00> : vector<16xf32>
    %627 = vector.multi_reduction <add>, %623, %cst_31 [1] : vector<16x128xf32> to vector<16xf32>
    %628 = vector.shape_cast %627 : vector<16xf32> to vector<16x1xf32>
    %629 = arith.addf %28, %628 : vector<16x1xf32>
    %630 = vector.broadcast %21 : i32 to vector<1x1xi32>
    %631 = arith.cmpi eq, %3, %630 : vector<1x1xi32>
    %632 = arith.extui %631 : vector<1x1xi1> to vector<1x1xi32>
    %633 = arith.sitofp %632 : vector<1x1xi32> to vector<1x1xf32>
    %634 = vector.broadcast %633 : vector<1x1xf32> to vector<16x1xf32>
    %635 = arith.mulf %626, %634 : vector<16x1xf32>
    %636 = arith.addf %18, %635 : vector<16x1xf32>
    %637 = vector.broadcast %633 : vector<1x1xf32> to vector<16x1xf32>
    %638 = arith.mulf %629, %637 : vector<16x1xf32>
    %639 = arith.addf %19, %638 : vector<16x1xf32>
    %c1_i32_32 = arith.constant 1 : i32
    %640 = tpu.concatenate %636, %639 in 0 : vector<16x1xf32>, vector<16x1xf32> -> vector<32x1xf32>
    %c0_33 = arith.constant 0 : index
    %c0_34 = arith.constant 0 : index
    %641 = vector.load %arg6[%c0_33, %c0_34] : memref<128x32xf32, #tpu.memory_space<vmem>>, vector<128x32xf32>
    %cst_35 = arith.constant dense<0.000000e+00> : vector<128x1xf32>
    %642 = tpu.matmul %641, %640, %cst_35 {dimension_numbers = #tpu.dot_dimension_numbers<[1], [0], [0], [1], [0, 0, 1, 1], [], []>} : vector<128x32xf32>, vector<32x1xf32>, vector<128x1xf32> -> vector<128x1xf32>
    %c0_36 = arith.constant 0 : index
    %c0_37 = arith.constant 0 : index
    %643 = vector.load %arg7[%c0_36, %c0_37] : memref<128x1xf32, #tpu.memory_space<vmem>>, vector<128x1xf32>
    %644 = arith.addf %642, %643 : vector<128x1xf32>
    %c0_38 = arith.constant 0 : index
    %c0_39 = arith.constant 0 : index
    %c0_40 = arith.constant 0 : index
    %645 = vector.load %arg8[%c0_38, %c0_39, %c0_40] : memref<1x128x1xf32, #tpu.memory_space<vmem>>, vector<1x128x1xf32>
    %646 = vector.shape_cast %645 : vector<1x128x1xf32> to vector<128x1xf32>
    %647 = vector.shape_cast %644 : vector<128x1xf32> to vector<1x128x1xf32>
    tpu.vector_store %arg8[%c0_38, %c0_39, %c0_40], %647 {strides = array<i32>} : memref<1x128x1xf32, #tpu.memory_space<vmem>>, vector<1x128x1xf32>,
    return
  }
  func.func @transform_0(%arg0: i32) -> (i32, i32) {
    %c0_i32 = arith.constant 0 : i32
    %c0_i32_0 = arith.constant 0 : i32
    return %c0_i32, %arg0 : i32, i32
  }
  func.func @transform_1(%arg0: i32) -> (i32, i32) {
    %c0_i32 = arith.constant 0 : i32
    %c0_i32_0 = arith.constant 0 : i32
    %c0_i32_1 = arith.constant 0 : i32
    return %c0_i32, %c0_i32_0 : i32, i32
  }
  func.func @transform_2(%arg0: i32) -> (i32, i32) {
    %c0_i32 = arith.constant 0 : i32
    %c0_i32_0 = arith.constant 0 : i32
    %c0_i32_1 = arith.constant 0 : i32
    return %c0_i32, %c0_i32_0 : i32, i32
  }
  func.func @transform_3(%arg0: i32) -> (i32, i32) {
    %c0_i32 = arith.constant 0 : i32
    %c0_i32_0 = arith.constant 0 : i32
    %c0_i32_1 = arith.constant 0 : i32
    return %c0_i32, %c0_i32_0 : i32, i32
  }
  func.func @transform_4(%arg0: i32) -> (i32, i32) {
    %c0_i32 = arith.constant 0 : i32
    %c0_i32_0 = arith.constant 0 : i32
    %c0_i32_1 = arith.constant 0 : i32
    return %c0_i32, %c0_i32_0 : i32, i32
  }
  func.func @transform_5(%arg0: i32) -> (i32, i32) {
    %c0_i32 = arith.constant 0 : i32
    %c0_i32_0 = arith.constant 0 : i32
    %c0_i32_1 = arith.constant 0 : i32
    return %c0_i32, %c0_i32_0 : i32, i32
  }
  func.func @transform_6(%arg0: i32) -> (i32, i32) {
    %c0_i32 = arith.constant 0 : i32
    %c0_i32_0 = arith.constant 0 : i32
    %c0_i32_1 = arith.constant 0 : i32
    return %c0_i32, %c0_i32_0 : i32, i32
  }
  func.func @transform_7(%arg0: i32) -> (i32, i32, i32) {
    %c0_i32 = arith.constant 0 : i32
    %c0_i32_0 = arith.constant 0 : i32
    %c0_i32_1 = arith.constant 0 : i32
    return %arg0, %c0_i32, %c0_i32_0 : i32, i32, i32
  }
}

</mosaic_0001>

<llo_original>
// kernel: tpu_custom_call.1
$region0: #{tpu_custom_call.1}
  #allocation0 [shape = 'u32[]', space=smem, size = 0x4, offset = 0x4, fixed_abs, tag = 'smem constant byte address 0x4 - core index']
  #allocation1 [shape = 'u32[144,128]{1,0:T(1,128)}', space=vmem, size = 0x12000, scoped, tag = 'internal scratch']
  #allocation2 [shape = 'f32[16,128]{1,0:T(8,128)}', space=vmem, size = 0x2000, scoped, tag = 'scratch operand']
  #allocation3 [shape = 'f32[16,256]{1,0:T(8,128)}', space=vmem, size = 0x4000, scoped, tag = 'scratch operand']
  %s0 = inlined_call_operand.vmem [shape: bf16[30,256], index: 0, kind: input, shape index: {}]
  %s1 = inlined_call_operand.vmem [shape: bf16[16,30], index: 1, kind: input, shape index: {}]
  %s2 = inlined_call_operand.vmem [shape: f32[16,1], index: 2, kind: input, shape index: {}]
  %s3 = inlined_call_operand.vmem [shape: f32[16,128], index: 3, kind: input, shape index: {}]
  %s4 = inlined_call_operand.vmem [shape: f32[16,2], index: 4, kind: input, shape index: {}]
  %s5 = inlined_call_operand.vmem [shape: f32[128,32], index: 5, kind: input, shape index: {}]
  %s6 = inlined_call_operand.vmem [shape: f32[128,1], index: 6, kind: input, shape index: {}]
  %s7 = inlined_call_operand.vmem [shape: f32[2,128,1], index: 7, kind: output, shape index: {}]
  %s8 = sld [smem:[#allocation0]]
  $region102: #{tpu_custom_call.1} parent=0
    _
  %s10 = ssub.s32 1, %s8
  %s11 = scalar_select 0, %s10, %s8
  $region1: #{tpu_custom_call.1} parent=0
    #allocation4 [shape = 'u8[16384]{0}', space=vmem, size = 0x4000, scoped, tag = 'input window, operand 0']
    loop: start=0, step=1, limit=4
    $region2: #{tpu_custom_call.1} parent=1 // loop_pre_header
      _
    $region3: #{tpu_custom_call.1} parent=1 // loop_header
      %s13 = sphi 0, %s17
      %p14 = scmp.ge.s32.totalorder %s13, 4
      %s23 = sphi 0, %s25
      %s26 = sphi 0, %s23
      %s27 = sphi 0, %s26
      %s43 = sphi 0, %s27
      %s47 = sphi 0, %s47
      %s49 = sphi 0, %s47
      %s50 = sphi 0, %s49
      %s64 = sphi 0, %s50
      %s68 = sphi 0, %s68
      %s70 = sphi 0, %s68
      %s71 = sphi 0, %s70
      %s85 = sphi 0, %s71
      %s89 = sphi 0, %s89
      %s91 = sphi 0, %s89
      %s92 = sphi 0, %s91
      %s106 = sphi 0, %s92
      %s110 = sphi 0, %s110
      %s112 = sphi 0, %s110
      %s113 = sphi 0, %s112
      %s127 = sphi 0, %s113
      %s131 = sphi 0, %s131
      %s133 = sphi 0, %s131
      %s134 = sphi 0, %s133
      %s148 = sphi 0, %s134
      %s152 = sphi 0, %s152
      %s154 = sphi 0, %s152
      %s155 = sphi 0, %s154
      %s169 = sphi 0, %s155
      %s175 = sphi 0, %s177
      %s178 = sphi 0, %s175
      %s179 = sphi 0, %s178
      %s195 = sphi 0, %s179
    $region4: #{tpu_custom_call.1} parent=1 // loop_header_branch
      %16 = sbr.rel (%p14) target = $region8
    $region5: #{tpu_custom_call.1} parent=1 // loop_body
      %s18 = ssub.s32 %s13, 1
      %s19 = ssub.s32 %s13, 2
      %s20 = sadd.s32 %s13, 1
      %s21 = ssub.s32 %s13, %s20
      %p22 = scmp.eq.s32.totalorder %s21, 0
      %s24 = sadd.s32 %s23, 1
      %s25 = scalar_select %p22, %s23, %s24
      %p28 = pneg %p22
      %p29 = scmp.eq.s32.totalorder %s13, 1
      %p30 = por %p28, %p29
      %p31 = scmp.ne.s32.totalorder %s23, %s26
      %p32 = scmp.eq.s32.totalorder %s13, 0
      %p33 = por %p31, %p32
      %p34 = scmp.ne.s32.totalorder %s23, %s26
      %p35 = scmp.eq.s32.totalorder %s18, 1
      %p36 = por %p34, %p35
      %p37 = scmp.ne.s32.totalorder %s26, %s27
      %p38 = scmp.eq.s32.totalorder %s18, 0
      %p39 = por %p37, %p38
      %p40 = scmp.ne.s32.totalorder %s26, %s27
      %p41 = scmp.eq.s32.totalorder %s19, 1
      %p42 = por %p40, %p41
      %p44 = scmp.ne.s32.totalorder %s27, %s43
      %p45 = scmp.eq.s32.totalorder %s19, 0
      %p46 = por %p44, %p45
      %s48 = sadd.s32 %s47, 1
      %p51 = scmp.eq.s32.totalorder %s13, 1
      %p52 = scmp.ne.s32.totalorder %s47, %s49
      %p53 = scmp.eq.s32.totalorder %s13, 0
      %p54 = por %p52, %p53
      %p55 = scmp.ne.s32.totalorder %s47, %s49
      %p56 = scmp.eq.s32.totalorder %s18, 1
      %p57 = por %p55, %p56
      %p58 = scmp.ne.s32.totalorder %s49, %s50
      %p59 = scmp.eq.s32.totalorder %s18, 0
      %p60 = por %p58, %p59
      %p61 = scmp.ne.s32.totalorder %s49, %s50
      %p62 = scmp.eq.s32.totalorder %s19, 1
      %p63 = por %p61, %p62
      %p65 = scmp.ne.s32.totalorder %s50, %s64
      %p66 = scmp.eq.s32.totalorder %s19, 0
      %p67 = por %p65, %p66
      %s69 = sadd.s32 %s68, 1
      %p72 = scmp.eq.s32.totalorder %s13, 1
      %p73 = scmp.ne.s32.totalorder %s68, %s70
      %p74 = scmp.eq.s32.totalorder %s13, 0
      %p75 = por %p73, %p74
      %p76 = scmp.ne.s32.totalorder %s68, %s70
      %p77 = scmp.eq.s32.totalorder %s18, 1
      %p78 = por %p76, %p77
      %p79 = scmp.ne.s32.totalorder %s70, %s71
      %p80 = scmp.eq.s32.totalorder %s18, 0
      %p81 = por %p79, %p80
      %p82 = scmp.ne.s32.totalorder %s70, %s71
      %p83 = scmp.eq.s32.totalorder %s19, 1
      %p84 = por %p82, %p83
      %p86 = scmp.ne.s32.totalorder %s71, %s85
      %p87 = scmp.eq.s32.totalorder %s19, 0
      %p88 = por %p86, %p87
      %s90 = sadd.s32 %s89, 1
      %p93 = scmp.eq.s32.totalorder %s13, 1
      %p94 = scmp.ne.s32.totalorder %s89, %s91
      %p95 = scmp.eq.s32.totalorder %s13, 0
      %p96 = por %p94, %p95
      %p97 = scmp.ne.s32.totalorder %s89, %s91
      %p98 = scmp.eq.s32.totalorder %s18, 1
      %p99 = por %p97, %p98
      %p100 = scmp.ne.s32.totalorder %s91, %s92
      %p101 = scmp.eq.s32.totalorder %s18, 0
      %p102 = por %p100, %p101
      %p103 = scmp.ne.s32.totalorder %s91, %s92
      %p104 = scmp.eq.s32.totalorder %s19, 1
      %p105 = por %p103, %p104
      %p107 = scmp.ne.s32.totalorder %s92, %s106
      %p108 = scmp.eq.s32.totalorder %s19, 0
      %p109 = por %p107, %p108
      %s111 = sadd.s32 %s110, 1
      %p114 = scmp.eq.s32.totalorder %s13, 1
      %p115 = scmp.ne.s32.totalorder %s110, %s112
      %p116 = scmp.eq.s32.totalorder %s13, 0
      %p117 = por %p115, %p116
      %p118 = scmp.ne.s32.totalorder %s110, %s112
      %p119 = scmp.eq.s32.totalorder %s18, 1
      %p120 = por %p118, %p119
      %p121 = scmp.ne.s32.totalorder %s112, %s113
      %p122 = scmp.eq.s32.totalorder %s18, 0
      %p123 = por %p121, %p122
      %p124 = scmp.ne.s32.totalorder %s112, %s113
      %p125 = scmp.eq.s32.totalorder %s19, 1
      %p126 = por %p124, %p125
      %p128 = scmp.ne.s32.totalorder %s113, %s127
      %p129 = scmp.eq.s32.totalorder %s19, 0
      %p130 = por %p128, %p129
      %s132 = sadd.s32 %s131, 1
      %p135 = scmp.eq.s32.totalorder %s13, 1
      %p136 = scmp.ne.s32.totalorder %s131, %s133
      %p137 = scmp.eq.s32.totalorder %s13, 0
      %p138 = por %p136, %p137
      %p139 = scmp.ne.s32.totalorder %s131, %s133
      %p140 = scmp.eq.s32.totalorder %s18, 1
      %p141 = por %p139, %p140
      %p142 = scmp.ne.s32.totalorder %s133, %s134
      %p143 = scmp.eq.s32.totalorder %s18, 0
      %p144 = por %p142, %p143
      %p145 = scmp.ne.s32.totalorder %s133, %s134
      %p146 = scmp.eq.s32.totalorder %s19, 1
      %p147 = por %p145, %p146
      %p149 = scmp.ne.s32.totalorder %s134, %s148
      %p150 = scmp.eq.s32.totalorder %s19, 0
      %p151 = por %p149, %p150
      %s153 = sadd.s32 %s152, 1
      %p156 = scmp.eq.s32.totalorder %s13, 1
      %p157 = scmp.ne.s32.totalorder %s152, %s154
      %p158 = scmp.eq.s32.totalorder %s13, 0
      %p159 = por %p157, %p158
      %p160 = scmp.ne.s32.totalorder %s152, %s154
      %p161 = scmp.eq.s32.totalorder %s18, 1
      %p162 = por %p160, %p161
      %p163 = scmp.ne.s32.totalorder %s154, %s155
      %p164 = scmp.eq.s32.totalorder %s18, 0
      %p165 = por %p163, %p164
      %p166 = scmp.ne.s32.totalorder %s154, %s155
      %p167 = scmp.eq.s32.totalorder %s19, 1
      %p168 = por %p166, %p167
      %p170 = scmp.ne.s32.totalorder %s155, %s169
      %p171 = scmp.eq.s32.totalorder %s19, 0
      %p172 = por %p170, %p171
      %s173 = ssub.s32 %s13, %s20
      %p174 = scmp.eq.s32.totalorder %s173, 0
      %s176 = sadd.s32 %s175, 1
      %s177 = scalar_select %p174, %s175, %s176
      %p180 = pneg %p174
      %p181 = scmp.eq.s32.totalorder %s13, 1
      %p182 = por %p180, %p181
      %p183 = scmp.ne.s32.totalorder %s175, %s178
      %p184 = scmp.eq.s32.totalorder %s13, 0
      %p185 = por %p183, %p184
      %p186 = scmp.ne.s32.totalorder %s175, %s178
      %p187 = scmp.eq.s32.totalorder %s18, 1
      %p188 = por %p186, %p187
      %p189 = scmp.ne.s32.totalorder %s178, %s179
      %p190 = scmp.eq.s32.totalorder %s18, 0
      %p191 = por %p189, %p190
      %p192 = scmp.ne.s32.totalorder %s178, %s179
      %p193 = scmp.eq.s32.totalorder %s19, 1
      %p194 = por %p192, %p193
      %p196 = scmp.ne.s32.totalorder %s179, %s195
      %p197 = scmp.eq.s32.totalorder %s19, 0
      %p198 = por %p196, %p197
      %p199 = scmp.le.s32.totalorder 1, %s13
      %p200 = scmp.lt.s32.totalorder %s13, 3
      %p201 = pnand %p199, %p200
      %p202 = pneg %p201
      // Predicated region
      $region9: #{tpu_custom_call.1} parent=5 // pred_check
        _
      $region10: #{tpu_custom_call.1} parent=5 // pred_check_branch
        %204 = sbr.rel (%p201) target = $region12
      $region11: #{tpu_custom_call.1} parent=5 // pred_region
        %s205 = ssub.s32 %s13, 1
        // Predicated region
        $region13: #{tpu_custom_call.1} parent=11 // pred_check
          %p206 = pneg %p60
        $region14: #{tpu_custom_call.1} parent=11 // pred_check_branch
          %208 = sbr.rel (%p206) target = $region16
        $region15: #{tpu_custom_call.1} parent=11 // pred_region
          _
        $region16: #{tpu_custom_call.1} parent=11 // pred_fallthru
          _
        // Predicated region
        $region17: #{tpu_custom_call.1} parent=11 // pred_check
          %p209 = pneg %p81
        $region18: #{tpu_custom_call.1} parent=11 // pred_check_branch
          %211 = sbr.rel (%p209) target = $region20
        $region19: #{tpu_custom_call.1} parent=11 // pred_region
          _
        $region20: #{tpu_custom_call.1} parent=11 // pred_fallthru
          _
        // Predicated region
        $region21: #{tpu_custom_call.1} parent=11 // pred_check
          %p212 = pneg %p102
        $region22: #{tpu_custom_call.1} parent=11 // pred_check_branch
          %214 = sbr.rel (%p212) target = $region24
        $region23: #{tpu_custom_call.1} parent=11 // pred_region
          _
        $region24: #{tpu_custom_call.1} parent=11 // pred_fallthru
          _
        // Predicated region
        $region25: #{tpu_custom_call.1} parent=11 // pred_check
          %p215 = pneg %p123
        $region26: #{tpu_custom_call.1} parent=11 // pred_check_branch
          %217 = sbr.rel (%p215) target = $region28
        $region27: #{tpu_custom_call.1} parent=11 // pred_region
          _
        $region28: #{tpu_custom_call.1} parent=11 // pred_fallthru
          _
        // Predicated region
        $region29: #{tpu_custom_call.1} parent=11 // pred_check
          %p218 = pneg %p144
        $region30: #{tpu_custom_call.1} parent=11 // pred_check_branch
          %220 = sbr.rel (%p218) target = $region32
        $region31: #{tpu_custom_call.1} parent=11 // pred_region
          _
        $region32: #{tpu_custom_call.1} parent=11 // pred_fallthru
          _
        // Predicated region
        $region33: #{tpu_custom_call.1} parent=11 // pred_check
          %p221 = pneg %p165
        $region34: #{tpu_custom_call.1} parent=11 // pred_check_branch
          %223 = sbr.rel (%p221) target = $region36
        $region35: #{tpu_custom_call.1} parent=11 // pred_region
          _
        $region36: #{tpu_custom_call.1} parent=11 // pred_fallthru
          _
      $region12: #{tpu_custom_call.1} parent=5 // pred_fallthru
        _
      %p224 = scmp.lt.s32.totalorder %s13, 2
      // Predicated region
      $region37: #{tpu_custom_call.1} parent=5 // pred_check
        %p225 = pneg %p224
      $region38: #{tpu_custom_call.1} parent=5 // pred_check_branch
        %227 = sbr.rel (%p225) target = $region40
      $region39: #{tpu_custom_call.1} parent=5 // pred_region
        // Predicated region
        $region41: #{tpu_custom_call.1} parent=39 // pred_check
          %p228 = pneg %p33
        $region42: #{tpu_custom_call.1} parent=39 // pred_check_branch
          %230 = sbr.rel (%p228) target = $region44
        $region43: #{tpu_custom_call.1} parent=39 // pred_region
          %s231 = sand.u32 %s23, 1
          %s232 = sand.u32 %s23, 1
          %s233 = smul.addr %s232, 16
          %s234 = scalar_lea.vmem [#allocation4], %s233
          %s235 = smul.addr %s13, 4
          %s236 = scalar_lea.vmem %s0, %s235
          // Predicated region
          $region45: #{tpu_custom_call.1} parent=43 // pred_check
            _
          $region46: #{tpu_custom_call.1} parent=43 // pred_check_branch
            %238 = sbr.rel (0) target = $region48
          $region47: #{tpu_custom_call.1} parent=43 // pred_region
            // Predicated region
            $region49: #{tpu_custom_call.1} parent=47 // pred_check
              _
            $region50: #{tpu_custom_call.1} parent=47 // pred_check_branch
              %240 = sbr.rel target = $region52
            $region51: #{tpu_custom_call.1} parent=47 // pred_region
              // Predicated region
              $region64: #{tpu_custom_call.1} parent=51 // pred_check
                _
              $region65: #{tpu_custom_call.1} parent=51 // pred_check_branch
                %262 = sbr.rel (0) target = $region67
              $region66: #{tpu_custom_call.1} parent=51 // pred_region
                loop: start=0, step=1, limit=1
                $region68: #{tpu_custom_call.1} parent=66 // loop_pre_header
                  _
                $region69: #{tpu_custom_call.1} parent=66 // loop_header
                  %s264 = sphi 0, %s268
                  %p265 = scmp.ge.s32.totalorder %s264, 1
                  %s269 = sphi %s236, %s236
                  %s270 = sphi %s234, %s234
                $region70: #{tpu_custom_call.1} parent=66 // loop_header_branch
                  %267 = sbr.rel (%p265) target = $region74
                $region71: #{tpu_custom_call.1} parent=66 // loop_body
                  _
                $region72: #{tpu_custom_call.1} parent=66 // loop_footer
                  %s268 = sadd.s32 1, %s264
                $region73: #{tpu_custom_call.1} parent=66 // loop_footer_branch
                  %263 = sbr.rel target = $region69
                $region74: #{tpu_custom_call.1} parent=66 // loop_exit
                  _
                %s272 = ssub.s32 16, 1
                loop: start=0, step=1, limit=1
                $region75: #{tpu_custom_call.1} parent=66 // loop_pre_header
                  _
                $region76: #{tpu_custom_call.1} parent=66 // loop_header
                  %s274 = sphi 0, %s278
                  %p275 = scmp.ge.s32.totalorder %s274, 1
                  %s279 = sphi %s236, %s236
                  %s280 = sphi %s234, %s234
                $region77: #{tpu_custom_call.1} parent=66 // loop_header_branch
                  %277 = sbr.rel (%p275) target = $region81
                $region78: #{tpu_custom_call.1} parent=66 // loop_body
                  %v281 = vld [vmem:[%s279] sm:%s272]
                  %282 = vst [vmem:[%s280] sm:%s272] %v281
                  %v283 = vld [vmem:[%s279 + $0x8] sm:%s272]
                  %284 = vst [vmem:[%s280 + $0x4] sm:%s272] %v283
                  %v285 = vld [vmem:[%s279 + $0x10] sm:%s272]
                  %286 = vst [vmem:[%s280 + $0x8] sm:%s272] %v285
                  %v287 = vld [vmem:[%s279 + $0x18] sm:%s272]
                  %288 = vst [vmem:[%s280 + $0xc] sm:%s272] %v287
                $region79: #{tpu_custom_call.1} parent=66 // loop_footer
                  %s278 = sadd.s32 1, %s274
                $region80: #{tpu_custom_call.1} parent=66 // loop_footer_branch
                  %273 = sbr.rel target = $region76
                $region81: #{tpu_custom_call.1} parent=66 // loop_exit
                  _
              $region67: #{tpu_custom_call.1} parent=51 // pred_fallthru
                _
            $region52: #{tpu_custom_call.1} parent=47 // pred_fallthru
              _
            // Predicated region
            $region53: #{tpu_custom_call.1} parent=47 // pred_check
              _
            $region54: #{tpu_custom_call.1} parent=47 // pred_check_branch
              %242 = sbr.rel (0) target = $region56
            $region55: #{tpu_custom_call.1} parent=47 // pred_region
              %s244 = ssub.s32 16, 1
              loop: start=0, step=1, limit=1
              $region57: #{tpu_custom_call.1} parent=55 // loop_pre_header
                _
              $region58: #{tpu_custom_call.1} parent=55 // loop_header
                %s246 = sphi 0, %s250
                %p247 = scmp.ge.s32.totalorder %s246, 1
                %s251 = sphi %s236, %s236
                %s252 = sphi %s234, %s234
              $region59: #{tpu_custom_call.1} parent=55 // loop_header_branch
                %249 = sbr.rel (%p247) target = $region63
              $region60: #{tpu_custom_call.1} parent=55 // loop_body
                %v253 = vld [vmem:[%s251] sm:%s244]
                %254 = vst [vmem:[%s252] sm:%s244] %v253
                %v255 = vld [vmem:[%s251 + $0x8] sm:%s244]
                %256 = vst [vmem:[%s252 + $0x4] sm:%s244] %v255
                %v257 = vld [vmem:[%s251 + $0x10] sm:%s244]
                %258 = vst [vmem:[%s252 + $0x8] sm:%s244] %v257
                %v259 = vld [vmem:[%s251 + $0x18] sm:%s244]
                %260 = vst [vmem:[%s252 + $0xc] sm:%s244] %v259
              $region61: #{tpu_custom_call.1} parent=55 // loop_footer
                %s250 = sadd.s32 1, %s246
              $region62: #{tpu_custom_call.1} parent=55 // loop_footer_branch
                %245 = sbr.rel target = $region58
              $region63: #{tpu_custom_call.1} parent=55 // loop_exit
                _
            $region56: #{tpu_custom_call.1} parent=47 // pred_fallthru
              _
          $region48: #{tpu_custom_call.1} parent=43 // pred_fallthru
            _
          %289 = vnop
        $region44: #{tpu_custom_call.1} parent=39 // pred_fallthru
          _
      $region40: #{tpu_custom_call.1} parent=5 // pred_fallthru
        _
      %p290 = scmp.le.s32.totalorder 1, %s13
      %p291 = scmp.lt.s32.totalorder %s13, 3
      %p292 = pnand %p290, %p291
      %p293 = pneg %p292
      // Predicated region
      $region82: #{tpu_custom_call.1} parent=5 // pred_check
        _
      $region83: #{tpu_custom_call.1} parent=5 // pred_check_branch
        %295 = sbr.rel (%p292) target = $region85
      $region84: #{tpu_custom_call.1} parent=5 // pred_region
        %s296 = ssub.s32 %s13, 1
        %s297 = sand.u32 %s26, 1
        %s298 = sand.u32 %s26, 1
        %s299 = smul.addr %s298, 16
        %s300 = scalar_lea.vmem [#allocation4], %s299
        // Predicated region
        $region86: #{tpu_custom_call.1} parent=84 // pred_check
          %p301 = pneg %p39
        $region87: #{tpu_custom_call.1} parent=84 // pred_check_branch
          %303 = sbr.rel (%p301) target = $region89
        $region88: #{tpu_custom_call.1} parent=84 // pred_region
          _
        $region89: #{tpu_custom_call.1} parent=84 // pred_fallthru
          _
        %s304 = sand.u32 %s26, 1
        %s305 = sand.u32 %s26, 1
        %s306 = smul.addr %s305, 16
        %s307 = scalar_lea.vmem [#allocation4], %s306
        %p308 = pneg %p39
        %p309 = pneg %p36
        %p310 = pneg %p60
        %p311 = pneg %p57
        %p312 = pneg %p81
        %p313 = pneg %p78
        %p314 = pneg %p102
        %p315 = pneg %p99
        %p316 = pneg %p123
        %p317 = pneg %p120
        %p318 = pneg %p144
        %p319 = pneg %p141
        %p320 = pneg %p165
        %p321 = pneg %p162
        %p322 = pneg %p191
        %p323 = pneg %p188
        %p324 = scmp.lt.s32.totalorder %s18, 1
        %s325 = scalar_select %p324, %s18, 1
        %s326 = smul.addr %s325, 16
        %s327 = smul.addr %s326, 8
        %s328 = scalar_lea.vmem %s7, %s327
        %p329 = scmp.lt.s32.totalorder %s18, 1
        %s330 = scalar_select %p329, %s18, 1
        %s331 = smul.addr %s330, 16
        %s332 = smul.addr %s331, 8
        %s333 = scalar_lea.vmem %s7, %s332
        %v335 = vld [vmem:[%s3] sm:$0xff]
        %v336 = vld [vmem:[%s3 + $0x8] sm:$0xff]
        %v337 = vld [vmem:[%s4] sm:$0xff]
        %v338 = vld [vmem:[%s4 + $0x8] sm:$0xff]
        %v339 = vlaneseq
        %v340 = vand.u32 %v339, 127
        %vm341 = vcmp.lt.s32.totalorder %v340, 127
        %v342 = vsel %vm341, 1, 0
        %v343 = vcvt.s32.f32 %v342
        %344 = vst [vmem:[#allocation3] sm:$0xff] 0.0
        %345 = vst [vmem:[#allocation3 + $0x8] sm:$0xff] 0.0
        %346 = vst [vmem:[#allocation3 + $0x10] sm:$0xff] 0.0
        %347 = vst [vmem:[#allocation3 + $0x18] sm:$0xff] 0.0
        %v348 = vld [vmem:[%s1] sm:$0xf]
        %v349 = vld [vmem:[%s1 + $0x4] sm:$0xf]
        %v350 = vld [vmem:[%s300] sm:$0xf]
        %v351 = vld [vmem:[%s300 + $0x4] sm:$0xf]
        %v352 = vld [vmem:[%s300 + $0x8] sm:$0xf]
        %v353 = vld [vmem:[%s300 + $0xc] sm:$0x7]
        %v354 = vld [vmem:[%s2] sm:$0xff]
        %v355 = vld [vmem:[%s2 + $0x8] sm:$0xff]
        %357 = vset.pattern.permute.xlu0 0
        %358 = vperm.xlu0 %357, %v354
        %v359 = vpop.permute.xlu0 %358
        %362 = vset.pattern.permute.xlu0 0
        %363 = vperm.xlu0 %362, %v355
        %v364 = vpop.permute.xlu0 %363
        %v368 = vunpack.c.l.b16 %v348
        %v369 = vunpack.c.l.b16 %v349
        %v370 = vpack.c.b16 %v369, %v368
        %v375 = vunpack.c.l.b16 %v350
        %v376 = vunpack.c.l.b16 %v351
        %v377 = vunpack.c.l.b16 %v352
        %v378 = vunpack.c.l.b16 %v353
        %v379 = vpack.c.b16 %v376, %v375
        %v380 = vpack.c.b16 %v378, %v377
        %vm382 = vcmask 244736
        %v384 = vsel %vm382, %v370, 0
        %vm386 = vcmask 1046528
        %v388 = vsel %vm386, %v380, 0
        %390 = vmatprep.subr.bf16.mxu0 0
        %391 = vmatpush1.bf16.msra.mxu0 0
        %392 = vmatprep.subr.bf16.mxu0 0
        %393 = vmatpush1.bf16.msra.mxu0 0
        %394 = vmatprep.subr.bf16.mxu0 0
        %395 = vmatpush1.bf16.msra.mxu0 0
        %396 = vmatprep.subr.bf16.mxu0 0
        %397 = vmatpush1.bf16.msra.mxu0 0
        %398 = vmatprep.subr.bf16.mxu0 0
        %399 = vmatpush1.bf16.msra.mxu0 0
        %400 = vmatprep.subr.bf16.mxu0 0
        %401 = vmatpush1.bf16.msra.mxu0 0
        %402 = vmatprep.subr.bf16.mxu0 0
        %403 = vmatpush1.bf16.msra.mxu0 %v388
        %404 = vmatprep.subr.bf16.mxu0 0
        %405 = vmatpush1.bf16.msra.mxu0 %v379
        %406 = vmatprep.subr.bf16.mxu0 0
        %407 = vmatpush2.bf16.msra.mxu0 0
        %408 = vmatprep.subr.bf16.mxu0 0
        %409 = vmatpush2.bf16.msra.mxu0 0
        %410 = vmatprep.subr.bf16.mxu0 0
        %411 = vmatpush2.bf16.msra.mxu0 0
        %412 = vmatprep.subr.bf16.mxu0 0
        %413 = vmatpush2.bf16.msra.mxu0 0
        %414 = vmatprep.subr.bf16.mxu0 0
        %415 = vmatpush2.bf16.msra.mxu0 0
        %416 = vmatprep.subr.bf16.mxu0 0
        %417 = vmatpush2.bf16.msra.mxu0 0
        %418 = vmatprep.subr.bf16.mxu0 0
        %419 = vmatpush2.bf16.msra.mxu0 0
        %420 = vmatprep.subr.bf16.mxu0 0
        %421 = vmatpush2.bf16.msra.mxu0 0
        %422 = vmatprep.mubr.bf16.mxu0 0
        %423 = vmatmul.mubr.bf16.gmra.mxu0 %v384
        %v424 = vpop.f32.mrf.mxu0
        %v425 = vadd.f32 %v359, %v424
        %v426 = vpop.f32.mrf.mxu0
        %v427 = vpop.f32.mrf.mxu0
        %v428 = vadd.f32 %v364, %v427
        %v429 = vpop.f32.mrf.mxu0
        %430 = vdwg.mxu0
        %431 = vst [vmem:[#allocation2] sm:$0xff] %v425
        %432 = vst [vmem:[#allocation2 + $0x8] sm:$0xff] %v428
        %v433 = vld [vmem:[#allocation2] sm:$0xff]
        %v434 = vld [vmem:[#allocation2 + $0x8] sm:$0xff]
        %437 = vrot.lane.b32.xlu0 %v433, 31
        %v438 = vpop.permute.xlu0 %437
        %439 = vrot.lane.b32.xlu0 %v434, 31
        %v440 = vpop.permute.xlu0 %439
        %vm443 = vcmask 1047800
        %444 = vst.msk [vmem:[#allocation3] sm:$0xff] %vm443, %v438
        %vm445 = vcmask 252928
        %446 = vst.msk [vmem:[#allocation3 + $0x8] sm:$0xff] %vm445, %v438
        %447 = vst.msk [vmem:[#allocation3 + $0x10] sm:$0xff] %vm443, %v440
        %448 = vst.msk [vmem:[#allocation3 + $0x18] sm:$0xff] %vm445, %v440
        %v449 = vld [vmem:[#allocation3] sm:$0xff]
        %v450 = vld [vmem:[#allocation3 + $0x8] sm:$0xff]
        %v451 = vld [vmem:[#allocation3 + $0x10] sm:$0xff]
        %v452 = vld [vmem:[#allocation3 + $0x18] sm:$0xff]
        %454 = vset.pattern.permute.xlu0 0
        %455 = vperm.xlu0 %454, %v335
        %v456 = vpop.permute.xlu0 %455
        %459 = vset.pattern.permute.xlu0 0
        %460 = vperm.xlu0 %459, %v336
        %v461 = vpop.permute.xlu0 %460
        %v463 = vmul.f32 %v456, %v449
        %v464 = vmul.f32 %v461, %v451
        %v465 = vadd.f32 %v463, 0.0
        %v466 = vadd.f32 %v464, 0.0
        %467 = vset.pattern.permute.xlu0 64
        %468 = vperm.xlu0 %467, %v335
        %v469 = vpop.permute.xlu0 %468
        %471 = vset.pattern.permute.xlu0 64
        %472 = vperm.xlu0 %471, %v336
        %v473 = vpop.permute.xlu0 %472
        %v475 = vmul.f32 %v469, %v449
        %v476 = vmul.f32 %v473, %v451
        %v477 = vadd.f32 %v475, 0.0
        %v478 = vadd.f32 %v476, 0.0
        %479 = vset.pattern.permute.xlu0 1
        %480 = vperm.xlu0 %479, %v335
        %v481 = vpop.permute.xlu0 %480
        %483 = vset.pattern.permute.xlu0 1
        %484 = vperm.xlu0 %483, %v336
        %v485 = vpop.permute.xlu0 %484
        %v487 = vmul.f32 %v481, %v449
        %v488 = vmul.f32 %v481, %v450
        %v489 = vmul.f32 %v485, %v451
        %v490 = vmul.f32 %v485, %v452
        %v491 = vadd.f32 %v487, 0.0
        %v492 = vadd.f32 %v488, 0.0
        %v493 = vadd.f32 %v489, 0.0
        %v494 = vadd.f32 %v490, 0.0
        %495 = vset.pattern.permute.xlu0 65
        %496 = vperm.xlu0 %495, %v335
        %v497 = vpop.permute.xlu0 %496
        %499 = vset.pattern.permute.xlu0 65
        %500 = vperm.xlu0 %499, %v336
        %v501 = vpop.permute.xlu0 %500
        %v503 = vmul.f32 %v497, %v449
        %v504 = vmul.f32 %v497, %v450
        %v505 = vmul.f32 %v501, %v451
        %v506 = vmul.f32 %v501, %v452
        %v507 = vadd.f32 %v503, 0.0
        %v508 = vadd.f32 %v504, 0.0
        %v509 = vadd.f32 %v505, 0.0
        %v510 = vadd.f32 %v506, 0.0
        %511 = vset.pattern.permute.xlu0 2
        %512 = vperm.xlu0 %511, %v335
        %v513 = vpop.permute.xlu0 %512
        %515 = vset.pattern.permute.xlu0 2
        %516 = vperm.xlu0 %515, %v336
        %v517 = vpop.permute.xlu0 %516
        %v519 = vmul.f32 %v513, %v449
        %v520 = vmul.f32 %v513, %v450
        %v521 = vmul.f32 %v517, %v451
        %v522 = vmul.f32 %v517, %v452
        %527 = vrot.lane.b32.xlu0 %v519, 126
        %v528 = vpop.permute.xlu0 %527
        %529 = vrot.lane.b32.xlu0 %v520, 126
        %v530 = vpop.permute.xlu0 %529
        %531 = vrot.lane.b32.xlu0 %v521, 126
        %v532 = vpop.permute.xlu0 %531
        %533 = vrot.lane.b32.xlu0 %v522, 126
        %v534 = vpop.permute.xlu0 %533
        %vm535 = vcmask 1031168
        %v536 = vsel %vm535, %v528, %v530
        %v537 = vsel %vm535, %v532, %v534
        %v540 = vadd.f32 %v465, %v536
        %v541 = vadd.f32 %v466, %v537
        %542 = vset.pattern.permute.xlu0 66
        %543 = vperm.xlu0 %542, %v335
        %v544 = vpop.permute.xlu0 %543
        %546 = vset.pattern.permute.xlu0 66
        %547 = vperm.xlu0 %546, %v336
        %v548 = vpop.permute.xlu0 %547
        %v550 = vmul.f32 %v544, %v449
        %v551 = vmul.f32 %v544, %v450
        %v552 = vmul.f32 %v548, %v451
        %v553 = vmul.f32 %v548, %v452
        %558 = vrot.lane.b32.xlu0 %v550, 126
        %v559 = vpop.permute.xlu0 %558
        %560 = vrot.lane.b32.xlu0 %v551, 126
        %v561 = vpop.permute.xlu0 %560
        %562 = vrot.lane.b32.xlu0 %v552, 126
        %v563 = vpop.permute.xlu0 %562
        %564 = vrot.lane.b32.xlu0 %v553, 126
        %v565 = vpop.permute.xlu0 %564
        %v566 = vsel %vm535, %v559, %v561
        %v567 = vsel %vm535, %v563, %v565
        %v570 = vadd.f32 %v477, %v566
        %v571 = vadd.f32 %v478, %v567
        %572 = vset.pattern.permute.xlu0 3
        %573 = vperm.xlu0 %572, %v335
        %v574 = vpop.permute.xlu0 %573
        %576 = vset.pattern.permute.xlu0 3
        %577 = vperm.xlu0 %576, %v336
        %v578 = vpop.permute.xlu0 %577
        %v580 = vmul.f32 %v574, %v449
        %v581 = vmul.f32 %v574, %v450
        %v582 = vmul.f32 %v578, %v451
        %v583 = vmul.f32 %v578, %v452
        %588 = vrot.lane.b32.xlu0 %v580, 126
        %v589 = vpop.permute.xlu0 %588
        %590 = vrot.lane.b32.xlu0 %v581, 126
        %v591 = vpop.permute.xlu0 %590
        %592 = vrot.lane.b32.xlu0 %v582, 126
        %v593 = vpop.permute.xlu0 %592
        %594 = vrot.lane.b32.xlu0 %v583, 126
        %v595 = vpop.permute.xlu0 %594
        %v596 = vsel %vm535, %v589, %v591
        %v597 = vsel %vm535, %v593, %v595
        %v602 = vadd.f32 %v491, %v596
        %v603 = vadd.f32 %v492, %v591
        %v604 = vadd.f32 %v493, %v597
        %v605 = vadd.f32 %v494, %v595
        %606 = vset.pattern.permute.xlu0 67
        %607 = vperm.xlu0 %606, %v335
        %v608 = vpop.permute.xlu0 %607
        %610 = vset.pattern.permute.xlu0 67
        %611 = vperm.xlu0 %610, %v336
        %v612 = vpop.permute.xlu0 %611
        %v614 = vmul.f32 %v608, %v449
        %v615 = vmul.f32 %v608, %v450
        %v616 = vmul.f32 %v612, %v451
        %v617 = vmul.f32 %v612, %v452
        %622 = vrot.lane.b32.xlu0 %v614, 126
        %v623 = vpop.permute.xlu0 %622
        %624 = vrot.lane.b32.xlu0 %v615, 126
        %v625 = vpop.permute.xlu0 %624
        %626 = vrot.lane.b32.xlu0 %v616, 126
        %v627 = vpop.permute.xlu0 %626
        %628 = vrot.lane.b32.xlu0 %v617, 126
        %v629 = vpop.permute.xlu0 %628
        %v630 = vsel %vm535, %v623, %v625
        %v631 = vsel %vm535, %v627, %v629
        %v636 = vadd.f32 %v507, %v630
        %v637 = vadd.f32 %v508, %v625
        %v638 = vadd.f32 %v509, %v631
        %v639 = vadd.f32 %v510, %v629
        %640 = vset.pattern.permute.xlu0 4
        %641 = vperm.xlu0 %640, %v335
        %v642 = vpop.permute.xlu0 %641
        %644 = vset.pattern.permute.xlu0 4
        %645 = vperm.xlu0 %644, %v336
        %v646 = vpop.permute.xlu0 %645
        %v648 = vmul.f32 %v642, %v449
        %v649 = vmul.f32 %v642, %v450
        %v650 = vmul.f32 %v646, %v451
        %v651 = vmul.f32 %v646, %v452
        %656 = vrot.lane.b32.xlu0 %v648, 124
        %v657 = vpop.permute.xlu0 %656
        %658 = vrot.lane.b32.xlu0 %v649, 124
        %v659 = vpop.permute.xlu0 %658
        %660 = vrot.lane.b32.xlu0 %v650, 124
        %v661 = vpop.permute.xlu0 %660
        %662 = vrot.lane.b32.xlu0 %v651, 124
        %v663 = vpop.permute.xlu0 %662
        %vm664 = vcmask 1014784
        %v665 = vsel %vm664, %v657, %v659
        %v666 = vsel %vm664, %v661, %v663
        %v669 = vadd.f32 %v540, %v665
        %v670 = vadd.f32 %v541, %v666
        %671 = vset.pattern.permute.xlu0 68
        %672 = vperm.xlu0 %671, %v335
        %v673 = vpop.permute.xlu0 %672
        %675 = vset.pattern.permute.xlu0 68
        %676 = vperm.xlu0 %675, %v336
        %v677 = vpop.permute.xlu0 %676
        %v679 = vmul.f32 %v673, %v449
        %v680 = vmul.f32 %v673, %v450
        %v681 = vmul.f32 %v677, %v451
        %v682 = vmul.f32 %v677, %v452
        %687 = vrot.lane.b32.xlu0 %v679, 124
        %v688 = vpop.permute.xlu0 %687
        %689 = vrot.lane.b32.xlu0 %v680, 124
        %v690 = vpop.permute.xlu0 %689
        %691 = vrot.lane.b32.xlu0 %v681, 124
        %v692 = vpop.permute.xlu0 %691
        %693 = vrot.lane.b32.xlu0 %v682, 124
        %v694 = vpop.permute.xlu0 %693
        %v695 = vsel %vm664, %v688, %v690
        %v696 = vsel %vm664, %v692, %v694
        %v699 = vadd.f32 %v570, %v695
        %v700 = vadd.f32 %v571, %v696
        %701 = vset.pattern.permute.xlu0 5
        %702 = vperm.xlu0 %701, %v335
        %v703 = vpop.permute.xlu0 %702
        %705 = vset.pattern.permute.xlu0 5
        %706 = vperm.xlu0 %705, %v336
        %v707 = vpop.permute.xlu0 %706
        %v709 = vmul.f32 %v703, %v449
        %v710 = vmul.f32 %v703, %v450
        %v711 = vmul.f32 %v707, %v451
        %v712 = vmul.f32 %v707, %v452
        %717 = vrot.lane.b32.xlu0 %v709, 124
        %v718 = vpop.permute.xlu0 %717
        %719 = vrot.lane.b32.xlu0 %v710, 124
        %v720 = vpop.permute.xlu0 %719
        %721 = vrot.lane.b32.xlu0 %v711, 124
        %v722 = vpop.permute.xlu0 %721
        %723 = vrot.lane.b32.xlu0 %v712, 124
        %v724 = vpop.permute.xlu0 %723
        %v725 = vsel %vm664, %v718, %v720
        %v726 = vsel %vm664, %v722, %v724
        %v731 = vadd.f32 %v602, %v725
        %v732 = vadd.f32 %v603, %v720
        %v733 = vadd.f32 %v604, %v726
        %v734 = vadd.f32 %v605, %v724
        %735 = vset.pattern.permute.xlu0 69
        %736 = vperm.xlu0 %735, %v335
        %v737 = vpop.permute.xlu0 %736
        %739 = vset.pattern.permute.xlu0 69
        %740 = vperm.xlu0 %739, %v336
        %v741 = vpop.permute.xlu0 %740
        %v743 = vmul.f32 %v737, %v449
        %v744 = vmul.f32 %v737, %v450
        %v745 = vmul.f32 %v741, %v451
        %v746 = vmul.f32 %v741, %v452
        %751 = vrot.lane.b32.xlu0 %v743, 124
        %v752 = vpop.permute.xlu0 %751
        %753 = vrot.lane.b32.xlu0 %v744, 124
        %v754 = vpop.permute.xlu0 %753
        %755 = vrot.lane.b32.xlu0 %v745, 124
        %v756 = vpop.permute.xlu0 %755
        %757 = vrot.lane.b32.xlu0 %v746, 124
        %v758 = vpop.permute.xlu0 %757
        %v759 = vsel %vm664, %v752, %v754
        %v760 = vsel %vm664, %v756, %v758
        %v765 = vadd.f32 %v636, %v759
        %v766 = vadd.f32 %v637, %v754
        %v767 = vadd.f32 %v638, %v760
        %v768 = vadd.f32 %v639, %v758
        %769 = vset.pattern.permute.xlu0 6
        %770 = vperm.xlu0 %769, %v335
        %v771 = vpop.permute.xlu0 %770
        %773 = vset.pattern.permute.xlu0 6
        %774 = vperm.xlu0 %773, %v336
        %v775 = vpop.permute.xlu0 %774
        %v777 = vmul.f32 %v771, %v449
        %v778 = vmul.f32 %v771, %v450
        %v779 = vmul.f32 %v775, %v451
        %v780 = vmul.f32 %v775, %v452
        %785 = vrot.lane.b32.xlu0 %v777, 122
        %v786 = vpop.permute.xlu0 %785
        %787 = vrot.lane.b32.xlu0 %v778, 122
        %v788 = vpop.permute.xlu0 %787
        %789 = vrot.lane.b32.xlu0 %v779, 122
        %v790 = vpop.permute.xlu0 %789
        %791 = vrot.lane.b32.xlu0 %v780, 122
        %v792 = vpop.permute.xlu0 %791
        %vm793 = vcmask 998400
        %v794 = vsel %vm793, %v786, %v788
        %v795 = vsel %vm793, %v790, %v792
        %v798 = vadd.f32 %v669, %v794
        %v799 = vadd.f32 %v670, %v795
        %800 = vset.pattern.permute.xlu0 70
        %801 = vperm.xlu0 %800, %v335
        %v802 = vpop.permute.xlu0 %801
        %804 = vset.pattern.permute.xlu0 70
        %805 = vperm.xlu0 %804, %v336
        %v806 = vpop.permute.xlu0 %805
        %v808 = vmul.f32 %v802, %v449
        %v809 = vmul.f32 %v802, %v450
        %v810 = vmul.f32 %v806, %v451
        %v811 = vmul.f32 %v806, %v452
        %816 = vrot.lane.b32.xlu0 %v808, 122
        %v817 = vpop.permute.xlu0 %816
        %818 = vrot.lane.b32.xlu0 %v809, 122
        %v819 = vpop.permute.xlu0 %818
        %820 = vrot.lane.b32.xlu0 %v810, 122
        %v821 = vpop.permute.xlu0 %820
        %822 = vrot.lane.b32.xlu0 %v811, 122
        %v823 = vpop.permute.xlu0 %822
        %v824 = vsel %vm793, %v817, %v819
        %v825 = vsel %vm793, %v821, %v823
        %v828 = vadd.f32 %v699, %v824
        %v829 = vadd.f32 %v700, %v825
        %830 = vset.pattern.permute.xlu0 7
        %831 = vperm.xlu0 %830, %v335
        %v832 = vpop.permute.xlu0 %831
        %834 = vset.pattern.permute.xlu0 7
        %835 = vperm.xlu0 %834, %v336
        %v836 = vpop.permute.xlu0 %835
        %v838 = vmul.f32 %v832, %v449
        %v839 = vmul.f32 %v832, %v450
        %v840 = vmul.f32 %v836, %v451
        %v841 = vmul.f32 %v836, %v452
        %846 = vrot.lane.b32.xlu0 %v838, 122
        %v847 = vpop.permute.xlu0 %846
        %848 = vrot.lane.b32.xlu0 %v839, 122
        %v849 = vpop.permute.xlu0 %848
        %850 = vrot.lane.b32.xlu0 %v840, 122
        %v851 = vpop.permute.xlu0 %850
        %852 = vrot.lane.b32.xlu0 %v841, 122
        %v853 = vpop.permute.xlu0 %852
        %v854 = vsel %vm793, %v847, %v849
        %v855 = vsel %vm793, %v851, %v853
        %v860 = vadd.f32 %v731, %v854
        %v861 = vadd.f32 %v732, %v849
        %v862 = vadd.f32 %v733, %v855
        %v863 = vadd.f32 %v734, %v853
        %864 = vset.pattern.permute.xlu0 71
        %865 = vperm.xlu0 %864, %v335
        %v866 = vpop.permute.xlu0 %865
        %868 = vset.pattern.permute.xlu0 71
        %869 = vperm.xlu0 %868, %v336
        %v870 = vpop.permute.xlu0 %869
        %v872 = vmul.f32 %v866, %v449
        %v873 = vmul.f32 %v866, %v450
        %v874 = vmul.f32 %v870, %v451
        %v875 = vmul.f32 %v870, %v452
        %880 = vrot.lane.b32.xlu0 %v872, 122
        %v881 = vpop.permute.xlu0 %880
        %882 = vrot.lane.b32.xlu0 %v873, 122
        %v883 = vpop.permute.xlu0 %882
        %884 = vrot.lane.b32.xlu0 %v874, 122
        %v885 = vpop.permute.xlu0 %884
        %886 = vrot.lane.b32.xlu0 %v875, 122
        %v887 = vpop.permute.xlu0 %886
        %v888 = vsel %vm793, %v881, %v883
        %v889 = vsel %vm793, %v885, %v887
        %v894 = vadd.f32 %v765, %v888
        %v895 = vadd.f32 %v766, %v883
        %v896 = vadd.f32 %v767, %v889
        %v897 = vadd.f32 %v768, %v887
        %898 = vset.pattern.permute.xlu0 8
        %899 = vperm.xlu0 %898, %v335
        %v900 = vpop.permute.xlu0 %899
        %902 = vset.pattern.permute.xlu0 8
        %903 = vperm.xlu0 %902, %v336
        %v904 = vpop.permute.xlu0 %903
        %v906 = vmul.f32 %v900, %v449
        %v907 = vmul.f32 %v900, %v450
        %v908 = vmul.f32 %v904, %v451
        %v909 = vmul.f32 %v904, %v452
        %914 = vrot.lane.b32.xlu0 %v906, 120
        %v915 = vpop.permute.xlu0 %914
        %916 = vrot.lane.b32.xlu0 %v907, 120
        %v917 = vpop.permute.xlu0 %916
        %918 = vrot.lane.b32.xlu0 %v908, 120
        %v919 = vpop.permute.xlu0 %918
        %920 = vrot.lane.b32.xlu0 %v909, 120
        %v921 = vpop.permute.xlu0 %920
        %vm922 = vcmask 982016
        %v923 = vsel %vm922, %v915, %v917
        %v924 = vsel %vm922, %v919, %v921
        %v927 = vadd.f32 %v798, %v923
        %v928 = vadd.f32 %v799, %v924
        %929 = vset.pattern.permute.xlu0 72
        %930 = vperm.xlu0 %929, %v335
        %v931 = vpop.permute.xlu0 %930
        %933 = vset.pattern.permute.xlu0 72
        %934 = vperm.xlu0 %933, %v336
        %v935 = vpop.permute.xlu0 %934
        %v937 = vmul.f32 %v931, %v449
        %v938 = vmul.f32 %v931, %v450
        %v939 = vmul.f32 %v935, %v451
        %v940 = vmul.f32 %v935, %v452
        %945 = vrot.lane.b32.xlu0 %v937, 120
        %v946 = vpop.permute.xlu0 %945
        %947 = vrot.lane.b32.xlu0 %v938, 120
        %v948 = vpop.permute.xlu0 %947
        %949 = vrot.lane.b32.xlu0 %v939, 120
        %v950 = vpop.permute.xlu0 %949
        %951 = vrot.lane.b32.xlu0 %v940, 120
        %v952 = vpop.permute.xlu0 %951
        %v953 = vsel %vm922, %v946, %v948
        %v954 = vsel %vm922, %v950, %v952
        %v957 = vadd.f32 %v828, %v953
        %v958 = vadd.f32 %v829, %v954
        %959 = vset.pattern.permute.xlu0 9
        %960 = vperm.xlu0 %959, %v335
        %v961 = vpop.permute.xlu0 %960
        %963 = vset.pattern.permute.xlu0 9
        %964 = vperm.xlu0 %963, %v336
        %v965 = vpop.permute.xlu0 %964
        %v967 = vmul.f32 %v961, %v449
        %v968 = vmul.f32 %v961, %v450
        %v969 = vmul.f32 %v965, %v451
        %v970 = vmul.f32 %v965, %v452
        %975 = vrot.lane.b32.xlu0 %v967, 120
        %v976 = vpop.permute.xlu0 %975
        %977 = vrot.lane.b32.xlu0 %v968, 120
        %v978 = vpop.permute.xlu0 %977
        %979 = vrot.lane.b32.xlu0 %v969, 120
        %v980 = vpop.permute.xlu0 %979
        %981 = vrot.lane.b32.xlu0 %v970, 120
        %v982 = vpop.permute.xlu0 %981
        %v983 = vsel %vm922, %v976, %v978
        %v984 = vsel %vm922, %v980, %v982
        %v989 = vadd.f32 %v860, %v983
        %v990 = vadd.f32 %v861, %v978
        %v991 = vadd.f32 %v862, %v984
        %v992 = vadd.f32 %v863, %v982
        %993 = vset.pattern.permute.xlu0 73
        %994 = vperm.xlu0 %993, %v335
        %v995 = vpop.permute.xlu0 %994
        %997 = vset.pattern.permute.xlu0 73
        %998 = vperm.xlu0 %997, %v336
        %v999 = vpop.permute.xlu0 %998
        %v1001 = vmul.f32 %v995, %v449
        %v1002 = vmul.f32 %v995, %v450
        %v1003 = vmul.f32 %v999, %v451
        %v1004 = vmul.f32 %v999, %v452
        %1009 = vrot.lane.b32.xlu0 %v1001, 120
        %v1010 = vpop.permute.xlu0 %1009
        %1011 = vrot.lane.b32.xlu0 %v1002, 120
        %v1012 = vpop.permute.xlu0 %1011
        %1013 = vrot.lane.b32.xlu0 %v1003, 120
        %v1014 = vpop.permute.xlu0 %1013
        %1015 = vrot.lane.b32.xlu0 %v1004, 120
        %v1016 = vpop.permute.xlu0 %1015
        %v1017 = vsel %vm922, %v1010, %v1012
        %v1018 = vsel %vm922, %v1014, %v1016
        %v1023 = vadd.f32 %v894, %v1017
        %v1024 = vadd.f32 %v895, %v1012
        %v1025 = vadd.f32 %v896, %v1018
        %v1026 = vadd.f32 %v897, %v1016
        %1027 = vset.pattern.permute.xlu0 10
        %1028 = vperm.xlu0 %1027, %v335
        %v1029 = vpop.permute.xlu0 %1028
        %1031 = vset.pattern.permute.xlu0 10
        %1032 = vperm.xlu0 %1031, %v336
        %v1033 = vpop.permute.xlu0 %1032
        %v1035 = vmul.f32 %v1029, %v449
        %v1036 = vmul.f32 %v1029, %v450
        %v1037 = vmul.f32 %v1033, %v451
        %v1038 = vmul.f32 %v1033, %v452
        %1043 = vrot.lane.b32.xlu0 %v1035, 118
        %v1044 = vpop.permute.xlu0 %1043
        %1045 = vrot.lane.b32.xlu0 %v1036, 118
        %v1046 = vpop.permute.xlu0 %1045
        %1047 = vrot.lane.b32.xlu0 %v1037, 118
        %v1048 = vpop.permute.xlu0 %1047
        %1049 = vrot.lane.b32.xlu0 %v1038, 118
        %v1050 = vpop.permute.xlu0 %1049
        %vm1051 = vcmask 965632
        %v1052 = vsel %vm1051, %v1044, %v1046
        %v1053 = vsel %vm1051, %v1048, %v1050
        %v1056 = vadd.f32 %v927, %v1052
        %v1057 = vadd.f32 %v928, %v1053
        %1058 = vset.pattern.permute.xlu0 74
        %1059 = vperm.xlu0 %1058, %v335
        %v1060 = vpop.permute.xlu0 %1059
        %1062 = vset.pattern.permute.xlu0 74
        %1063 = vperm.xlu0 %1062, %v336
        %v1064 = vpop.permute.xlu0 %1063
        %v1066 = vmul.f32 %v1060, %v449
        %v1067 = vmul.f32 %v1060, %v450
        %v1068 = vmul.f32 %v1064, %v451
        %v1069 = vmul.f32 %v1064, %v452
        %1074 = vrot.lane.b32.xlu0 %v1066, 118
        %v1075 = vpop.permute.xlu0 %1074
        %1076 = vrot.lane.b32.xlu0 %v1067, 118
        %v1077 = vpop.permute.xlu0 %1076
        %1078 = vrot.lane.b32.xlu0 %v1068, 118
        %v1079 = vpop.permute.xlu0 %1078
        %1080 = vrot.lane.b32.xlu0 %v1069, 118
        %v1081 = vpop.permute.xlu0 %1080
        %v1082 = vsel %vm1051, %v1075, %v1077
        %v1083 = vsel %vm1051, %v1079, %v1081
        %v1086 = vadd.f32 %v957, %v1082
        %v1087 = vadd.f32 %v958, %v1083
        %1088 = vset.pattern.permute.xlu0 11
        %1089 = vperm.xlu0 %1088, %v335
        %v1090 = vpop.permute.xlu0 %1089
        %1092 = vset.pattern.permute.xlu0 11
        %1093 = vperm.xlu0 %1092, %v336
        %v1094 = vpop.permute.xlu0 %1093
        %v1096 = vmul.f32 %v1090, %v449
        %v1097 = vmul.f32 %v1090, %v450
        %v1098 = vmul.f32 %v1094, %v451
        %v1099 = vmul.f32 %v1094, %v452
        %1104 = vrot.lane.b32.xlu0 %v1096, 118
        %v1105 = vpop.permute.xlu0 %1104
        %1106 = vrot.lane.b32.xlu0 %v1097, 118
        %v1107 = vpop.permute.xlu0 %1106
        %1108 = vrot.lane.b32.xlu0 %v1098, 118
        %v1109 = vpop.permute.xlu0 %1108
        %1110 = vrot.lane.b32.xlu0 %v1099, 118
        %v1111 = vpop.permute.xlu0 %1110
        %v1112 = vsel %vm1051, %v1105, %v1107
        %v1113 = vsel %vm1051, %v1109, %v1111
        %v1118 = vadd.f32 %v989, %v1112
        %v1119 = vadd.f32 %v990, %v1107
        %v1120 = vadd.f32 %v991, %v1113
        %v1121 = vadd.f32 %v992, %v1111
        %1122 = vset.pattern.permute.xlu0 75
        %1123 = vperm.xlu0 %1122, %v335
        %v1124 = vpop.permute.xlu0 %1123
        %1126 = vset.pattern.permute.xlu0 75
        %1127 = vperm.xlu0 %1126, %v336
        %v1128 = vpop.permute.xlu0 %1127
        %v1130 = vmul.f32 %v1124, %v449
        %v1131 = vmul.f32 %v1124, %v450
        %v1132 = vmul.f32 %v1128, %v451
        %v1133 = vmul.f32 %v1128, %v452
        %1138 = vrot.lane.b32.xlu0 %v1130, 118
        %v1139 = vpop.permute.xlu0 %1138
        %1140 = vrot.lane.b32.xlu0 %v1131, 118
        %v1141 = vpop.permute.xlu0 %1140
        %1142 = vrot.lane.b32.xlu0 %v1132, 118
        %v1143 = vpop.permute.xlu0 %1142
        %1144 = vrot.lane.b32.xlu0 %v1133, 118
        %v1145 = vpop.permute.xlu0 %1144
        %v1146 = vsel %vm1051, %v1139, %v1141
        %v1147 = vsel %vm1051, %v1143, %v1145
        %v1152 = vadd.f32 %v1023, %v1146
        %v1153 = vadd.f32 %v1024, %v1141
        %v1154 = vadd.f32 %v1025, %v1147
        %v1155 = vadd.f32 %v1026, %v1145
        %1156 = vset.pattern.permute.xlu0 12
        %1157 = vperm.xlu0 %1156, %v335
        %v1158 = vpop.permute.xlu0 %1157
        %1160 = vset.pattern.permute.xlu0 12
        %1161 = vperm.xlu0 %1160, %v336
        %v1162 = vpop.permute.xlu0 %1161
        %v1164 = vmul.f32 %v1158, %v449
        %v1165 = vmul.f32 %v1158, %v450
        %v1166 = vmul.f32 %v1162, %v451
        %v1167 = vmul.f32 %v1162, %v452
        %1172 = vrot.lane.b32.xlu0 %v1164, 116
        %v1173 = vpop.permute.xlu0 %1172
        %1174 = vrot.lane.b32.xlu0 %v1165, 116
        %v1175 = vpop.permute.xlu0 %1174
        %1176 = vrot.lane.b32.xlu0 %v1166, 116
        %v1177 = vpop.permute.xlu0 %1176
        %1178 = vrot.lane.b32.xlu0 %v1167, 116
        %v1179 = vpop.permute.xlu0 %1178
        %vm1180 = vcmask 949248
        %v1181 = vsel %vm1180, %v1173, %v1175
        %v1182 = vsel %vm1180, %v1177, %v1179
        %v1185 = vadd.f32 %v1056, %v1181
        %v1186 = vadd.f32 %v1057, %v1182
        %1187 = vset.pattern.permute.xlu0 76
        %1188 = vperm.xlu0 %1187, %v335
        %v1189 = vpop.permute.xlu0 %1188
        %1191 = vset.pattern.permute.xlu0 76
        %1192 = vperm.xlu0 %1191, %v336
        %v1193 = vpop.permute.xlu0 %1192
        %v1195 = vmul.f32 %v1189, %v449
        %v1196 = vmul.f32 %v1189, %v450
        %v1197 = vmul.f32 %v1193, %v451
        %v1198 = vmul.f32 %v1193, %v452
        %1203 = vrot.lane.b32.xlu0 %v1195, 116
        %v1204 = vpop.permute.xlu0 %1203
        %1205 = vrot.lane.b32.xlu0 %v1196, 116
        %v1206 = vpop.permute.xlu0 %1205
        %1207 = vrot.lane.b32.xlu0 %v1197, 116
        %v1208 = vpop.permute.xlu0 %1207
        %1209 = vrot.lane.b32.xlu0 %v1198, 116
        %v1210 = vpop.permute.xlu0 %1209
        %v1211 = vsel %vm1180, %v1204, %v1206
        %v1212 = vsel %vm1180, %v1208, %v1210
        %v1215 = vadd.f32 %v1086, %v1211
        %v1216 = vadd.f32 %v1087, %v1212
        %1217 = vset.pattern.permute.xlu0 13
        %1218 = vperm.xlu0 %1217, %v335
        %v1219 = vpop.permute.xlu0 %1218
        %1221 = vset.pattern.permute.xlu0 13
        %1222 = vperm.xlu0 %1221, %v336
        %v1223 = vpop.permute.xlu0 %1222
        %v1225 = vmul.f32 %v1219, %v449
        %v1226 = vmul.f32 %v1219, %v450
        %v1227 = vmul.f32 %v1223, %v451
        %v1228 = vmul.f32 %v1223, %v452
        %1233 = vrot.lane.b32.xlu0 %v1225, 116
        %v1234 = vpop.permute.xlu0 %1233
        %1235 = vrot.lane.b32.xlu0 %v1226, 116
        %v1236 = vpop.permute.xlu0 %1235
        %1237 = vrot.lane.b32.xlu0 %v1227, 116
        %v1238 = vpop.permute.xlu0 %1237
        %1239 = vrot.lane.b32.xlu0 %v1228, 116
        %v1240 = vpop.permute.xlu0 %1239
        %v1241 = vsel %vm1180, %v1234, %v1236
        %v1242 = vsel %vm1180, %v1238, %v1240
        %v1247 = vadd.f32 %v1118, %v1241
        %v1248 = vadd.f32 %v1119, %v1236
        %v1249 = vadd.f32 %v1120, %v1242
        %v1250 = vadd.f32 %v1121, %v1240
        %1251 = vset.pattern.permute.xlu0 77
        %1252 = vperm.xlu0 %1251, %v335
        %v1253 = vpop.permute.xlu0 %1252
        %1255 = vset.pattern.permute.xlu0 77
        %1256 = vperm.xlu0 %1255, %v336
        %v1257 = vpop.permute.xlu0 %1256
        %v1259 = vmul.f32 %v1253, %v449
        %v1260 = vmul.f32 %v1253, %v450
        %v1261 = vmul.f32 %v1257, %v451
        %v1262 = vmul.f32 %v1257, %v452
        %1267 = vrot.lane.b32.xlu0 %v1259, 116
        %v1268 = vpop.permute.xlu0 %1267
        %1269 = vrot.lane.b32.xlu0 %v1260, 116
        %v1270 = vpop.permute.xlu0 %1269
        %1271 = vrot.lane.b32.xlu0 %v1261, 116
        %v1272 = vpop.permute.xlu0 %1271
        %1273 = vrot.lane.b32.xlu0 %v1262, 116
        %v1274 = vpop.permute.xlu0 %1273
        %v1275 = vsel %vm1180, %v1268, %v1270
        %v1276 = vsel %vm1180, %v1272, %v1274
        %v1281 = vadd.f32 %v1152, %v1275
        %v1282 = vadd.f32 %v1153, %v1270
        %v1283 = vadd.f32 %v1154, %v1276
        %v1284 = vadd.f32 %v1155, %v1274
        %1285 = vset.pattern.permute.xlu0 14
        %1286 = vperm.xlu0 %1285, %v335
        %v1287 = vpop.permute.xlu0 %1286
        %1289 = vset.pattern.permute.xlu0 14
        %1290 = vperm.xlu0 %1289, %v336
        %v1291 = vpop.permute.xlu0 %1290
        %v1293 = vmul.f32 %v1287, %v449
        %v1294 = vmul.f32 %v1287, %v450
        %v1295 = vmul.f32 %v1291, %v451
        %v1296 = vmul.f32 %v1291, %v452
        %1301 = vrot.lane.b32.xlu0 %v1293, 114
        %v1302 = vpop.permute.xlu0 %1301
        %1303 = vrot.lane.b32.xlu0 %v1294, 114
        %v1304 = vpop.permute.xlu0 %1303
        %1305 = vrot.lane.b32.xlu0 %v1295, 114
        %v1306 = vpop.permute.xlu0 %1305
        %1307 = vrot.lane.b32.xlu0 %v1296, 114
        %v1308 = vpop.permute.xlu0 %1307
        %vm1309 = vcmask 932864
        %v1310 = vsel %vm1309, %v1302, %v1304
        %v1311 = vsel %vm1309, %v1306, %v1308
        %v1314 = vadd.f32 %v1185, %v1310
        %v1315 = vadd.f32 %v1186, %v1311
        %1316 = vset.pattern.permute.xlu0 78
        %1317 = vperm.xlu0 %1316, %v335
        %v1318 = vpop.permute.xlu0 %1317
        %1320 = vset.pattern.permute.xlu0 78
        %1321 = vperm.xlu0 %1320, %v336
        %v1322 = vpop.permute.xlu0 %1321
        %v1324 = vmul.f32 %v1318, %v449
        %v1325 = vmul.f32 %v1318, %v450
        %v1326 = vmul.f32 %v1322, %v451
        %v1327 = vmul.f32 %v1322, %v452
        %1332 = vrot.lane.b32.xlu0 %v1324, 114
        %v1333 = vpop.permute.xlu0 %1332
        %1334 = vrot.lane.b32.xlu0 %v1325, 114
        %v1335 = vpop.permute.xlu0 %1334
        %1336 = vrot.lane.b32.xlu0 %v1326, 114
        %v1337 = vpop.permute.xlu0 %1336
        %1338 = vrot.lane.b32.xlu0 %v1327, 114
        %v1339 = vpop.permute.xlu0 %1338
        %v1340 = vsel %vm1309, %v1333, %v1335
        %v1341 = vsel %vm1309, %v1337, %v1339
        %v1344 = vadd.f32 %v1215, %v1340
        %v1345 = vadd.f32 %v1216, %v1341
        %1346 = vset.pattern.permute.xlu0 15
        %1347 = vperm.xlu0 %1346, %v335
        %v1348 = vpop.permute.xlu0 %1347
        %1350 = vset.pattern.permute.xlu0 15
        %1351 = vperm.xlu0 %1350, %v336
        %v1352 = vpop.permute.xlu0 %1351
        %v1354 = vmul.f32 %v1348, %v449
        %v1355 = vmul.f32 %v1348, %v450
        %v1356 = vmul.f32 %v1352, %v451
        %v1357 = vmul.f32 %v1352, %v452
        %1362 = vrot.lane.b32.xlu0 %v1354, 114
        %v1363 = vpop.permute.xlu0 %1362
        %1364 = vrot.lane.b32.xlu0 %v1355, 114
        %v1365 = vpop.permute.xlu0 %1364
        %1366 = vrot.lane.b32.xlu0 %v1356, 114
        %v1367 = vpop.permute.xlu0 %1366
        %1368 = vrot.lane.b32.xlu0 %v1357, 114
        %v1369 = vpop.permute.xlu0 %1368
        %v1370 = vsel %vm1309, %v1363, %v1365
        %v1371 = vsel %vm1309, %v1367, %v1369
        %v1376 = vadd.f32 %v1247, %v1370
        %v1377 = vadd.f32 %v1248, %v1365
        %v1378 = vadd.f32 %v1249, %v1371
        %v1379 = vadd.f32 %v1250, %v1369
        %1380 = vset.pattern.permute.xlu0 79
        %1381 = vperm.xlu0 %1380, %v335
        %v1382 = vpop.permute.xlu0 %1381
        %1384 = vset.pattern.permute.xlu0 79
        %1385 = vperm.xlu0 %1384, %v336
        %v1386 = vpop.permute.xlu0 %1385
        %v1388 = vmul.f32 %v1382, %v449
        %v1389 = vmul.f32 %v1382, %v450
        %v1390 = vmul.f32 %v1386, %v451
        %v1391 = vmul.f32 %v1386, %v452
        %1396 = vrot.lane.b32.xlu0 %v1388, 114
        %v1397 = vpop.permute.xlu0 %1396
        %1398 = vrot.lane.b32.xlu0 %v1389, 114
        %v1399 = vpop.permute.xlu0 %1398
        %1400 = vrot.lane.b32.xlu0 %v1390, 114
        %v1401 = vpop.permute.xlu0 %1400
        %1402 = vrot.lane.b32.xlu0 %v1391, 114
        %v1403 = vpop.permute.xlu0 %1402
        %v1404 = vsel %vm1309, %v1397, %v1399
        %v1405 = vsel %vm1309, %v1401, %v1403
        %v1410 = vadd.f32 %v1281, %v1404
        %v1411 = vadd.f32 %v1282, %v1399
        %v1412 = vadd.f32 %v1283, %v1405
        %v1413 = vadd.f32 %v1284, %v1403
        %1414 = vset.pattern.permute.xlu0 16
        %1415 = vperm.xlu0 %1414, %v335
        %v1416 = vpop.permute.xlu0 %1415
        %1418 = vset.pattern.permute.xlu0 16
        %1419 = vperm.xlu0 %1418, %v336
        %v1420 = vpop.permute.xlu0 %1419
        %v1422 = vmul.f32 %v1416, %v449
        %v1423 = vmul.f32 %v1416, %v450
        %v1424 = vmul.f32 %v1420, %v451
        %v1425 = vmul.f32 %v1420, %v452
        %1430 = vrot.lane.b32.xlu0 %v1422, 112
        %v1431 = vpop.permute.xlu0 %1430
        %1432 = vrot.lane.b32.xlu0 %v1423, 112
        %v1433 = vpop.permute.xlu0 %1432
        %1434 = vrot.lane.b32.xlu0 %v1424, 112
        %v1435 = vpop.permute.xlu0 %1434
        %1436 = vrot.lane.b32.xlu0 %v1425, 112
        %v1437 = vpop.permute.xlu0 %1436
        %vm1438 = vcmask 916480
        %v1439 = vsel %vm1438, %v1431, %v1433
        %v1440 = vsel %vm1438, %v1435, %v1437
        %v1443 = vadd.f32 %v1314, %v1439
        %v1444 = vadd.f32 %v1315, %v1440
        %1445 = vset.pattern.permute.xlu0 80
        %1446 = vperm.xlu0 %1445, %v335
        %v1447 = vpop.permute.xlu0 %1446
        %1449 = vset.pattern.permute.xlu0 80
        %1450 = vperm.xlu0 %1449, %v336
        %v1451 = vpop.permute.xlu0 %1450
        %v1453 = vmul.f32 %v1447, %v449
        %v1454 = vmul.f32 %v1447, %v450
        %v1455 = vmul.f32 %v1451, %v451
        %v1456 = vmul.f32 %v1451, %v452
        %1461 = vrot.lane.b32.xlu0 %v1453, 112
        %v1462 = vpop.permute.xlu0 %1461
        %1463 = vrot.lane.b32.xlu0 %v1454, 112
        %v1464 = vpop.permute.xlu0 %1463
        %1465 = vrot.lane.b32.xlu0 %v1455, 112
        %v1466 = vpop.permute.xlu0 %1465
        %1467 = vrot.lane.b32.xlu0 %v1456, 112
        %v1468 = vpop.permute.xlu0 %1467
        %v1469 = vsel %vm1438, %v1462, %v1464
        %v1470 = vsel %vm1438, %v1466, %v1468
        %v1473 = vadd.f32 %v1344, %v1469
        %v1474 = vadd.f32 %v1345, %v1470
        %1475 = vset.pattern.permute.xlu0 17
        %1476 = vperm.xlu0 %1475, %v335
        %v1477 = vpop.permute.xlu0 %1476
        %1479 = vset.pattern.permute.xlu0 17
        %1480 = vperm.xlu0 %1479, %v336
        %v1481 = vpop.permute.xlu0 %1480
        %v1483 = vmul.f32 %v1477, %v449
        %v1484 = vmul.f32 %v1477, %v450
        %v1485 = vmul.f32 %v1481, %v451
        %v1486 = vmul.f32 %v1481, %v452
        %1491 = vrot.lane.b32.xlu0 %v1483, 112
        %v1492 = vpop.permute.xlu0 %1491
        %1493 = vrot.lane.b32.xlu0 %v1484, 112
        %v1494 = vpop.permute.xlu0 %1493
        %1495 = vrot.lane.b32.xlu0 %v1485, 112
        %v1496 = vpop.permute.xlu0 %1495
        %1497 = vrot.lane.b32.xlu0 %v1486, 112
        %v1498 = vpop.permute.xlu0 %1497
        %v1499 = vsel %vm1438, %v1492, %v1494
        %v1500 = vsel %vm1438, %v1496, %v1498
        %v1505 = vadd.f32 %v1376, %v1499
        %v1506 = vadd.f32 %v1377, %v1494
        %v1507 = vadd.f32 %v1378, %v1500
        %v1508 = vadd.f32 %v1379, %v1498
        %1509 = vset.pattern.permute.xlu0 81
        %1510 = vperm.xlu0 %1509, %v335
        %v1511 = vpop.permute.xlu0 %1510
        %1513 = vset.pattern.permute.xlu0 81
        %1514 = vperm.xlu0 %1513, %v336
        %v1515 = vpop.permute.xlu0 %1514
        %v1517 = vmul.f32 %v1511, %v449
        %v1518 = vmul.f32 %v1511, %v450
        %v1519 = vmul.f32 %v1515, %v451
        %v1520 = vmul.f32 %v1515, %v452
        %1525 = vrot.lane.b32.xlu0 %v1517, 112
        %v1526 = vpop.permute.xlu0 %1525
        %1527 = vrot.lane.b32.xlu0 %v1518, 112
        %v1528 = vpop.permute.xlu0 %1527
        %1529 = vrot.lane.b32.xlu0 %v1519, 112
        %v1530 = vpop.permute.xlu0 %1529
        %1531 = vrot.lane.b32.xlu0 %v1520, 112
        %v1532 = vpop.permute.xlu0 %1531
        %v1533 = vsel %vm1438, %v1526, %v1528
        %v1534 = vsel %vm1438, %v1530, %v1532
        %v1539 = vadd.f32 %v1410, %v1533
        %v1540 = vadd.f32 %v1411, %v1528
        %v1541 = vadd.f32 %v1412, %v1534
        %v1542 = vadd.f32 %v1413, %v1532
        %1543 = vset.pattern.permute.xlu0 18
        %1544 = vperm.xlu0 %1543, %v335
        %v1545 = vpop.permute.xlu0 %1544
        %1547 = vset.pattern.permute.xlu0 18
        %1548 = vperm.xlu0 %1547, %v336
        %v1549 = vpop.permute.xlu0 %1548
        %v1551 = vmul.f32 %v1545, %v449
        %v1552 = vmul.f32 %v1545, %v450
        %v1553 = vmul.f32 %v1549, %v451
        %v1554 = vmul.f32 %v1549, %v452
        %1559 = vrot.lane.b32.xlu0 %v1551, 110
        %v1560 = vpop.permute.xlu0 %1559
        %1561 = vrot.lane.b32.xlu0 %v1552, 110
        %v1562 = vpop.permute.xlu0 %1561
        %1563 = vrot.lane.b32.xlu0 %v1553, 110
        %v1564 = vpop.permute.xlu0 %1563
        %1565 = vrot.lane.b32.xlu0 %v1554, 110
        %v1566 = vpop.permute.xlu0 %1565
        %vm1567 = vcmask 900096
        %v1568 = vsel %vm1567, %v1560, %v1562
        %v1569 = vsel %vm1567, %v1564, %v1566
        %v1572 = vadd.f32 %v1443, %v1568
        %v1573 = vadd.f32 %v1444, %v1569
        %1574 = vset.pattern.permute.xlu0 82
        %1575 = vperm.xlu0 %1574, %v335
        %v1576 = vpop.permute.xlu0 %1575
        %1578 = vset.pattern.permute.xlu0 82
        %1579 = vperm.xlu0 %1578, %v336
        %v1580 = vpop.permute.xlu0 %1579
        %v1582 = vmul.f32 %v1576, %v449
        %v1583 = vmul.f32 %v1576, %v450
        %v1584 = vmul.f32 %v1580, %v451
        %v1585 = vmul.f32 %v1580, %v452
        %1590 = vrot.lane.b32.xlu0 %v1582, 110
        %v1591 = vpop.permute.xlu0 %1590
        %1592 = vrot.lane.b32.xlu0 %v1583, 110
        %v1593 = vpop.permute.xlu0 %1592
        %1594 = vrot.lane.b32.xlu0 %v1584, 110
        %v1595 = vpop.permute.xlu0 %1594
        %1596 = vrot.lane.b32.xlu0 %v1585, 110
        %v1597 = vpop.permute.xlu0 %1596
        %v1598 = vsel %vm1567, %v1591, %v1593
        %v1599 = vsel %vm1567, %v1595, %v1597
        %v1602 = vadd.f32 %v1473, %v1598
        %v1603 = vadd.f32 %v1474, %v1599
        %1604 = vset.pattern.permute.xlu0 19
        %1605 = vperm.xlu0 %1604, %v335
        %v1606 = vpop.permute.xlu0 %1605
        %1608 = vset.pattern.permute.xlu0 19
        %1609 = vperm.xlu0 %1608, %v336
        %v1610 = vpop.permute.xlu0 %1609
        %v1612 = vmul.f32 %v1606, %v449
        %v1613 = vmul.f32 %v1606, %v450
        %v1614 = vmul.f32 %v1610, %v451
        %v1615 = vmul.f32 %v1610, %v452
        %1620 = vrot.lane.b32.xlu0 %v1612, 110
        %v1621 = vpop.permute.xlu0 %1620
        %1622 = vrot.lane.b32.xlu0 %v1613, 110
        %v1623 = vpop.permute.xlu0 %1622
        %1624 = vrot.lane.b32.xlu0 %v1614, 110
        %v1625 = vpop.permute.xlu0 %1624
        %1626 = vrot.lane.b32.xlu0 %v1615, 110
        %v1627 = vpop.permute.xlu0 %1626
        %v1628 = vsel %vm1567, %v1621, %v1623
        %v1629 = vsel %vm1567, %v1625, %v1627
        %v1634 = vadd.f32 %v1505, %v1628
        %v1635 = vadd.f32 %v1506, %v1623
        %v1636 = vadd.f32 %v1507, %v1629
        %v1637 = vadd.f32 %v1508, %v1627
        %1638 = vset.pattern.permute.xlu0 83
        %1639 = vperm.xlu0 %1638, %v335
        %v1640 = vpop.permute.xlu0 %1639
        %1642 = vset.pattern.permute.xlu0 83
        %1643 = vperm.xlu0 %1642, %v336
        %v1644 = vpop.permute.xlu0 %1643
        %v1646 = vmul.f32 %v1640, %v449
        %v1647 = vmul.f32 %v1640, %v450
        %v1648 = vmul.f32 %v1644, %v451
        %v1649 = vmul.f32 %v1644, %v452
        %1654 = vrot.lane.b32.xlu0 %v1646, 110
        %v1655 = vpop.permute.xlu0 %1654
        %1656 = vrot.lane.b32.xlu0 %v1647, 110
        %v1657 = vpop.permute.xlu0 %1656
        %1658 = vrot.lane.b32.xlu0 %v1648, 110
        %v1659 = vpop.permute.xlu0 %1658
        %1660 = vrot.lane.b32.xlu0 %v1649, 110
        %v1661 = vpop.permute.xlu0 %1660
        %v1662 = vsel %vm1567, %v1655, %v1657
        %v1663 = vsel %vm1567, %v1659, %v1661
        %v1668 = vadd.f32 %v1539, %v1662
        %v1669 = vadd.f32 %v1540, %v1657
        %v1670 = vadd.f32 %v1541, %v1663
        %v1671 = vadd.f32 %v1542, %v1661
        %1672 = vset.pattern.permute.xlu0 20
        %1673 = vperm.xlu0 %1672, %v335
        %v1674 = vpop.permute.xlu0 %1673
        %1676 = vset.pattern.permute.xlu0 20
        %1677 = vperm.xlu0 %1676, %v336
        %v1678 = vpop.permute.xlu0 %1677
        %v1680 = vmul.f32 %v1674, %v449
        %v1681 = vmul.f32 %v1674, %v450
        %v1682 = vmul.f32 %v1678, %v451
        %v1683 = vmul.f32 %v1678, %v452
        %1688 = vrot.lane.b32.xlu0 %v1680, 108
        %v1689 = vpop.permute.xlu0 %1688
        %1690 = vrot.lane.b32.xlu0 %v1681, 108
        %v1691 = vpop.permute.xlu0 %1690
        %1692 = vrot.lane.b32.xlu0 %v1682, 108
        %v1693 = vpop.permute.xlu0 %1692
        %1694 = vrot.lane.b32.xlu0 %v1683, 108
        %v1695 = vpop.permute.xlu0 %1694
        %vm1696 = vcmask 883712
        %v1697 = vsel %vm1696, %v1689, %v1691
        %v1698 = vsel %vm1696, %v1693, %v1695
        %v1701 = vadd.f32 %v1572, %v1697
        %v1702 = vadd.f32 %v1573, %v1698
        %1703 = vset.pattern.permute.xlu0 84
        %1704 = vperm.xlu0 %1703, %v335
        %v1705 = vpop.permute.xlu0 %1704
        %1707 = vset.pattern.permute.xlu0 84
        %1708 = vperm.xlu0 %1707, %v336
        %v1709 = vpop.permute.xlu0 %1708
        %v1711 = vmul.f32 %v1705, %v449
        %v1712 = vmul.f32 %v1705, %v450
        %v1713 = vmul.f32 %v1709, %v451
        %v1714 = vmul.f32 %v1709, %v452
        %1719 = vrot.lane.b32.xlu0 %v1711, 108
        %v1720 = vpop.permute.xlu0 %1719
        %1721 = vrot.lane.b32.xlu0 %v1712, 108
        %v1722 = vpop.permute.xlu0 %1721
        %1723 = vrot.lane.b32.xlu0 %v1713, 108
        %v1724 = vpop.permute.xlu0 %1723
        %1725 = vrot.lane.b32.xlu0 %v1714, 108
        %v1726 = vpop.permute.xlu0 %1725
        %v1727 = vsel %vm1696, %v1720, %v1722
        %v1728 = vsel %vm1696, %v1724, %v1726
        %v1731 = vadd.f32 %v1602, %v1727
        %v1732 = vadd.f32 %v1603, %v1728
        %1733 = vset.pattern.permute.xlu0 21
        %1734 = vperm.xlu0 %1733, %v335
        %v1735 = vpop.permute.xlu0 %1734
        %1737 = vset.pattern.permute.xlu0 21
        %1738 = vperm.xlu0 %1737, %v336
        %v1739 = vpop.permute.xlu0 %1738
        %v1741 = vmul.f32 %v1735, %v449
        %v1742 = vmul.f32 %v1735, %v450
        %v1743 = vmul.f32 %v1739, %v451
        %v1744 = vmul.f32 %v1739, %v452
        %1749 = vrot.lane.b32.xlu0 %v1741, 108
        %v1750 = vpop.permute.xlu0 %1749
        %1751 = vrot.lane.b32.xlu0 %v1742, 108
        %v1752 = vpop.permute.xlu0 %1751
        %1753 = vrot.lane.b32.xlu0 %v1743, 108
        %v1754 = vpop.permute.xlu0 %1753
        %1755 = vrot.lane.b32.xlu0 %v1744, 108
        %v1756 = vpop.permute.xlu0 %1755
        %v1757 = vsel %vm1696, %v1750, %v1752
        %v1758 = vsel %vm1696, %v1754, %v1756
        %v1763 = vadd.f32 %v1634, %v1757
        %v1764 = vadd.f32 %v1635, %v1752
        %v1765 = vadd.f32 %v1636, %v1758
        %v1766 = vadd.f32 %v1637, %v1756
        %1767 = vset.pattern.permute.xlu0 85
        %1768 = vperm.xlu0 %1767, %v335
        %v1769 = vpop.permute.xlu0 %1768
        %1771 = vset.pattern.permute.xlu0 85
        %1772 = vperm.xlu0 %1771, %v336
        %v1773 = vpop.permute.xlu0 %1772
        %v1775 = vmul.f32 %v1769, %v449
        %v1776 = vmul.f32 %v1769, %v450
        %v1777 = vmul.f32 %v1773, %v451
        %v1778 = vmul.f32 %v1773, %v452
        %1783 = vrot.lane.b32.xlu0 %v1775, 108
        %v1784 = vpop.permute.xlu0 %1783
        %1785 = vrot.lane.b32.xlu0 %v1776, 108
        %v1786 = vpop.permute.xlu0 %1785
        %1787 = vrot.lane.b32.xlu0 %v1777, 108
        %v1788 = vpop.permute.xlu0 %1787
        %1789 = vrot.lane.b32.xlu0 %v1778, 108
        %v1790 = vpop.permute.xlu0 %1789
        %v1791 = vsel %vm1696, %v1784, %v1786
        %v1792 = vsel %vm1696, %v1788, %v1790
        %v1797 = vadd.f32 %v1668, %v1791
        %v1798 = vadd.f32 %v1669, %v1786
        %v1799 = vadd.f32 %v1670, %v1792
        %v1800 = vadd.f32 %v1671, %v1790
        %1801 = vset.pattern.permute.xlu0 22
        %1802 = vperm.xlu0 %1801, %v335
        %v1803 = vpop.permute.xlu0 %1802
        %1805 = vset.pattern.permute.xlu0 22
        %1806 = vperm.xlu0 %1805, %v336
        %v1807 = vpop.permute.xlu0 %1806
        %v1809 = vmul.f32 %v1803, %v449
        %v1810 = vmul.f32 %v1803, %v450
        %v1811 = vmul.f32 %v1807, %v451
        %v1812 = vmul.f32 %v1807, %v452
        %1817 = vrot.lane.b32.xlu0 %v1809, 106
        %v1818 = vpop.permute.xlu0 %1817
        %1819 = vrot.lane.b32.xlu0 %v1810, 106
        %v1820 = vpop.permute.xlu0 %1819
        %1821 = vrot.lane.b32.xlu0 %v1811, 106
        %v1822 = vpop.permute.xlu0 %1821
        %1823 = vrot.lane.b32.xlu0 %v1812, 106
        %v1824 = vpop.permute.xlu0 %1823
        %vm1825 = vcmask 867328
        %v1826 = vsel %vm1825, %v1818, %v1820
        %v1827 = vsel %vm1825, %v1822, %v1824
        %v1830 = vadd.f32 %v1701, %v1826
        %v1831 = vadd.f32 %v1702, %v1827
        %1832 = vset.pattern.permute.xlu0 86
        %1833 = vperm.xlu0 %1832, %v335
        %v1834 = vpop.permute.xlu0 %1833
        %1836 = vset.pattern.permute.xlu0 86
        %1837 = vperm.xlu0 %1836, %v336
        %v1838 = vpop.permute.xlu0 %1837
        %v1840 = vmul.f32 %v1834, %v449
        %v1841 = vmul.f32 %v1834, %v450
        %v1842 = vmul.f32 %v1838, %v451
        %v1843 = vmul.f32 %v1838, %v452
        %1848 = vrot.lane.b32.xlu0 %v1840, 106
        %v1849 = vpop.permute.xlu0 %1848
        %1850 = vrot.lane.b32.xlu0 %v1841, 106
        %v1851 = vpop.permute.xlu0 %1850
        %1852 = vrot.lane.b32.xlu0 %v1842, 106
        %v1853 = vpop.permute.xlu0 %1852
        %1854 = vrot.lane.b32.xlu0 %v1843, 106
        %v1855 = vpop.permute.xlu0 %1854
        %v1856 = vsel %vm1825, %v1849, %v1851
        %v1857 = vsel %vm1825, %v1853, %v1855
        %v1860 = vadd.f32 %v1731, %v1856
        %v1861 = vadd.f32 %v1732, %v1857
        %1862 = vset.pattern.permute.xlu0 23
        %1863 = vperm.xlu0 %1862, %v335
        %v1864 = vpop.permute.xlu0 %1863
        %1866 = vset.pattern.permute.xlu0 23
        %1867 = vperm.xlu0 %1866, %v336
        %v1868 = vpop.permute.xlu0 %1867
        %v1870 = vmul.f32 %v1864, %v449
        %v1871 = vmul.f32 %v1864, %v450
        %v1872 = vmul.f32 %v1868, %v451
        %v1873 = vmul.f32 %v1868, %v452
        %1878 = vrot.lane.b32.xlu0 %v1870, 106
        %v1879 = vpop.permute.xlu0 %1878
        %1880 = vrot.lane.b32.xlu0 %v1871, 106
        %v1881 = vpop.permute.xlu0 %1880
        %1882 = vrot.lane.b32.xlu0 %v1872, 106
        %v1883 = vpop.permute.xlu0 %1882
        %1884 = vrot.lane.b32.xlu0 %v1873, 106
        %v1885 = vpop.permute.xlu0 %1884
        %v1886 = vsel %vm1825, %v1879, %v1881
        %v1887 = vsel %vm1825, %v1883, %v1885
        %v1892 = vadd.f32 %v1763, %v1886
        %v1893 = vadd.f32 %v1764, %v1881
        %v1894 = vadd.f32 %v1765, %v1887
        %v1895 = vadd.f32 %v1766, %v1885
        %1896 = vset.pattern.permute.xlu0 87
        %1897 = vperm.xlu0 %1896, %v335
        %v1898 = vpop.permute.xlu0 %1897
        %1900 = vset.pattern.permute.xlu0 87
        %1901 = vperm.xlu0 %1900, %v336
        %v1902 = vpop.permute.xlu0 %1901
        %v1904 = vmul.f32 %v1898, %v449
        %v1905 = vmul.f32 %v1898, %v450
        %v1906 = vmul.f32 %v1902, %v451
        %v1907 = vmul.f32 %v1902, %v452
        %1912 = vrot.lane.b32.xlu0 %v1904, 106
        %v1913 = vpop.permute.xlu0 %1912
        %1914 = vrot.lane.b32.xlu0 %v1905, 106
        %v1915 = vpop.permute.xlu0 %1914
        %1916 = vrot.lane.b32.xlu0 %v1906, 106
        %v1917 = vpop.permute.xlu0 %1916
        %1918 = vrot.lane.b32.xlu0 %v1907, 106
        %v1919 = vpop.permute.xlu0 %1918
        %v1920 = vsel %vm1825, %v1913, %v1915
        %v1921 = vsel %vm1825, %v1917, %v1919
        %v1926 = vadd.f32 %v1797, %v1920
        %v1927 = vadd.f32 %v1798, %v1915
        %v1928 = vadd.f32 %v1799, %v1921
        %v1929 = vadd.f32 %v1800, %v1919
        %1930 = vset.pattern.permute.xlu0 24
        %1931 = vperm.xlu0 %1930, %v335
        %v1932 = vpop.permute.xlu0 %1931
        %1934 = vset.pattern.permute.xlu0 24
        %1935 = vperm.xlu0 %1934, %v336
        %v1936 = vpop.permute.xlu0 %1935
        %v1938 = vmul.f32 %v1932, %v449
        %v1939 = vmul.f32 %v1932, %v450
        %v1940 = vmul.f32 %v1936, %v451
        %v1941 = vmul.f32 %v1936, %v452
        %1946 = vrot.lane.b32.xlu0 %v1938, 104
        %v1947 = vpop.permute.xlu0 %1946
        %1948 = vrot.lane.b32.xlu0 %v1939, 104
        %v1949 = vpop.permute.xlu0 %1948
        %1950 = vrot.lane.b32.xlu0 %v1940, 104
        %v1951 = vpop.permute.xlu0 %1950
        %1952 = vrot.lane.b32.xlu0 %v1941, 104
        %v1953 = vpop.permute.xlu0 %1952
        %vm1954 = vcmask 850944
        %v1955 = vsel %vm1954, %v1947, %v1949
        %v1956 = vsel %vm1954, %v1951, %v1953
        %v1959 = vadd.f32 %v1830, %v1955
        %v1960 = vadd.f32 %v1831, %v1956
        %1961 = vset.pattern.permute.xlu0 88
        %1962 = vperm.xlu0 %1961, %v335
        %v1963 = vpop.permute.xlu0 %1962
        %1965 = vset.pattern.permute.xlu0 88
        %1966 = vperm.xlu0 %1965, %v336
        %v1967 = vpop.permute.xlu0 %1966
        %v1969 = vmul.f32 %v1963, %v449
        %v1970 = vmul.f32 %v1963, %v450
        %v1971 = vmul.f32 %v1967, %v451
        %v1972 = vmul.f32 %v1967, %v452
        %1977 = vrot.lane.b32.xlu0 %v1969, 104
        %v1978 = vpop.permute.xlu0 %1977
        %1979 = vrot.lane.b32.xlu0 %v1970, 104
        %v1980 = vpop.permute.xlu0 %1979
        %1981 = vrot.lane.b32.xlu0 %v1971, 104
        %v1982 = vpop.permute.xlu0 %1981
        %1983 = vrot.lane.b32.xlu0 %v1972, 104
        %v1984 = vpop.permute.xlu0 %1983
        %v1985 = vsel %vm1954, %v1978, %v1980
        %v1986 = vsel %vm1954, %v1982, %v1984
        %v1989 = vadd.f32 %v1860, %v1985
        %v1990 = vadd.f32 %v1861, %v1986
        %1991 = vset.pattern.permute.xlu0 25
        %1992 = vperm.xlu0 %1991, %v335
        %v1993 = vpop.permute.xlu0 %1992
        %1995 = vset.pattern.permute.xlu0 25
        %1996 = vperm.xlu0 %1995, %v336
        %v1997 = vpop.permute.xlu0 %1996
        %v1999 = vmul.f32 %v1993, %v449
        %v2000 = vmul.f32 %v1993, %v450
        %v2001 = vmul.f32 %v1997, %v451
        %v2002 = vmul.f32 %v1997, %v452
        %2007 = vrot.lane.b32.xlu0 %v1999, 104
        %v2008 = vpop.permute.xlu0 %2007
        %2009 = vrot.lane.b32.xlu0 %v2000, 104
        %v2010 = vpop.permute.xlu0 %2009
        %2011 = vrot.lane.b32.xlu0 %v2001, 104
        %v2012 = vpop.permute.xlu0 %2011
        %2013 = vrot.lane.b32.xlu0 %v2002, 104
        %v2014 = vpop.permute.xlu0 %2013
        %v2015 = vsel %vm1954, %v2008, %v2010
        %v2016 = vsel %vm1954, %v2012, %v2014
        %v2021 = vadd.f32 %v1892, %v2015
        %v2022 = vadd.f32 %v1893, %v2010
        %v2023 = vadd.f32 %v1894, %v2016
        %v2024 = vadd.f32 %v1895, %v2014
        %2025 = vset.pattern.permute.xlu0 89
        %2026 = vperm.xlu0 %2025, %v335
        %v2027 = vpop.permute.xlu0 %2026
        %2029 = vset.pattern.permute.xlu0 89
        %2030 = vperm.xlu0 %2029, %v336
        %v2031 = vpop.permute.xlu0 %2030
        %v2033 = vmul.f32 %v2027, %v449
        %v2034 = vmul.f32 %v2027, %v450
        %v2035 = vmul.f32 %v2031, %v451
        %v2036 = vmul.f32 %v2031, %v452
        %2041 = vrot.lane.b32.xlu0 %v2033, 104
        %v2042 = vpop.permute.xlu0 %2041
        %2043 = vrot.lane.b32.xlu0 %v2034, 104
        %v2044 = vpop.permute.xlu0 %2043
        %2045 = vrot.lane.b32.xlu0 %v2035, 104
        %v2046 = vpop.permute.xlu0 %2045
        %2047 = vrot.lane.b32.xlu0 %v2036, 104
        %v2048 = vpop.permute.xlu0 %2047
        %v2049 = vsel %vm1954, %v2042, %v2044
        %v2050 = vsel %vm1954, %v2046, %v2048
        %v2055 = vadd.f32 %v1926, %v2049
        %v2056 = vadd.f32 %v1927, %v2044
        %v2057 = vadd.f32 %v1928, %v2050
        %v2058 = vadd.f32 %v1929, %v2048
        %2059 = vset.pattern.permute.xlu0 26
        %2060 = vperm.xlu0 %2059, %v335
        %v2061 = vpop.permute.xlu0 %2060
        %2063 = vset.pattern.permute.xlu0 26
        %2064 = vperm.xlu0 %2063, %v336
        %v2065 = vpop.permute.xlu0 %2064
        %v2067 = vmul.f32 %v2061, %v449
        %v2068 = vmul.f32 %v2061, %v450
        %v2069 = vmul.f32 %v2065, %v451
        %v2070 = vmul.f32 %v2065, %v452
        %2075 = vrot.lane.b32.xlu0 %v2067, 102
        %v2076 = vpop.permute.xlu0 %2075
        %2077 = vrot.lane.b32.xlu0 %v2068, 102
        %v2078 = vpop.permute.xlu0 %2077
        %2079 = vrot.lane.b32.xlu0 %v2069, 102
        %v2080 = vpop.permute.xlu0 %2079
        %2081 = vrot.lane.b32.xlu0 %v2070, 102
        %v2082 = vpop.permute.xlu0 %2081
        %vm2083 = vcmask 834560
        %v2084 = vsel %vm2083, %v2076, %v2078
        %v2085 = vsel %vm2083, %v2080, %v2082
        %v2088 = vadd.f32 %v1959, %v2084
        %v2089 = vadd.f32 %v1960, %v2085
        %2090 = vset.pattern.permute.xlu0 90
        %2091 = vperm.xlu0 %2090, %v335
        %v2092 = vpop.permute.xlu0 %2091
        %2094 = vset.pattern.permute.xlu0 90
        %2095 = vperm.xlu0 %2094, %v336
        %v2096 = vpop.permute.xlu0 %2095
        %v2098 = vmul.f32 %v2092, %v449
        %v2099 = vmul.f32 %v2092, %v450
        %v2100 = vmul.f32 %v2096, %v451
        %v2101 = vmul.f32 %v2096, %v452
        %2106 = vrot.lane.b32.xlu0 %v2098, 102
        %v2107 = vpop.permute.xlu0 %2106
        %2108 = vrot.lane.b32.xlu0 %v2099, 102
        %v2109 = vpop.permute.xlu0 %2108
        %2110 = vrot.lane.b32.xlu0 %v2100, 102
        %v2111 = vpop.permute.xlu0 %2110
        %2112 = vrot.lane.b32.xlu0 %v2101, 102
        %v2113 = vpop.permute.xlu0 %2112
        %v2114 = vsel %vm2083, %v2107, %v2109
        %v2115 = vsel %vm2083, %v2111, %v2113
        %v2118 = vadd.f32 %v1989, %v2114
        %v2119 = vadd.f32 %v1990, %v2115
        %2120 = vset.pattern.permute.xlu0 27
        %2121 = vperm.xlu0 %2120, %v335
        %v2122 = vpop.permute.xlu0 %2121
        %2124 = vset.pattern.permute.xlu0 27
        %2125 = vperm.xlu0 %2124, %v336
        %v2126 = vpop.permute.xlu0 %2125
        %v2128 = vmul.f32 %v2122, %v449
        %v2129 = vmul.f32 %v2122, %v450
        %v2130 = vmul.f32 %v2126, %v451
        %v2131 = vmul.f32 %v2126, %v452
        %2136 = vrot.lane.b32.xlu0 %v2128, 102
        %v2137 = vpop.permute.xlu0 %2136
        %2138 = vrot.lane.b32.xlu0 %v2129, 102
        %v2139 = vpop.permute.xlu0 %2138
        %2140 = vrot.lane.b32.xlu0 %v2130, 102
        %v2141 = vpop.permute.xlu0 %2140
        %2142 = vrot.lane.b32.xlu0 %v2131, 102
        %v2143 = vpop.permute.xlu0 %2142
        %v2144 = vsel %vm2083, %v2137, %v2139
        %v2145 = vsel %vm2083, %v2141, %v2143
        %v2150 = vadd.f32 %v2021, %v2144
        %v2151 = vadd.f32 %v2022, %v2139
        %v2152 = vadd.f32 %v2023, %v2145
        %v2153 = vadd.f32 %v2024, %v2143
        %2154 = vset.pattern.permute.xlu0 91
        %2155 = vperm.xlu0 %2154, %v335
        %v2156 = vpop.permute.xlu0 %2155
        %2158 = vset.pattern.permute.xlu0 91
        %2159 = vperm.xlu0 %2158, %v336
        %v2160 = vpop.permute.xlu0 %2159
        %v2162 = vmul.f32 %v2156, %v449
        %v2163 = vmul.f32 %v2156, %v450
        %v2164 = vmul.f32 %v2160, %v451
        %v2165 = vmul.f32 %v2160, %v452
        %2170 = vrot.lane.b32.xlu0 %v2162, 102
        %v2171 = vpop.permute.xlu0 %2170
        %2172 = vrot.lane.b32.xlu0 %v2163, 102
        %v2173 = vpop.permute.xlu0 %2172
        %2174 = vrot.lane.b32.xlu0 %v2164, 102
        %v2175 = vpop.permute.xlu0 %2174
        %2176 = vrot.lane.b32.xlu0 %v2165, 102
        %v2177 = vpop.permute.xlu0 %2176
        %v2178 = vsel %vm2083, %v2171, %v2173
        %v2179 = vsel %vm2083, %v2175, %v2177
        %v2184 = vadd.f32 %v2055, %v2178
        %v2185 = vadd.f32 %v2056, %v2173
        %v2186 = vadd.f32 %v2057, %v2179
        %v2187 = vadd.f32 %v2058, %v2177
        %2188 = vset.pattern.permute.xlu0 28
        %2189 = vperm.xlu0 %2188, %v335
        %v2190 = vpop.permute.xlu0 %2189
        %2192 = vset.pattern.permute.xlu0 28
        %2193 = vperm.xlu0 %2192, %v336
        %v2194 = vpop.permute.xlu0 %2193
        %v2196 = vmul.f32 %v2190, %v449
        %v2197 = vmul.f32 %v2190, %v450
        %v2198 = vmul.f32 %v2194, %v451
        %v2199 = vmul.f32 %v2194, %v452
        %2204 = vrot.lane.b32.xlu0 %v2196, 100
        %v2205 = vpop.permute.xlu0 %2204
        %2206 = vrot.lane.b32.xlu0 %v2197, 100
        %v2207 = vpop.permute.xlu0 %2206
        %2208 = vrot.lane.b32.xlu0 %v2198, 100
        %v2209 = vpop.permute.xlu0 %2208
        %2210 = vrot.lane.b32.xlu0 %v2199, 100
        %v2211 = vpop.permute.xlu0 %2210
        %vm2212 = vcmask 818176
        %v2213 = vsel %vm2212, %v2205, %v2207
        %v2214 = vsel %vm2212, %v2209, %v2211
        %v2217 = vadd.f32 %v2088, %v2213
        %v2218 = vadd.f32 %v2089, %v2214
        %2219 = vset.pattern.permute.xlu0 92
        %2220 = vperm.xlu0 %2219, %v335
        %v2221 = vpop.permute.xlu0 %2220
        %2223 = vset.pattern.permute.xlu0 92
        %2224 = vperm.xlu0 %2223, %v336
        %v2225 = vpop.permute.xlu0 %2224
        %v2227 = vmul.f32 %v2221, %v449
        %v2228 = vmul.f32 %v2221, %v450
        %v2229 = vmul.f32 %v2225, %v451
        %v2230 = vmul.f32 %v2225, %v452
        %2235 = vrot.lane.b32.xlu0 %v2227, 100
        %v2236 = vpop.permute.xlu0 %2235
        %2237 = vrot.lane.b32.xlu0 %v2228, 100
        %v2238 = vpop.permute.xlu0 %2237
        %2239 = vrot.lane.b32.xlu0 %v2229, 100
        %v2240 = vpop.permute.xlu0 %2239
        %2241 = vrot.lane.b32.xlu0 %v2230, 100
        %v2242 = vpop.permute.xlu0 %2241
        %v2243 = vsel %vm2212, %v2236, %v2238
        %v2244 = vsel %vm2212, %v2240, %v2242
        %v2247 = vadd.f32 %v2118, %v2243
        %v2248 = vadd.f32 %v2119, %v2244
        %2249 = vset.pattern.permute.xlu0 29
        %2250 = vperm.xlu0 %2249, %v335
        %v2251 = vpop.permute.xlu0 %2250
        %2253 = vset.pattern.permute.xlu0 29
        %2254 = vperm.xlu0 %2253, %v336
        %v2255 = vpop.permute.xlu0 %2254
        %v2257 = vmul.f32 %v2251, %v449
        %v2258 = vmul.f32 %v2251, %v450
        %v2259 = vmul.f32 %v2255, %v451
        %v2260 = vmul.f32 %v2255, %v452
        %2265 = vrot.lane.b32.xlu0 %v2257, 100
        %v2266 = vpop.permute.xlu0 %2265
        %2267 = vrot.lane.b32.xlu0 %v2258, 100
        %v2268 = vpop.permute.xlu0 %2267
        %2269 = vrot.lane.b32.xlu0 %v2259, 100
        %v2270 = vpop.permute.xlu0 %2269
        %2271 = vrot.lane.b32.xlu0 %v2260, 100
        %v2272 = vpop.permute.xlu0 %2271
        %v2273 = vsel %vm2212, %v2266, %v2268
        %v2274 = vsel %vm2212, %v2270, %v2272
        %v2279 = vadd.f32 %v2150, %v2273
        %v2280 = vadd.f32 %v2151, %v2268
        %v2281 = vadd.f32 %v2152, %v2274
        %v2282 = vadd.f32 %v2153, %v2272
        %2283 = vset.pattern.permute.xlu0 93
        %2284 = vperm.xlu0 %2283, %v335
        %v2285 = vpop.permute.xlu0 %2284
        %2287 = vset.pattern.permute.xlu0 93
        %2288 = vperm.xlu0 %2287, %v336
        %v2289 = vpop.permute.xlu0 %2288
        %v2291 = vmul.f32 %v2285, %v449
        %v2292 = vmul.f32 %v2285, %v450
        %v2293 = vmul.f32 %v2289, %v451
        %v2294 = vmul.f32 %v2289, %v452
        %2299 = vrot.lane.b32.xlu0 %v2291, 100
        %v2300 = vpop.permute.xlu0 %2299
        %2301 = vrot.lane.b32.xlu0 %v2292, 100
        %v2302 = vpop.permute.xlu0 %2301
        %2303 = vrot.lane.b32.xlu0 %v2293, 100
        %v2304 = vpop.permute.xlu0 %2303
        %2305 = vrot.lane.b32.xlu0 %v2294, 100
        %v2306 = vpop.permute.xlu0 %2305
        %v2307 = vsel %vm2212, %v2300, %v2302
        %v2308 = vsel %vm2212, %v2304, %v2306
        %v2313 = vadd.f32 %v2184, %v2307
        %v2314 = vadd.f32 %v2185, %v2302
        %v2315 = vadd.f32 %v2186, %v2308
        %v2316 = vadd.f32 %v2187, %v2306
        %2317 = vset.pattern.permute.xlu0 30
        %2318 = vperm.xlu0 %2317, %v335
        %v2319 = vpop.permute.xlu0 %2318
        %2321 = vset.pattern.permute.xlu0 30
        %2322 = vperm.xlu0 %2321, %v336
        %v2323 = vpop.permute.xlu0 %2322
        %v2325 = vmul.f32 %v2319, %v449
        %v2326 = vmul.f32 %v2319, %v450
        %v2327 = vmul.f32 %v2323, %v451
        %v2328 = vmul.f32 %v2323, %v452
        %2333 = vrot.lane.b32.xlu0 %v2325, 98
        %v2334 = vpop.permute.xlu0 %2333
        %2335 = vrot.lane.b32.xlu0 %v2326, 98
        %v2336 = vpop.permute.xlu0 %2335
        %2337 = vrot.lane.b32.xlu0 %v2327, 98
        %v2338 = vpop.permute.xlu0 %2337
        %2339 = vrot.lane.b32.xlu0 %v2328, 98
        %v2340 = vpop.permute.xlu0 %2339
        %vm2341 = vcmask 801792
        %v2342 = vsel %vm2341, %v2334, %v2336
        %v2343 = vsel %vm2341, %v2338, %v2340
        %v2346 = vadd.f32 %v2217, %v2342
        %v2347 = vadd.f32 %v2218, %v2343
        %2348 = vset.pattern.permute.xlu0 94
        %2349 = vperm.xlu0 %2348, %v335
        %v2350 = vpop.permute.xlu0 %2349
        %2352 = vset.pattern.permute.xlu0 94
        %2353 = vperm.xlu0 %2352, %v336
        %v2354 = vpop.permute.xlu0 %2353
        %v2356 = vmul.f32 %v2350, %v449
        %v2357 = vmul.f32 %v2350, %v450
        %v2358 = vmul.f32 %v2354, %v451
        %v2359 = vmul.f32 %v2354, %v452
        %2364 = vrot.lane.b32.xlu0 %v2356, 98
        %v2365 = vpop.permute.xlu0 %2364
        %2366 = vrot.lane.b32.xlu0 %v2357, 98
        %v2367 = vpop.permute.xlu0 %2366
        %2368 = vrot.lane.b32.xlu0 %v2358, 98
        %v2369 = vpop.permute.xlu0 %2368
        %2370 = vrot.lane.b32.xlu0 %v2359, 98
        %v2371 = vpop.permute.xlu0 %2370
        %v2372 = vsel %vm2341, %v2365, %v2367
        %v2373 = vsel %vm2341, %v2369, %v2371
        %v2376 = vadd.f32 %v2247, %v2372
        %v2377 = vadd.f32 %v2248, %v2373
        %2378 = vset.pattern.permute.xlu0 31
        %2379 = vperm.xlu0 %2378, %v335
        %v2380 = vpop.permute.xlu0 %2379
        %2382 = vset.pattern.permute.xlu0 31
        %2383 = vperm.xlu0 %2382, %v336
        %v2384 = vpop.permute.xlu0 %2383
        %v2386 = vmul.f32 %v2380, %v449
        %v2387 = vmul.f32 %v2380, %v450
        %v2388 = vmul.f32 %v2384, %v451
        %v2389 = vmul.f32 %v2384, %v452
        %2394 = vrot.lane.b32.xlu0 %v2386, 98
        %v2395 = vpop.permute.xlu0 %2394
        %2396 = vrot.lane.b32.xlu0 %v2387, 98
        %v2397 = vpop.permute.xlu0 %2396
        %2398 = vrot.lane.b32.xlu0 %v2388, 98
        %v2399 = vpop.permute.xlu0 %2398
        %2400 = vrot.lane.b32.xlu0 %v2389, 98
        %v2401 = vpop.permute.xlu0 %2400
        %v2402 = vsel %vm2341, %v2395, %v2397
        %v2403 = vsel %vm2341, %v2399, %v2401
        %v2408 = vadd.f32 %v2279, %v2402
        %v2409 = vadd.f32 %v2280, %v2397
        %v2410 = vadd.f32 %v2281, %v2403
        %v2411 = vadd.f32 %v2282, %v2401
        %2412 = vset.pattern.permute.xlu0 95
        %2413 = vperm.xlu0 %2412, %v335
        %v2414 = vpop.permute.xlu0 %2413
        %2416 = vset.pattern.permute.xlu0 95
        %2417 = vperm.xlu0 %2416, %v336
        %v2418 = vpop.permute.xlu0 %2417
        %v2420 = vmul.f32 %v2414, %v449
        %v2421 = vmul.f32 %v2414, %v450
        %v2422 = vmul.f32 %v2418, %v451
        %v2423 = vmul.f32 %v2418, %v452
        %2428 = vrot.lane.b32.xlu0 %v2420, 98
        %v2429 = vpop.permute.xlu0 %2428
        %2430 = vrot.lane.b32.xlu0 %v2421, 98
        %v2431 = vpop.permute.xlu0 %2430
        %2432 = vrot.lane.b32.xlu0 %v2422, 98
        %v2433 = vpop.permute.xlu0 %2432
        %2434 = vrot.lane.b32.xlu0 %v2423, 98
        %v2435 = vpop.permute.xlu0 %2434
        %v2436 = vsel %vm2341, %v2429, %v2431
        %v2437 = vsel %vm2341, %v2433, %v2435
        %v2442 = vadd.f32 %v2313, %v2436
        %v2443 = vadd.f32 %v2314, %v2431
        %v2444 = vadd.f32 %v2315, %v2437
        %v2445 = vadd.f32 %v2316, %v2435
        %2446 = vset.pattern.permute.xlu0 32
        %2447 = vperm.xlu0 %2446, %v335
        %v2448 = vpop.permute.xlu0 %2447
        %2450 = vset.pattern.permute.xlu0 32
        %2451 = vperm.xlu0 %2450, %v336
        %v2452 = vpop.permute.xlu0 %2451
        %v2454 = vmul.f32 %v2448, %v449
        %v2455 = vmul.f32 %v2448, %v450
        %v2456 = vmul.f32 %v2452, %v451
        %v2457 = vmul.f32 %v2452, %v452
        %2462 = vrot.lane.b32.xlu0 %v2454, 96
        %v2463 = vpop.permute.xlu0 %2462
        %2464 = vrot.lane.b32.xlu0 %v2455, 96
        %v2465 = vpop.permute.xlu0 %2464
        %2466 = vrot.lane.b32.xlu0 %v2456, 96
        %v2467 = vpop.permute.xlu0 %2466
        %2468 = vrot.lane.b32.xlu0 %v2457, 96
        %v2469 = vpop.permute.xlu0 %2468
        %vm2470 = vcmask 785408
        %v2471 = vsel %vm2470, %v2463, %v2465
        %v2472 = vsel %vm2470, %v2467, %v2469
        %v2475 = vadd.f32 %v2346, %v2471
        %v2476 = vadd.f32 %v2347, %v2472
        %2477 = vset.pattern.permute.xlu0 96
        %2478 = vperm.xlu0 %2477, %v335
        %v2479 = vpop.permute.xlu0 %2478
        %2481 = vset.pattern.permute.xlu0 96
        %2482 = vperm.xlu0 %2481, %v336
        %v2483 = vpop.permute.xlu0 %2482
        %v2485 = vmul.f32 %v2479, %v449
        %v2486 = vmul.f32 %v2479, %v450
        %v2487 = vmul.f32 %v2483, %v451
        %v2488 = vmul.f32 %v2483, %v452
        %2493 = vrot.lane.b32.xlu0 %v2485, 96
        %v2494 = vpop.permute.xlu0 %2493
        %2495 = vrot.lane.b32.xlu0 %v2486, 96
        %v2496 = vpop.permute.xlu0 %2495
        %2497 = vrot.lane.b32.xlu0 %v2487, 96
        %v2498 = vpop.permute.xlu0 %2497
        %2499 = vrot.lane.b32.xlu0 %v2488, 96
        %v2500 = vpop.permute.xlu0 %2499
        %v2501 = vsel %vm2470, %v2494, %v2496
        %v2502 = vsel %vm2470, %v2498, %v2500
        %v2505 = vadd.f32 %v2376, %v2501
        %v2506 = vadd.f32 %v2377, %v2502
        %2507 = vset.pattern.permute.xlu0 33
        %2508 = vperm.xlu0 %2507, %v335
        %v2509 = vpop.permute.xlu0 %2508
        %2511 = vset.pattern.permute.xlu0 33
        %2512 = vperm.xlu0 %2511, %v336
        %v2513 = vpop.permute.xlu0 %2512
        %v2515 = vmul.f32 %v2509, %v449
        %v2516 = vmul.f32 %v2509, %v450
        %v2517 = vmul.f32 %v2513, %v451
        %v2518 = vmul.f32 %v2513, %v452
        %2523 = vrot.lane.b32.xlu0 %v2515, 96
        %v2524 = vpop.permute.xlu0 %2523
        %2525 = vrot.lane.b32.xlu0 %v2516, 96
        %v2526 = vpop.permute.xlu0 %2525
        %2527 = vrot.lane.b32.xlu0 %v2517, 96
        %v2528 = vpop.permute.xlu0 %2527
        %2529 = vrot.lane.b32.xlu0 %v2518, 96
        %v2530 = vpop.permute.xlu0 %2529
        %v2531 = vsel %vm2470, %v2524, %v2526
        %v2532 = vsel %vm2470, %v2528, %v2530
        %v2537 = vadd.f32 %v2408, %v2531
        %v2538 = vadd.f32 %v2409, %v2526
        %v2539 = vadd.f32 %v2410, %v2532
        %v2540 = vadd.f32 %v2411, %v2530
        %2541 = vset.pattern.permute.xlu0 97
        %2542 = vperm.xlu0 %2541, %v335
        %v2543 = vpop.permute.xlu0 %2542
        %2545 = vset.pattern.permute.xlu0 97
        %2546 = vperm.xlu0 %2545, %v336
        %v2547 = vpop.permute.xlu0 %2546
        %v2549 = vmul.f32 %v2543, %v449
        %v2550 = vmul.f32 %v2543, %v450
        %v2551 = vmul.f32 %v2547, %v451
        %v2552 = vmul.f32 %v2547, %v452
        %2557 = vrot.lane.b32.xlu0 %v2549, 96
        %v2558 = vpop.permute.xlu0 %2557
        %2559 = vrot.lane.b32.xlu0 %v2550, 96
        %v2560 = vpop.permute.xlu0 %2559
        %2561 = vrot.lane.b32.xlu0 %v2551, 96
        %v2562 = vpop.permute.xlu0 %2561
        %2563 = vrot.lane.b32.xlu0 %v2552, 96
        %v2564 = vpop.permute.xlu0 %2563
        %v2565 = vsel %vm2470, %v2558, %v2560
        %v2566 = vsel %vm2470, %v2562, %v2564
        %v2571 = vadd.f32 %v2442, %v2565
        %v2572 = vadd.f32 %v2443, %v2560
        %v2573 = vadd.f32 %v2444, %v2566
        %v2574 = vadd.f32 %v2445, %v2564
        %2575 = vset.pattern.permute.xlu0 34
        %2576 = vperm.xlu0 %2575, %v335
        %v2577 = vpop.permute.xlu0 %2576
        %2579 = vset.pattern.permute.xlu0 34
        %2580 = vperm.xlu0 %2579, %v336
        %v2581 = vpop.permute.xlu0 %2580
        %v2583 = vmul.f32 %v2577, %v449
        %v2584 = vmul.f32 %v2577, %v450
        %v2585 = vmul.f32 %v2581, %v451
        %v2586 = vmul.f32 %v2581, %v452
        %2591 = vrot.lane.b32.xlu0 %v2583, 94
        %v2592 = vpop.permute.xlu0 %2591
        %2593 = vrot.lane.b32.xlu0 %v2584, 94
        %v2594 = vpop.permute.xlu0 %2593
        %2595 = vrot.lane.b32.xlu0 %v2585, 94
        %v2596 = vpop.permute.xlu0 %2595
        %2597 = vrot.lane.b32.xlu0 %v2586, 94
        %v2598 = vpop.permute.xlu0 %2597
        %vm2599 = vcmask 769024
        %v2600 = vsel %vm2599, %v2592, %v2594
        %v2601 = vsel %vm2599, %v2596, %v2598
        %v2604 = vadd.f32 %v2475, %v2600
        %v2605 = vadd.f32 %v2476, %v2601
        %2606 = vset.pattern.permute.xlu0 98
        %2607 = vperm.xlu0 %2606, %v335
        %v2608 = vpop.permute.xlu0 %2607
        %2610 = vset.pattern.permute.xlu0 98
        %2611 = vperm.xlu0 %2610, %v336
        %v2612 = vpop.permute.xlu0 %2611
        %v2614 = vmul.f32 %v2608, %v449
        %v2615 = vmul.f32 %v2608, %v450
        %v2616 = vmul.f32 %v2612, %v451
        %v2617 = vmul.f32 %v2612, %v452
        %2622 = vrot.lane.b32.xlu0 %v2614, 94
        %v2623 = vpop.permute.xlu0 %2622
        %2624 = vrot.lane.b32.xlu0 %v2615, 94
        %v2625 = vpop.permute.xlu0 %2624
        %2626 = vrot.lane.b32.xlu0 %v2616, 94
        %v2627 = vpop.permute.xlu0 %2626
        %2628 = vrot.lane.b32.xlu0 %v2617, 94
        %v2629 = vpop.permute.xlu0 %2628
        %v2630 = vsel %vm2599, %v2623, %v2625
        %v2631 = vsel %vm2599, %v2627, %v2629
        %v2634 = vadd.f32 %v2505, %v2630
        %v2635 = vadd.f32 %v2506, %v2631
        %2636 = vset.pattern.permute.xlu0 35
        %2637 = vperm.xlu0 %2636, %v335
        %v2638 = vpop.permute.xlu0 %2637
        %2640 = vset.pattern.permute.xlu0 35
        %2641 = vperm.xlu0 %2640, %v336
        %v2642 = vpop.permute.xlu0 %2641
        %v2644 = vmul.f32 %v2638, %v449
        %v2645 = vmul.f32 %v2638, %v450
        %v2646 = vmul.f32 %v2642, %v451
        %v2647 = vmul.f32 %v2642, %v452
        %2652 = vrot.lane.b32.xlu0 %v2644, 94
        %v2653 = vpop.permute.xlu0 %2652
        %2654 = vrot.lane.b32.xlu0 %v2645, 94
        %v2655 = vpop.permute.xlu0 %2654
        %2656 = vrot.lane.b32.xlu0 %v2646, 94
        %v2657 = vpop.permute.xlu0 %2656
        %2658 = vrot.lane.b32.xlu0 %v2647, 94
        %v2659 = vpop.permute.xlu0 %2658
        %v2660 = vsel %vm2599, %v2653, %v2655
        %v2661 = vsel %vm2599, %v2657, %v2659
        %v2666 = vadd.f32 %v2537, %v2660
        %v2667 = vadd.f32 %v2538, %v2655
        %v2668 = vadd.f32 %v2539, %v2661
        %v2669 = vadd.f32 %v2540, %v2659
        %2670 = vset.pattern.permute.xlu0 99
        %2671 = vperm.xlu0 %2670, %v335
        %v2672 = vpop.permute.xlu0 %2671
        %2674 = vset.pattern.permute.xlu0 99
        %2675 = vperm.xlu0 %2674, %v336
        %v2676 = vpop.permute.xlu0 %2675
        %v2678 = vmul.f32 %v2672, %v449
        %v2679 = vmul.f32 %v2672, %v450
        %v2680 = vmul.f32 %v2676, %v451
        %v2681 = vmul.f32 %v2676, %v452
        %2686 = vrot.lane.b32.xlu0 %v2678, 94
        %v2687 = vpop.permute.xlu0 %2686
        %2688 = vrot.lane.b32.xlu0 %v2679, 94
        %v2689 = vpop.permute.xlu0 %2688
        %2690 = vrot.lane.b32.xlu0 %v2680, 94
        %v2691 = vpop.permute.xlu0 %2690
        %2692 = vrot.lane.b32.xlu0 %v2681, 94
        %v2693 = vpop.permute.xlu0 %2692
        %v2694 = vsel %vm2599, %v2687, %v2689
        %v2695 = vsel %vm2599, %v2691, %v2693
        %v2700 = vadd.f32 %v2571, %v2694
        %v2701 = vadd.f32 %v2572, %v2689
        %v2702 = vadd.f32 %v2573, %v2695
        %v2703 = vadd.f32 %v2574, %v2693
        %2704 = vset.pattern.permute.xlu0 36
        %2705 = vperm.xlu0 %2704, %v335
        %v2706 = vpop.permute.xlu0 %2705
        %2708 = vset.pattern.permute.xlu0 36
        %2709 = vperm.xlu0 %2708, %v336
        %v2710 = vpop.permute.xlu0 %2709
        %v2712 = vmul.f32 %v2706, %v449
        %v2713 = vmul.f32 %v2706, %v450
        %v2714 = vmul.f32 %v2710, %v451
        %v2715 = vmul.f32 %v2710, %v452
        %2720 = vrot.lane.b32.xlu0 %v2712, 92
        %v2721 = vpop.permute.xlu0 %2720
        %2722 = vrot.lane.b32.xlu0 %v2713, 92
        %v2723 = vpop.permute.xlu0 %2722
        %2724 = vrot.lane.b32.xlu0 %v2714, 92
        %v2725 = vpop.permute.xlu0 %2724
        %2726 = vrot.lane.b32.xlu0 %v2715, 92
        %v2727 = vpop.permute.xlu0 %2726
        %vm2728 = vcmask 752640
        %v2729 = vsel %vm2728, %v2721, %v2723
        %v2730 = vsel %vm2728, %v2725, %v2727
        %v2733 = vadd.f32 %v2604, %v2729
        %v2734 = vadd.f32 %v2605, %v2730
        %2735 = vset.pattern.permute.xlu0 100
        %2736 = vperm.xlu0 %2735, %v335
        %v2737 = vpop.permute.xlu0 %2736
        %2739 = vset.pattern.permute.xlu0 100
        %2740 = vperm.xlu0 %2739, %v336
        %v2741 = vpop.permute.xlu0 %2740
        %v2743 = vmul.f32 %v2737, %v449
        %v2744 = vmul.f32 %v2737, %v450
        %v2745 = vmul.f32 %v2741, %v451
        %v2746 = vmul.f32 %v2741, %v452
        %2751 = vrot.lane.b32.xlu0 %v2743, 92
        %v2752 = vpop.permute.xlu0 %2751
        %2753 = vrot.lane.b32.xlu0 %v2744, 92
        %v2754 = vpop.permute.xlu0 %2753
        %2755 = vrot.lane.b32.xlu0 %v2745, 92
        %v2756 = vpop.permute.xlu0 %2755
        %2757 = vrot.lane.b32.xlu0 %v2746, 92
        %v2758 = vpop.permute.xlu0 %2757
        %v2759 = vsel %vm2728, %v2752, %v2754
        %v2760 = vsel %vm2728, %v2756, %v2758
        %v2763 = vadd.f32 %v2634, %v2759
        %v2764 = vadd.f32 %v2635, %v2760
        %2765 = vset.pattern.permute.xlu0 37
        %2766 = vperm.xlu0 %2765, %v335
        %v2767 = vpop.permute.xlu0 %2766
        %2769 = vset.pattern.permute.xlu0 37
        %2770 = vperm.xlu0 %2769, %v336
        %v2771 = vpop.permute.xlu0 %2770
        %v2773 = vmul.f32 %v2767, %v449
        %v2774 = vmul.f32 %v2767, %v450
        %v2775 = vmul.f32 %v2771, %v451
        %v2776 = vmul.f32 %v2771, %v452
        %2781 = vrot.lane.b32.xlu0 %v2773, 92
        %v2782 = vpop.permute.xlu0 %2781
        %2783 = vrot.lane.b32.xlu0 %v2774, 92
        %v2784 = vpop.permute.xlu0 %2783
        %2785 = vrot.lane.b32.xlu0 %v2775, 92
        %v2786 = vpop.permute.xlu0 %2785
        %2787 = vrot.lane.b32.xlu0 %v2776, 92
        %v2788 = vpop.permute.xlu0 %2787
        %v2789 = vsel %vm2728, %v2782, %v2784
        %v2790 = vsel %vm2728, %v2786, %v2788
        %v2795 = vadd.f32 %v2666, %v2789
        %v2796 = vadd.f32 %v2667, %v2784
        %v2797 = vadd.f32 %v2668, %v2790
        %v2798 = vadd.f32 %v2669, %v2788
        %2799 = vset.pattern.permute.xlu0 101
        %2800 = vperm.xlu0 %2799, %v335
        %v2801 = vpop.permute.xlu0 %2800
        %2803 = vset.pattern.permute.xlu0 101
        %2804 = vperm.xlu0 %2803, %v336
        %v2805 = vpop.permute.xlu0 %2804
        %v2807 = vmul.f32 %v2801, %v449
        %v2808 = vmul.f32 %v2801, %v450
        %v2809 = vmul.f32 %v2805, %v451
        %v2810 = vmul.f32 %v2805, %v452
        %2815 = vrot.lane.b32.xlu0 %v2807, 92
        %v2816 = vpop.permute.xlu0 %2815
        %2817 = vrot.lane.b32.xlu0 %v2808, 92
        %v2818 = vpop.permute.xlu0 %2817
        %2819 = vrot.lane.b32.xlu0 %v2809, 92
        %v2820 = vpop.permute.xlu0 %2819
        %2821 = vrot.lane.b32.xlu0 %v2810, 92
        %v2822 = vpop.permute.xlu0 %2821
        %v2823 = vsel %vm2728, %v2816, %v2818
        %v2824 = vsel %vm2728, %v2820, %v2822
        %v2829 = vadd.f32 %v2700, %v2823
        %v2830 = vadd.f32 %v2701, %v2818
        %v2831 = vadd.f32 %v2702, %v2824
        %v2832 = vadd.f32 %v2703, %v2822
        %2833 = vset.pattern.permute.xlu0 38
        %2834 = vperm.xlu0 %2833, %v335
        %v2835 = vpop.permute.xlu0 %2834
        %2837 = vset.pattern.permute.xlu0 38
        %2838 = vperm.xlu0 %2837, %v336
        %v2839 = vpop.permute.xlu0 %2838
        %v2841 = vmul.f32 %v2835, %v449
        %v2842 = vmul.f32 %v2835, %v450
        %v2843 = vmul.f32 %v2839, %v451
        %v2844 = vmul.f32 %v2839, %v452
        %2849 = vrot.lane.b32.xlu0 %v2841, 90
        %v2850 = vpop.permute.xlu0 %2849
        %2851 = vrot.lane.b32.xlu0 %v2842, 90
        %v2852 = vpop.permute.xlu0 %2851
        %2853 = vrot.lane.b32.xlu0 %v2843, 90
        %v2854 = vpop.permute.xlu0 %2853
        %2855 = vrot.lane.b32.xlu0 %v2844, 90
        %v2856 = vpop.permute.xlu0 %2855
        %vm2857 = vcmask 736256
        %v2858 = vsel %vm2857, %v2850, %v2852
        %v2859 = vsel %vm2857, %v2854, %v2856
        %v2862 = vadd.f32 %v2733, %v2858
        %v2863 = vadd.f32 %v2734, %v2859
        %2864 = vset.pattern.permute.xlu0 102
        %2865 = vperm.xlu0 %2864, %v335
        %v2866 = vpop.permute.xlu0 %2865
        %2868 = vset.pattern.permute.xlu0 102
        %2869 = vperm.xlu0 %2868, %v336
        %v2870 = vpop.permute.xlu0 %2869
        %v2872 = vmul.f32 %v2866, %v449
        %v2873 = vmul.f32 %v2866, %v450
        %v2874 = vmul.f32 %v2870, %v451
        %v2875 = vmul.f32 %v2870, %v452
        %2880 = vrot.lane.b32.xlu0 %v2872, 90
        %v2881 = vpop.permute.xlu0 %2880
        %2882 = vrot.lane.b32.xlu0 %v2873, 90
        %v2883 = vpop.permute.xlu0 %2882
        %2884 = vrot.lane.b32.xlu0 %v2874, 90
        %v2885 = vpop.permute.xlu0 %2884
        %2886 = vrot.lane.b32.xlu0 %v2875, 90
        %v2887 = vpop.permute.xlu0 %2886
        %v2888 = vsel %vm2857, %v2881, %v2883
        %v2889 = vsel %vm2857, %v2885, %v2887
        %v2892 = vadd.f32 %v2763, %v2888
        %v2893 = vadd.f32 %v2764, %v2889
        %2894 = vset.pattern.permute.xlu0 39
        %2895 = vperm.xlu0 %2894, %v335
        %v2896 = vpop.permute.xlu0 %2895
        %2898 = vset.pattern.permute.xlu0 39
        %2899 = vperm.xlu0 %2898, %v336
        %v2900 = vpop.permute.xlu0 %2899
        %v2902 = vmul.f32 %v2896, %v449
        %v2903 = vmul.f32 %v2896, %v450
        %v2904 = vmul.f32 %v2900, %v451
        %v2905 = vmul.f32 %v2900, %v452
        %2910 = vrot.lane.b32.xlu0 %v2902, 90
        %v2911 = vpop.permute.xlu0 %2910
        %2912 = vrot.lane.b32.xlu0 %v2903, 90
        %v2913 = vpop.permute.xlu0 %2912
        %2914 = vrot.lane.b32.xlu0 %v2904, 90
        %v2915 = vpop.permute.xlu0 %2914
        %2916 = vrot.lane.b32.xlu0 %v2905, 90
        %v2917 = vpop.permute.xlu0 %2916
        %v2918 = vsel %vm2857, %v2911, %v2913
        %v2919 = vsel %vm2857, %v2915, %v2917
        %v2924 = vadd.f32 %v2795, %v2918
        %v2925 = vadd.f32 %v2796, %v2913
        %v2926 = vadd.f32 %v2797, %v2919
        %v2927 = vadd.f32 %v2798, %v2917
        %2928 = vset.pattern.permute.xlu0 103
        %2929 = vperm.xlu0 %2928, %v335
        %v2930 = vpop.permute.xlu0 %2929
        %2932 = vset.pattern.permute.xlu0 103
        %2933 = vperm.xlu0 %2932, %v336
        %v2934 = vpop.permute.xlu0 %2933
        %v2936 = vmul.f32 %v2930, %v449
        %v2937 = vmul.f32 %v2930, %v450
        %v2938 = vmul.f32 %v2934, %v451
        %v2939 = vmul.f32 %v2934, %v452
        %2944 = vrot.lane.b32.xlu0 %v2936, 90
        %v2945 = vpop.permute.xlu0 %2944
        %2946 = vrot.lane.b32.xlu0 %v2937, 90
        %v2947 = vpop.permute.xlu0 %2946
        %2948 = vrot.lane.b32.xlu0 %v2938, 90
        %v2949 = vpop.permute.xlu0 %2948
        %2950 = vrot.lane.b32.xlu0 %v2939, 90
        %v2951 = vpop.permute.xlu0 %2950
        %v2952 = vsel %vm2857, %v2945, %v2947
        %v2953 = vsel %vm2857, %v2949, %v2951
        %v2958 = vadd.f32 %v2829, %v2952
        %v2959 = vadd.f32 %v2830, %v2947
        %v2960 = vadd.f32 %v2831, %v2953
        %v2961 = vadd.f32 %v2832, %v2951
        %2962 = vset.pattern.permute.xlu0 40
        %2963 = vperm.xlu0 %2962, %v335
        %v2964 = vpop.permute.xlu0 %2963
        %2966 = vset.pattern.permute.xlu0 40
        %2967 = vperm.xlu0 %2966, %v336
        %v2968 = vpop.permute.xlu0 %2967
        %v2970 = vmul.f32 %v2964, %v449
        %v2971 = vmul.f32 %v2964, %v450
        %v2972 = vmul.f32 %v2968, %v451
        %v2973 = vmul.f32 %v2968, %v452
        %2978 = vrot.lane.b32.xlu0 %v2970, 88
        %v2979 = vpop.permute.xlu0 %2978
        %2980 = vrot.lane.b32.xlu0 %v2971, 88
        %v2981 = vpop.permute.xlu0 %2980
        %2982 = vrot.lane.b32.xlu0 %v2972, 88
        %v2983 = vpop.permute.xlu0 %2982
        %2984 = vrot.lane.b32.xlu0 %v2973, 88
        %v2985 = vpop.permute.xlu0 %2984
        %vm2986 = vcmask 719872
        %v2987 = vsel %vm2986, %v2979, %v2981
        %v2988 = vsel %vm2986, %v2983, %v2985
        %v2991 = vadd.f32 %v2862, %v2987
        %v2992 = vadd.f32 %v2863, %v2988
        %2993 = vset.pattern.permute.xlu0 104
        %2994 = vperm.xlu0 %2993, %v335
        %v2995 = vpop.permute.xlu0 %2994
        %2997 = vset.pattern.permute.xlu0 104
        %2998 = vperm.xlu0 %2997, %v336
        %v2999 = vpop.permute.xlu0 %2998
        %v3001 = vmul.f32 %v2995, %v449
        %v3002 = vmul.f32 %v2995, %v450
        %v3003 = vmul.f32 %v2999, %v451
        %v3004 = vmul.f32 %v2999, %v452
        %3009 = vrot.lane.b32.xlu0 %v3001, 88
        %v3010 = vpop.permute.xlu0 %3009
        %3011 = vrot.lane.b32.xlu0 %v3002, 88
        %v3012 = vpop.permute.xlu0 %3011
        %3013 = vrot.lane.b32.xlu0 %v3003, 88
        %v3014 = vpop.permute.xlu0 %3013
        %3015 = vrot.lane.b32.xlu0 %v3004, 88
        %v3016 = vpop.permute.xlu0 %3015
        %v3017 = vsel %vm2986, %v3010, %v3012
        %v3018 = vsel %vm2986, %v3014, %v3016
        %v3021 = vadd.f32 %v2892, %v3017
        %v3022 = vadd.f32 %v2893, %v3018
        %3023 = vset.pattern.permute.xlu0 41
        %3024 = vperm.xlu0 %3023, %v335
        %v3025 = vpop.permute.xlu0 %3024
        %3027 = vset.pattern.permute.xlu0 41
        %3028 = vperm.xlu0 %3027, %v336
        %v3029 = vpop.permute.xlu0 %3028
        %v3031 = vmul.f32 %v3025, %v449
        %v3032 = vmul.f32 %v3025, %v450
        %v3033 = vmul.f32 %v3029, %v451
        %v3034 = vmul.f32 %v3029, %v452
        %3039 = vrot.lane.b32.xlu0 %v3031, 88
        %v3040 = vpop.permute.xlu0 %3039
        %3041 = vrot.lane.b32.xlu0 %v3032, 88
        %v3042 = vpop.permute.xlu0 %3041
        %3043 = vrot.lane.b32.xlu0 %v3033, 88
        %v3044 = vpop.permute.xlu0 %3043
        %3045 = vrot.lane.b32.xlu0 %v3034, 88
        %v3046 = vpop.permute.xlu0 %3045
        %v3047 = vsel %vm2986, %v3040, %v3042
        %v3048 = vsel %vm2986, %v3044, %v3046
        %v3053 = vadd.f32 %v2924, %v3047
        %v3054 = vadd.f32 %v2925, %v3042
        %v3055 = vadd.f32 %v2926, %v3048
        %v3056 = vadd.f32 %v2927, %v3046
        %3057 = vset.pattern.permute.xlu0 105
        %3058 = vperm.xlu0 %3057, %v335
        %v3059 = vpop.permute.xlu0 %3058
        %3061 = vset.pattern.permute.xlu0 105
        %3062 = vperm.xlu0 %3061, %v336
        %v3063 = vpop.permute.xlu0 %3062
        %v3065 = vmul.f32 %v3059, %v449
        %v3066 = vmul.f32 %v3059, %v450
        %v3067 = vmul.f32 %v3063, %v451
        %v3068 = vmul.f32 %v3063, %v452
        %3073 = vrot.lane.b32.xlu0 %v3065, 88
        %v3074 = vpop.permute.xlu0 %3073
        %3075 = vrot.lane.b32.xlu0 %v3066, 88
        %v3076 = vpop.permute.xlu0 %3075
        %3077 = vrot.lane.b32.xlu0 %v3067, 88
        %v3078 = vpop.permute.xlu0 %3077
        %3079 = vrot.lane.b32.xlu0 %v3068, 88
        %v3080 = vpop.permute.xlu0 %3079
        %v3081 = vsel %vm2986, %v3074, %v3076
        %v3082 = vsel %vm2986, %v3078, %v3080
        %v3087 = vadd.f32 %v2958, %v3081
        %v3088 = vadd.f32 %v2959, %v3076
        %v3089 = vadd.f32 %v2960, %v3082
        %v3090 = vadd.f32 %v2961, %v3080
        %3091 = vset.pattern.permute.xlu0 42
        %3092 = vperm.xlu0 %3091, %v335
        %v3093 = vpop.permute.xlu0 %3092
        %3095 = vset.pattern.permute.xlu0 42
        %3096 = vperm.xlu0 %3095, %v336
        %v3097 = vpop.permute.xlu0 %3096
        %v3099 = vmul.f32 %v3093, %v449
        %v3100 = vmul.f32 %v3093, %v450
        %v3101 = vmul.f32 %v3097, %v451
        %v3102 = vmul.f32 %v3097, %v452
        %3107 = vrot.lane.b32.xlu0 %v3099, 86
        %v3108 = vpop.permute.xlu0 %3107
        %3109 = vrot.lane.b32.xlu0 %v3100, 86
        %v3110 = vpop.permute.xlu0 %3109
        %3111 = vrot.lane.b32.xlu0 %v3101, 86
        %v3112 = vpop.permute.xlu0 %3111
        %3113 = vrot.lane.b32.xlu0 %v3102, 86
        %v3114 = vpop.permute.xlu0 %3113
        %vm3115 = vcmask 703488
        %v3116 = vsel %vm3115, %v3108, %v3110
        %v3117 = vsel %vm3115, %v3112, %v3114
        %v3120 = vadd.f32 %v2991, %v3116
        %v3121 = vadd.f32 %v2992, %v3117
        %3122 = vset.pattern.permute.xlu0 106
        %3123 = vperm.xlu0 %3122, %v335
        %v3124 = vpop.permute.xlu0 %3123
        %3126 = vset.pattern.permute.xlu0 106
        %3127 = vperm.xlu0 %3126, %v336
        %v3128 = vpop.permute.xlu0 %3127
        %v3130 = vmul.f32 %v3124, %v449
        %v3131 = vmul.f32 %v3124, %v450
        %v3132 = vmul.f32 %v3128, %v451
        %v3133 = vmul.f32 %v3128, %v452
        %3138 = vrot.lane.b32.xlu0 %v3130, 86
        %v3139 = vpop.permute.xlu0 %3138
        %3140 = vrot.lane.b32.xlu0 %v3131, 86
        %v3141 = vpop.permute.xlu0 %3140
        %3142 = vrot.lane.b32.xlu0 %v3132, 86
        %v3143 = vpop.permute.xlu0 %3142
        %3144 = vrot.lane.b32.xlu0 %v3133, 86
        %v3145 = vpop.permute.xlu0 %3144
        %v3146 = vsel %vm3115, %v3139, %v3141
        %v3147 = vsel %vm3115, %v3143, %v3145
        %v3150 = vadd.f32 %v3021, %v3146
        %v3151 = vadd.f32 %v3022, %v3147
        %3152 = vset.pattern.permute.xlu0 43
        %3153 = vperm.xlu0 %3152, %v335
        %v3154 = vpop.permute.xlu0 %3153
        %3156 = vset.pattern.permute.xlu0 43
        %3157 = vperm.xlu0 %3156, %v336
        %v3158 = vpop.permute.xlu0 %3157
        %v3160 = vmul.f32 %v3154, %v449
        %v3161 = vmul.f32 %v3154, %v450
        %v3162 = vmul.f32 %v3158, %v451
        %v3163 = vmul.f32 %v3158, %v452
        %3168 = vrot.lane.b32.xlu0 %v3160, 86
        %v3169 = vpop.permute.xlu0 %3168
        %3170 = vrot.lane.b32.xlu0 %v3161, 86
        %v3171 = vpop.permute.xlu0 %3170
        %3172 = vrot.lane.b32.xlu0 %v3162, 86
        %v3173 = vpop.permute.xlu0 %3172
        %3174 = vrot.lane.b32.xlu0 %v3163, 86
        %v3175 = vpop.permute.xlu0 %3174
        %v3176 = vsel %vm3115, %v3169, %v3171
        %v3177 = vsel %vm3115, %v3173, %v3175
        %v3182 = vadd.f32 %v3053, %v3176
        %v3183 = vadd.f32 %v3054, %v3171
        %v3184 = vadd.f32 %v3055, %v3177
        %v3185 = vadd.f32 %v3056, %v3175
        %3186 = vset.pattern.permute.xlu0 107
        %3187 = vperm.xlu0 %3186, %v335
        %v3188 = vpop.permute.xlu0 %3187
        %3190 = vset.pattern.permute.xlu0 107
        %3191 = vperm.xlu0 %3190, %v336
        %v3192 = vpop.permute.xlu0 %3191
        %v3194 = vmul.f32 %v3188, %v449
        %v3195 = vmul.f32 %v3188, %v450
        %v3196 = vmul.f32 %v3192, %v451
        %v3197 = vmul.f32 %v3192, %v452
        %3202 = vrot.lane.b32.xlu0 %v3194, 86
        %v3203 = vpop.permute.xlu0 %3202
        %3204 = vrot.lane.b32.xlu0 %v3195, 86
        %v3205 = vpop.permute.xlu0 %3204
        %3206 = vrot.lane.b32.xlu0 %v3196, 86
        %v3207 = vpop.permute.xlu0 %3206
        %3208 = vrot.lane.b32.xlu0 %v3197, 86
        %v3209 = vpop.permute.xlu0 %3208
        %v3210 = vsel %vm3115, %v3203, %v3205
        %v3211 = vsel %vm3115, %v3207, %v3209
        %v3216 = vadd.f32 %v3087, %v3210
        %v3217 = vadd.f32 %v3088, %v3205
        %v3218 = vadd.f32 %v3089, %v3211
        %v3219 = vadd.f32 %v3090, %v3209
        %3220 = vset.pattern.permute.xlu0 44
        %3221 = vperm.xlu0 %3220, %v335
        %v3222 = vpop.permute.xlu0 %3221
        %3224 = vset.pattern.permute.xlu0 44
        %3225 = vperm.xlu0 %3224, %v336
        %v3226 = vpop.permute.xlu0 %3225
        %v3228 = vmul.f32 %v3222, %v449
        %v3229 = vmul.f32 %v3222, %v450
        %v3230 = vmul.f32 %v3226, %v451
        %v3231 = vmul.f32 %v3226, %v452
        %3236 = vrot.lane.b32.xlu0 %v3228, 84
        %v3237 = vpop.permute.xlu0 %3236
        %3238 = vrot.lane.b32.xlu0 %v3229, 84
        %v3239 = vpop.permute.xlu0 %3238
        %3240 = vrot.lane.b32.xlu0 %v3230, 84
        %v3241 = vpop.permute.xlu0 %3240
        %3242 = vrot.lane.b32.xlu0 %v3231, 84
        %v3243 = vpop.permute.xlu0 %3242
        %vm3244 = vcmask 687104
        %v3245 = vsel %vm3244, %v3237, %v3239
        %v3246 = vsel %vm3244, %v3241, %v3243
        %v3249 = vadd.f32 %v3120, %v3245
        %v3250 = vadd.f32 %v3121, %v3246
        %3251 = vset.pattern.permute.xlu0 108
        %3252 = vperm.xlu0 %3251, %v335
        %v3253 = vpop.permute.xlu0 %3252
        %3255 = vset.pattern.permute.xlu0 108
        %3256 = vperm.xlu0 %3255, %v336
        %v3257 = vpop.permute.xlu0 %3256
        %v3259 = vmul.f32 %v3253, %v449
        %v3260 = vmul.f32 %v3253, %v450
        %v3261 = vmul.f32 %v3257, %v451
        %v3262 = vmul.f32 %v3257, %v452
        %3267 = vrot.lane.b32.xlu0 %v3259, 84
        %v3268 = vpop.permute.xlu0 %3267
        %3269 = vrot.lane.b32.xlu0 %v3260, 84
        %v3270 = vpop.permute.xlu0 %3269
        %3271 = vrot.lane.b32.xlu0 %v3261, 84
        %v3272 = vpop.permute.xlu0 %3271
        %3273 = vrot.lane.b32.xlu0 %v3262, 84
        %v3274 = vpop.permute.xlu0 %3273
        %v3275 = vsel %vm3244, %v3268, %v3270
        %v3276 = vsel %vm3244, %v3272, %v3274
        %v3279 = vadd.f32 %v3150, %v3275
        %v3280 = vadd.f32 %v3151, %v3276
        %3281 = vset.pattern.permute.xlu0 45
        %3282 = vperm.xlu0 %3281, %v335
        %v3283 = vpop.permute.xlu0 %3282
        %3285 = vset.pattern.permute.xlu0 45
        %3286 = vperm.xlu0 %3285, %v336
        %v3287 = vpop.permute.xlu0 %3286
        %v3289 = vmul.f32 %v3283, %v449
        %v3290 = vmul.f32 %v3283, %v450
        %v3291 = vmul.f32 %v3287, %v451
        %v3292 = vmul.f32 %v3287, %v452
        %3297 = vrot.lane.b32.xlu0 %v3289, 84
        %v3298 = vpop.permute.xlu0 %3297
        %3299 = vrot.lane.b32.xlu0 %v3290, 84
        %v3300 = vpop.permute.xlu0 %3299
        %3301 = vrot.lane.b32.xlu0 %v3291, 84
        %v3302 = vpop.permute.xlu0 %3301
        %3303 = vrot.lane.b32.xlu0 %v3292, 84
        %v3304 = vpop.permute.xlu0 %3303
        %v3305 = vsel %vm3244, %v3298, %v3300
        %v3306 = vsel %vm3244, %v3302, %v3304
        %v3311 = vadd.f32 %v3182, %v3305
        %v3312 = vadd.f32 %v3183, %v3300
        %v3313 = vadd.f32 %v3184, %v3306
        %v3314 = vadd.f32 %v3185, %v3304
        %3315 = vset.pattern.permute.xlu0 109
        %3316 = vperm.xlu0 %3315, %v335
        %v3317 = vpop.permute.xlu0 %3316
        %3319 = vset.pattern.permute.xlu0 109
        %3320 = vperm.xlu0 %3319, %v336
        %v3321 = vpop.permute.xlu0 %3320
        %v3323 = vmul.f32 %v3317, %v449
        %v3324 = vmul.f32 %v3317, %v450
        %v3325 = vmul.f32 %v3321, %v451
        %v3326 = vmul.f32 %v3321, %v452
        %3331 = vrot.lane.b32.xlu0 %v3323, 84
        %v3332 = vpop.permute.xlu0 %3331
        %3333 = vrot.lane.b32.xlu0 %v3324, 84
        %v3334 = vpop.permute.xlu0 %3333
        %3335 = vrot.lane.b32.xlu0 %v3325, 84
        %v3336 = vpop.permute.xlu0 %3335
        %3337 = vrot.lane.b32.xlu0 %v3326, 84
        %v3338 = vpop.permute.xlu0 %3337
        %v3339 = vsel %vm3244, %v3332, %v3334
        %v3340 = vsel %vm3244, %v3336, %v3338
        %v3345 = vadd.f32 %v3216, %v3339
        %v3346 = vadd.f32 %v3217, %v3334
        %v3347 = vadd.f32 %v3218, %v3340
        %v3348 = vadd.f32 %v3219, %v3338
        %3349 = vset.pattern.permute.xlu0 46
        %3350 = vperm.xlu0 %3349, %v335
        %v3351 = vpop.permute.xlu0 %3350
        %3353 = vset.pattern.permute.xlu0 46
        %3354 = vperm.xlu0 %3353, %v336
        %v3355 = vpop.permute.xlu0 %3354
        %v3357 = vmul.f32 %v3351, %v449
        %v3358 = vmul.f32 %v3351, %v450
        %v3359 = vmul.f32 %v3355, %v451
        %v3360 = vmul.f32 %v3355, %v452
        %3365 = vrot.lane.b32.xlu0 %v3357, 82
        %v3366 = vpop.permute.xlu0 %3365
        %3367 = vrot.lane.b32.xlu0 %v3358, 82
        %v3368 = vpop.permute.xlu0 %3367
        %3369 = vrot.lane.b32.xlu0 %v3359, 82
        %v3370 = vpop.permute.xlu0 %3369
        %3371 = vrot.lane.b32.xlu0 %v3360, 82
        %v3372 = vpop.permute.xlu0 %3371
        %vm3373 = vcmask 670720
        %v3374 = vsel %vm3373, %v3366, %v3368
        %v3375 = vsel %vm3373, %v3370, %v3372
        %v3378 = vadd.f32 %v3249, %v3374
        %v3379 = vadd.f32 %v3250, %v3375
        %3380 = vset.pattern.permute.xlu0 110
        %3381 = vperm.xlu0 %3380, %v335
        %v3382 = vpop.permute.xlu0 %3381
        %3384 = vset.pattern.permute.xlu0 110
        %3385 = vperm.xlu0 %3384, %v336
        %v3386 = vpop.permute.xlu0 %3385
        %v3388 = vmul.f32 %v3382, %v449
        %v3389 = vmul.f32 %v3382, %v450
        %v3390 = vmul.f32 %v3386, %v451
        %v3391 = vmul.f32 %v3386, %v452
        %3396 = vrot.lane.b32.xlu0 %v3388, 82
        %v3397 = vpop.permute.xlu0 %3396
        %3398 = vrot.lane.b32.xlu0 %v3389, 82
        %v3399 = vpop.permute.xlu0 %3398
        %3400 = vrot.lane.b32.xlu0 %v3390, 82
        %v3401 = vpop.permute.xlu0 %3400
        %3402 = vrot.lane.b32.xlu0 %v3391, 82
        %v3403 = vpop.permute.xlu0 %3402
        %v3404 = vsel %vm3373, %v3397, %v3399
        %v3405 = vsel %vm3373, %v3401, %v3403
        %v3408 = vadd.f32 %v3279, %v3404
        %v3409 = vadd.f32 %v3280, %v3405
        %3410 = vset.pattern.permute.xlu0 47
        %3411 = vperm.xlu0 %3410, %v335
        %v3412 = vpop.permute.xlu0 %3411
        %3414 = vset.pattern.permute.xlu0 47
        %3415 = vperm.xlu0 %3414, %v336
        %v3416 = vpop.permute.xlu0 %3415
        %v3418 = vmul.f32 %v3412, %v449
        %v3419 = vmul.f32 %v3412, %v450
        %v3420 = vmul.f32 %v3416, %v451
        %v3421 = vmul.f32 %v3416, %v452
        %3426 = vrot.lane.b32.xlu0 %v3418, 82
        %v3427 = vpop.permute.xlu0 %3426
        %3428 = vrot.lane.b32.xlu0 %v3419, 82
        %v3429 = vpop.permute.xlu0 %3428
        %3430 = vrot.lane.b32.xlu0 %v3420, 82
        %v3431 = vpop.permute.xlu0 %3430
        %3432 = vrot.lane.b32.xlu0 %v3421, 82
        %v3433 = vpop.permute.xlu0 %3432
        %v3434 = vsel %vm3373, %v3427, %v3429
        %v3435 = vsel %vm3373, %v3431, %v3433
        %v3440 = vadd.f32 %v3311, %v3434
        %v3441 = vadd.f32 %v3312, %v3429
        %v3442 = vadd.f32 %v3313, %v3435
        %v3443 = vadd.f32 %v3314, %v3433
        %3444 = vset.pattern.permute.xlu0 111
        %3445 = vperm.xlu0 %3444, %v335
        %v3446 = vpop.permute.xlu0 %3445
        %3448 = vset.pattern.permute.xlu0 111
        %3449 = vperm.xlu0 %3448, %v336
        %v3450 = vpop.permute.xlu0 %3449
        %v3452 = vmul.f32 %v3446, %v449
        %v3453 = vmul.f32 %v3446, %v450
        %v3454 = vmul.f32 %v3450, %v451
        %v3455 = vmul.f32 %v3450, %v452
        %3460 = vrot.lane.b32.xlu0 %v3452, 82
        %v3461 = vpop.permute.xlu0 %3460
        %3462 = vrot.lane.b32.xlu0 %v3453, 82
        %v3463 = vpop.permute.xlu0 %3462
        %3464 = vrot.lane.b32.xlu0 %v3454, 82
        %v3465 = vpop.permute.xlu0 %3464
        %3466 = vrot.lane.b32.xlu0 %v3455, 82
        %v3467 = vpop.permute.xlu0 %3466
        %v3468 = vsel %vm3373, %v3461, %v3463
        %v3469 = vsel %vm3373, %v3465, %v3467
        %v3474 = vadd.f32 %v3345, %v3468
        %v3475 = vadd.f32 %v3346, %v3463
        %v3476 = vadd.f32 %v3347, %v3469
        %v3477 = vadd.f32 %v3348, %v3467
        %3478 = vset.pattern.permute.xlu0 48
        %3479 = vperm.xlu0 %3478, %v335
        %v3480 = vpop.permute.xlu0 %3479
        %3482 = vset.pattern.permute.xlu0 48
        %3483 = vperm.xlu0 %3482, %v336
        %v3484 = vpop.permute.xlu0 %3483
        %v3486 = vmul.f32 %v3480, %v449
        %v3487 = vmul.f32 %v3480, %v450
        %v3488 = vmul.f32 %v3484, %v451
        %v3489 = vmul.f32 %v3484, %v452
        %3494 = vrot.lane.b32.xlu0 %v3486, 80
        %v3495 = vpop.permute.xlu0 %3494
        %3496 = vrot.lane.b32.xlu0 %v3487, 80
        %v3497 = vpop.permute.xlu0 %3496
        %3498 = vrot.lane.b32.xlu0 %v3488, 80
        %v3499 = vpop.permute.xlu0 %3498
        %3500 = vrot.lane.b32.xlu0 %v3489, 80
        %v3501 = vpop.permute.xlu0 %3500
        %vm3502 = vcmask 654336
        %v3503 = vsel %vm3502, %v3495, %v3497
        %v3504 = vsel %vm3502, %v3499, %v3501
        %v3507 = vadd.f32 %v3378, %v3503
        %v3508 = vadd.f32 %v3379, %v3504
        %3509 = vset.pattern.permute.xlu0 112
        %3510 = vperm.xlu0 %3509, %v335
        %v3511 = vpop.permute.xlu0 %3510
        %3513 = vset.pattern.permute.xlu0 112
        %3514 = vperm.xlu0 %3513, %v336
        %v3515 = vpop.permute.xlu0 %3514
        %v3517 = vmul.f32 %v3511, %v449
        %v3518 = vmul.f32 %v3511, %v450
        %v3519 = vmul.f32 %v3515, %v451
        %v3520 = vmul.f32 %v3515, %v452
        %3525 = vrot.lane.b32.xlu0 %v3517, 80
        %v3526 = vpop.permute.xlu0 %3525
        %3527 = vrot.lane.b32.xlu0 %v3518, 80
        %v3528 = vpop.permute.xlu0 %3527
        %3529 = vrot.lane.b32.xlu0 %v3519, 80
        %v3530 = vpop.permute.xlu0 %3529
        %3531 = vrot.lane.b32.xlu0 %v3520, 80
        %v3532 = vpop.permute.xlu0 %3531
        %v3533 = vsel %vm3502, %v3526, %v3528
        %v3534 = vsel %vm3502, %v3530, %v3532
        %v3537 = vadd.f32 %v3408, %v3533
        %v3538 = vadd.f32 %v3409, %v3534
        %3539 = vset.pattern.permute.xlu0 49
        %3540 = vperm.xlu0 %3539, %v335
        %v3541 = vpop.permute.xlu0 %3540
        %3543 = vset.pattern.permute.xlu0 49
        %3544 = vperm.xlu0 %3543, %v336
        %v3545 = vpop.permute.xlu0 %3544
        %v3547 = vmul.f32 %v3541, %v449
        %v3548 = vmul.f32 %v3541, %v450
        %v3549 = vmul.f32 %v3545, %v451
        %v3550 = vmul.f32 %v3545, %v452
        %3555 = vrot.lane.b32.xlu0 %v3547, 80
        %v3556 = vpop.permute.xlu0 %3555
        %3557 = vrot.lane.b32.xlu0 %v3548, 80
        %v3558 = vpop.permute.xlu0 %3557
        %3559 = vrot.lane.b32.xlu0 %v3549, 80
        %v3560 = vpop.permute.xlu0 %3559
        %3561 = vrot.lane.b32.xlu0 %v3550, 80
        %v3562 = vpop.permute.xlu0 %3561
        %v3563 = vsel %vm3502, %v3556, %v3558
        %v3564 = vsel %vm3502, %v3560, %v3562
        %v3569 = vadd.f32 %v3440, %v3563
        %v3570 = vadd.f32 %v3441, %v3558
        %v3571 = vadd.f32 %v3442, %v3564
        %v3572 = vadd.f32 %v3443, %v3562
        %3573 = vset.pattern.permute.xlu0 113
        %3574 = vperm.xlu0 %3573, %v335
        %v3575 = vpop.permute.xlu0 %3574
        %3577 = vset.pattern.permute.xlu0 113
        %3578 = vperm.xlu0 %3577, %v336
        %v3579 = vpop.permute.xlu0 %3578
        %v3581 = vmul.f32 %v3575, %v449
        %v3582 = vmul.f32 %v3575, %v450
        %v3583 = vmul.f32 %v3579, %v451
        %v3584 = vmul.f32 %v3579, %v452
        %3589 = vrot.lane.b32.xlu0 %v3581, 80
        %v3590 = vpop.permute.xlu0 %3589
        %3591 = vrot.lane.b32.xlu0 %v3582, 80
        %v3592 = vpop.permute.xlu0 %3591
        %3593 = vrot.lane.b32.xlu0 %v3583, 80
        %v3594 = vpop.permute.xlu0 %3593
        %3595 = vrot.lane.b32.xlu0 %v3584, 80
        %v3596 = vpop.permute.xlu0 %3595
        %v3597 = vsel %vm3502, %v3590, %v3592
        %v3598 = vsel %vm3502, %v3594, %v3596
        %v3603 = vadd.f32 %v3474, %v3597
        %v3604 = vadd.f32 %v3475, %v3592
        %v3605 = vadd.f32 %v3476, %v3598
        %v3606 = vadd.f32 %v3477, %v3596
        %3607 = vset.pattern.permute.xlu0 50
        %3608 = vperm.xlu0 %3607, %v335
        %v3609 = vpop.permute.xlu0 %3608
        %3611 = vset.pattern.permute.xlu0 50
        %3612 = vperm.xlu0 %3611, %v336
        %v3613 = vpop.permute.xlu0 %3612
        %v3615 = vmul.f32 %v3609, %v449
        %v3616 = vmul.f32 %v3609, %v450
        %v3617 = vmul.f32 %v3613, %v451
        %v3618 = vmul.f32 %v3613, %v452
        %3623 = vrot.lane.b32.xlu0 %v3615, 78
        %v3624 = vpop.permute.xlu0 %3623
        %3625 = vrot.lane.b32.xlu0 %v3616, 78
        %v3626 = vpop.permute.xlu0 %3625
        %3627 = vrot.lane.b32.xlu0 %v3617, 78
        %v3628 = vpop.permute.xlu0 %3627
        %3629 = vrot.lane.b32.xlu0 %v3618, 78
        %v3630 = vpop.permute.xlu0 %3629
        %vm3631 = vcmask 637952
        %v3632 = vsel %vm3631, %v3624, %v3626
        %v3633 = vsel %vm3631, %v3628, %v3630
        %v3636 = vadd.f32 %v3507, %v3632
        %v3637 = vadd.f32 %v3508, %v3633
        %3638 = vset.pattern.permute.xlu0 114
        %3639 = vperm.xlu0 %3638, %v335
        %v3640 = vpop.permute.xlu0 %3639
        %3642 = vset.pattern.permute.xlu0 114
        %3643 = vperm.xlu0 %3642, %v336
        %v3644 = vpop.permute.xlu0 %3643
        %v3646 = vmul.f32 %v3640, %v449
        %v3647 = vmul.f32 %v3640, %v450
        %v3648 = vmul.f32 %v3644, %v451
        %v3649 = vmul.f32 %v3644, %v452
        %3654 = vrot.lane.b32.xlu0 %v3646, 78
        %v3655 = vpop.permute.xlu0 %3654
        %3656 = vrot.lane.b32.xlu0 %v3647, 78
        %v3657 = vpop.permute.xlu0 %3656
        %3658 = vrot.lane.b32.xlu0 %v3648, 78
        %v3659 = vpop.permute.xlu0 %3658
        %3660 = vrot.lane.b32.xlu0 %v3649, 78
        %v3661 = vpop.permute.xlu0 %3660
        %v3662 = vsel %vm3631, %v3655, %v3657
        %v3663 = vsel %vm3631, %v3659, %v3661
        %v3666 = vadd.f32 %v3537, %v3662
        %v3667 = vadd.f32 %v3538, %v3663
        %3668 = vset.pattern.permute.xlu0 51
        %3669 = vperm.xlu0 %3668, %v335
        %v3670 = vpop.permute.xlu0 %3669
        %3672 = vset.pattern.permute.xlu0 51
        %3673 = vperm.xlu0 %3672, %v336
        %v3674 = vpop.permute.xlu0 %3673
        %v3676 = vmul.f32 %v3670, %v449
        %v3677 = vmul.f32 %v3670, %v450
        %v3678 = vmul.f32 %v3674, %v451
        %v3679 = vmul.f32 %v3674, %v452
        %3684 = vrot.lane.b32.xlu0 %v3676, 78
        %v3685 = vpop.permute.xlu0 %3684
        %3686 = vrot.lane.b32.xlu0 %v3677, 78
        %v3687 = vpop.permute.xlu0 %3686
        %3688 = vrot.lane.b32.xlu0 %v3678, 78
        %v3689 = vpop.permute.xlu0 %3688
        %3690 = vrot.lane.b32.xlu0 %v3679, 78
        %v3691 = vpop.permute.xlu0 %3690
        %v3692 = vsel %vm3631, %v3685, %v3687
        %v3693 = vsel %vm3631, %v3689, %v3691
        %v3698 = vadd.f32 %v3569, %v3692
        %v3699 = vadd.f32 %v3570, %v3687
        %v3700 = vadd.f32 %v3571, %v3693
        %v3701 = vadd.f32 %v3572, %v3691
        %3702 = vset.pattern.permute.xlu0 115
        %3703 = vperm.xlu0 %3702, %v335
        %v3704 = vpop.permute.xlu0 %3703
        %3706 = vset.pattern.permute.xlu0 115
        %3707 = vperm.xlu0 %3706, %v336
        %v3708 = vpop.permute.xlu0 %3707
        %v3710 = vmul.f32 %v3704, %v449
        %v3711 = vmul.f32 %v3704, %v450
        %v3712 = vmul.f32 %v3708, %v451
        %v3713 = vmul.f32 %v3708, %v452
        %3718 = vrot.lane.b32.xlu0 %v3710, 78
        %v3719 = vpop.permute.xlu0 %3718
        %3720 = vrot.lane.b32.xlu0 %v3711, 78
        %v3721 = vpop.permute.xlu0 %3720
        %3722 = vrot.lane.b32.xlu0 %v3712, 78
        %v3723 = vpop.permute.xlu0 %3722
        %3724 = vrot.lane.b32.xlu0 %v3713, 78
        %v3725 = vpop.permute.xlu0 %3724
        %v3726 = vsel %vm3631, %v3719, %v3721
        %v3727 = vsel %vm3631, %v3723, %v3725
        %v3732 = vadd.f32 %v3603, %v3726
        %v3733 = vadd.f32 %v3604, %v3721
        %v3734 = vadd.f32 %v3605, %v3727
        %v3735 = vadd.f32 %v3606, %v3725
        %3736 = vset.pattern.permute.xlu0 52
        %3737 = vperm.xlu0 %3736, %v335
        %v3738 = vpop.permute.xlu0 %3737
        %3740 = vset.pattern.permute.xlu0 52
        %3741 = vperm.xlu0 %3740, %v336
        %v3742 = vpop.permute.xlu0 %3741
        %v3744 = vmul.f32 %v3738, %v449
        %v3745 = vmul.f32 %v3738, %v450
        %v3746 = vmul.f32 %v3742, %v451
        %v3747 = vmul.f32 %v3742, %v452
        %3752 = vrot.lane.b32.xlu0 %v3744, 76
        %v3753 = vpop.permute.xlu0 %3752
        %3754 = vrot.lane.b32.xlu0 %v3745, 76
        %v3755 = vpop.permute.xlu0 %3754
        %3756 = vrot.lane.b32.xlu0 %v3746, 76
        %v3757 = vpop.permute.xlu0 %3756
        %3758 = vrot.lane.b32.xlu0 %v3747, 76
        %v3759 = vpop.permute.xlu0 %3758
        %vm3760 = vcmask 621568
        %v3761 = vsel %vm3760, %v3753, %v3755
        %v3762 = vsel %vm3760, %v3757, %v3759
        %v3765 = vadd.f32 %v3636, %v3761
        %v3766 = vadd.f32 %v3637, %v3762
        %3767 = vset.pattern.permute.xlu0 116
        %3768 = vperm.xlu0 %3767, %v335
        %v3769 = vpop.permute.xlu0 %3768
        %3771 = vset.pattern.permute.xlu0 116
        %3772 = vperm.xlu0 %3771, %v336
        %v3773 = vpop.permute.xlu0 %3772
        %v3775 = vmul.f32 %v3769, %v449
        %v3776 = vmul.f32 %v3769, %v450
        %v3777 = vmul.f32 %v3773, %v451
        %v3778 = vmul.f32 %v3773, %v452
        %3783 = vrot.lane.b32.xlu0 %v3775, 76
        %v3784 = vpop.permute.xlu0 %3783
        %3785 = vrot.lane.b32.xlu0 %v3776, 76
        %v3786 = vpop.permute.xlu0 %3785
        %3787 = vrot.lane.b32.xlu0 %v3777, 76
        %v3788 = vpop.permute.xlu0 %3787
        %3789 = vrot.lane.b32.xlu0 %v3778, 76
        %v3790 = vpop.permute.xlu0 %3789
        %v3791 = vsel %vm3760, %v3784, %v3786
        %v3792 = vsel %vm3760, %v3788, %v3790
        %v3795 = vadd.f32 %v3666, %v3791
        %v3796 = vadd.f32 %v3667, %v3792
        %3797 = vset.pattern.permute.xlu0 53
        %3798 = vperm.xlu0 %3797, %v335
        %v3799 = vpop.permute.xlu0 %3798
        %3801 = vset.pattern.permute.xlu0 53
        %3802 = vperm.xlu0 %3801, %v336
        %v3803 = vpop.permute.xlu0 %3802
        %v3805 = vmul.f32 %v3799, %v449
        %v3806 = vmul.f32 %v3799, %v450
        %v3807 = vmul.f32 %v3803, %v451
        %v3808 = vmul.f32 %v3803, %v452
        %3813 = vrot.lane.b32.xlu0 %v3805, 76
        %v3814 = vpop.permute.xlu0 %3813
        %3815 = vrot.lane.b32.xlu0 %v3806, 76
        %v3816 = vpop.permute.xlu0 %3815
        %3817 = vrot.lane.b32.xlu0 %v3807, 76
        %v3818 = vpop.permute.xlu0 %3817
        %3819 = vrot.lane.b32.xlu0 %v3808, 76
        %v3820 = vpop.permute.xlu0 %3819
        %v3821 = vsel %vm3760, %v3814, %v3816
        %v3822 = vsel %vm3760, %v3818, %v3820
        %v3827 = vadd.f32 %v3698, %v3821
        %v3828 = vadd.f32 %v3699, %v3816
        %v3829 = vadd.f32 %v3700, %v3822
        %v3830 = vadd.f32 %v3701, %v3820
        %3831 = vset.pattern.permute.xlu0 117
        %3832 = vperm.xlu0 %3831, %v335
        %v3833 = vpop.permute.xlu0 %3832
        %3835 = vset.pattern.permute.xlu0 117
        %3836 = vperm.xlu0 %3835, %v336
        %v3837 = vpop.permute.xlu0 %3836
        %v3839 = vmul.f32 %v3833, %v449
        %v3840 = vmul.f32 %v3833, %v450
        %v3841 = vmul.f32 %v3837, %v451
        %v3842 = vmul.f32 %v3837, %v452
        %3847 = vrot.lane.b32.xlu0 %v3839, 76
        %v3848 = vpop.permute.xlu0 %3847
        %3849 = vrot.lane.b32.xlu0 %v3840, 76
        %v3850 = vpop.permute.xlu0 %3849
        %3851 = vrot.lane.b32.xlu0 %v3841, 76
        %v3852 = vpop.permute.xlu0 %3851
        %3853 = vrot.lane.b32.xlu0 %v3842, 76
        %v3854 = vpop.permute.xlu0 %3853
        %v3855 = vsel %vm3760, %v3848, %v3850
        %v3856 = vsel %vm3760, %v3852, %v3854
        %v3861 = vadd.f32 %v3732, %v3855
        %v3862 = vadd.f32 %v3733, %v3850
        %v3863 = vadd.f32 %v3734, %v3856
        %v3864 = vadd.f32 %v3735, %v3854
        %3865 = vset.pattern.permute.xlu0 54
        %3866 = vperm.xlu0 %3865, %v335
        %v3867 = vpop.permute.xlu0 %3866
        %3869 = vset.pattern.permute.xlu0 54
        %3870 = vperm.xlu0 %3869, %v336
        %v3871 = vpop.permute.xlu0 %3870
        %v3873 = vmul.f32 %v3867, %v449
        %v3874 = vmul.f32 %v3867, %v450
        %v3875 = vmul.f32 %v3871, %v451
        %v3876 = vmul.f32 %v3871, %v452
        %3881 = vrot.lane.b32.xlu0 %v3873, 74
        %v3882 = vpop.permute.xlu0 %3881
        %3883 = vrot.lane.b32.xlu0 %v3874, 74
        %v3884 = vpop.permute.xlu0 %3883
        %3885 = vrot.lane.b32.xlu0 %v3875, 74
        %v3886 = vpop.permute.xlu0 %3885
        %3887 = vrot.lane.b32.xlu0 %v3876, 74
        %v3888 = vpop.permute.xlu0 %3887
        %vm3889 = vcmask 605184
        %v3890 = vsel %vm3889, %v3882, %v3884
        %v3891 = vsel %vm3889, %v3886, %v3888
        %v3894 = vadd.f32 %v3765, %v3890
        %v3895 = vadd.f32 %v3766, %v3891
        %3896 = vset.pattern.permute.xlu0 118
        %3897 = vperm.xlu0 %3896, %v335
        %v3898 = vpop.permute.xlu0 %3897
        %3900 = vset.pattern.permute.xlu0 118
        %3901 = vperm.xlu0 %3900, %v336
        %v3902 = vpop.permute.xlu0 %3901
        %v3904 = vmul.f32 %v3898, %v449
        %v3905 = vmul.f32 %v3898, %v450
        %v3906 = vmul.f32 %v3902, %v451
        %v3907 = vmul.f32 %v3902, %v452
        %3912 = vrot.lane.b32.xlu0 %v3904, 74
        %v3913 = vpop.permute.xlu0 %3912
        %3914 = vrot.lane.b32.xlu0 %v3905, 74
        %v3915 = vpop.permute.xlu0 %3914
        %3916 = vrot.lane.b32.xlu0 %v3906, 74
        %v3917 = vpop.permute.xlu0 %3916
        %3918 = vrot.lane.b32.xlu0 %v3907, 74
        %v3919 = vpop.permute.xlu0 %3918
        %v3920 = vsel %vm3889, %v3913, %v3915
        %v3921 = vsel %vm3889, %v3917, %v3919
        %v3924 = vadd.f32 %v3795, %v3920
        %v3925 = vadd.f32 %v3796, %v3921
        %3926 = vset.pattern.permute.xlu0 55
        %3927 = vperm.xlu0 %3926, %v335
        %v3928 = vpop.permute.xlu0 %3927
        %3930 = vset.pattern.permute.xlu0 55
        %3931 = vperm.xlu0 %3930, %v336
        %v3932 = vpop.permute.xlu0 %3931
        %v3934 = vmul.f32 %v3928, %v449
        %v3935 = vmul.f32 %v3928, %v450
        %v3936 = vmul.f32 %v3932, %v451
        %v3937 = vmul.f32 %v3932, %v452
        %3942 = vrot.lane.b32.xlu0 %v3934, 74
        %v3943 = vpop.permute.xlu0 %3942
        %3944 = vrot.lane.b32.xlu0 %v3935, 74
        %v3945 = vpop.permute.xlu0 %3944
        %3946 = vrot.lane.b32.xlu0 %v3936, 74
        %v3947 = vpop.permute.xlu0 %3946
        %3948 = vrot.lane.b32.xlu0 %v3937, 74
        %v3949 = vpop.permute.xlu0 %3948
        %v3950 = vsel %vm3889, %v3943, %v3945
        %v3951 = vsel %vm3889, %v3947, %v3949
        %v3956 = vadd.f32 %v3827, %v3950
        %v3957 = vadd.f32 %v3828, %v3945
        %v3958 = vadd.f32 %v3829, %v3951
        %v3959 = vadd.f32 %v3830, %v3949
        %3960 = vset.pattern.permute.xlu0 119
        %3961 = vperm.xlu0 %3960, %v335
        %v3962 = vpop.permute.xlu0 %3961
        %3964 = vset.pattern.permute.xlu0 119
        %3965 = vperm.xlu0 %3964, %v336
        %v3966 = vpop.permute.xlu0 %3965
        %v3968 = vmul.f32 %v3962, %v449
        %v3969 = vmul.f32 %v3962, %v450
        %v3970 = vmul.f32 %v3966, %v451
        %v3971 = vmul.f32 %v3966, %v452
        %3976 = vrot.lane.b32.xlu0 %v3968, 74
        %v3977 = vpop.permute.xlu0 %3976
        %3978 = vrot.lane.b32.xlu0 %v3969, 74
        %v3979 = vpop.permute.xlu0 %3978
        %3980 = vrot.lane.b32.xlu0 %v3970, 74
        %v3981 = vpop.permute.xlu0 %3980
        %3982 = vrot.lane.b32.xlu0 %v3971, 74
        %v3983 = vpop.permute.xlu0 %3982
        %v3984 = vsel %vm3889, %v3977, %v3979
        %v3985 = vsel %vm3889, %v3981, %v3983
        %v3990 = vadd.f32 %v3861, %v3984
        %v3991 = vadd.f32 %v3862, %v3979
        %v3992 = vadd.f32 %v3863, %v3985
        %v3993 = vadd.f32 %v3864, %v3983
        %3994 = vset.pattern.permute.xlu0 56
        %3995 = vperm.xlu0 %3994, %v335
        %v3996 = vpop.permute.xlu0 %3995
        %3998 = vset.pattern.permute.xlu0 56
        %3999 = vperm.xlu0 %3998, %v336
        %v4000 = vpop.permute.xlu0 %3999
        %v4002 = vmul.f32 %v3996, %v449
        %v4003 = vmul.f32 %v3996, %v450
        %v4004 = vmul.f32 %v4000, %v451
        %v4005 = vmul.f32 %v4000, %v452
        %4010 = vrot.lane.b32.xlu0 %v4002, 72
        %v4011 = vpop.permute.xlu0 %4010
        %4012 = vrot.lane.b32.xlu0 %v4003, 72
        %v4013 = vpop.permute.xlu0 %4012
        %4014 = vrot.lane.b32.xlu0 %v4004, 72
        %v4015 = vpop.permute.xlu0 %4014
        %4016 = vrot.lane.b32.xlu0 %v4005, 72
        %v4017 = vpop.permute.xlu0 %4016
        %vm4018 = vcmask 588800
        %v4019 = vsel %vm4018, %v4011, %v4013
        %v4020 = vsel %vm4018, %v4015, %v4017
        %v4023 = vadd.f32 %v3894, %v4019
        %v4024 = vadd.f32 %v3895, %v4020
        %4025 = vset.pattern.permute.xlu0 120
        %4026 = vperm.xlu0 %4025, %v335
        %v4027 = vpop.permute.xlu0 %4026
        %4029 = vset.pattern.permute.xlu0 120
        %4030 = vperm.xlu0 %4029, %v336
        %v4031 = vpop.permute.xlu0 %4030
        %v4033 = vmul.f32 %v4027, %v449
        %v4034 = vmul.f32 %v4027, %v450
        %v4035 = vmul.f32 %v4031, %v451
        %v4036 = vmul.f32 %v4031, %v452
        %4041 = vrot.lane.b32.xlu0 %v4033, 72
        %v4042 = vpop.permute.xlu0 %4041
        %4043 = vrot.lane.b32.xlu0 %v4034, 72
        %v4044 = vpop.permute.xlu0 %4043
        %4045 = vrot.lane.b32.xlu0 %v4035, 72
        %v4046 = vpop.permute.xlu0 %4045
        %4047 = vrot.lane.b32.xlu0 %v4036, 72
        %v4048 = vpop.permute.xlu0 %4047
        %v4049 = vsel %vm4018, %v4042, %v4044
        %v4050 = vsel %vm4018, %v4046, %v4048
        %v4053 = vadd.f32 %v3924, %v4049
        %v4054 = vadd.f32 %v3925, %v4050
        %4055 = vset.pattern.permute.xlu0 57
        %4056 = vperm.xlu0 %4055, %v335
        %v4057 = vpop.permute.xlu0 %4056
        %4059 = vset.pattern.permute.xlu0 57
        %4060 = vperm.xlu0 %4059, %v336
        %v4061 = vpop.permute.xlu0 %4060
        %v4063 = vmul.f32 %v4057, %v449
        %v4064 = vmul.f32 %v4057, %v450
        %v4065 = vmul.f32 %v4061, %v451
        %v4066 = vmul.f32 %v4061, %v452
        %4071 = vrot.lane.b32.xlu0 %v4063, 72
        %v4072 = vpop.permute.xlu0 %4071
        %4073 = vrot.lane.b32.xlu0 %v4064, 72
        %v4074 = vpop.permute.xlu0 %4073
        %4075 = vrot.lane.b32.xlu0 %v4065, 72
        %v4076 = vpop.permute.xlu0 %4075
        %4077 = vrot.lane.b32.xlu0 %v4066, 72
        %v4078 = vpop.permute.xlu0 %4077
        %v4079 = vsel %vm4018, %v4072, %v4074
        %v4080 = vsel %vm4018, %v4076, %v4078
        %v4085 = vadd.f32 %v3956, %v4079
        %v4086 = vadd.f32 %v3957, %v4074
        %v4087 = vadd.f32 %v3958, %v4080
        %v4088 = vadd.f32 %v3959, %v4078
        %4089 = vset.pattern.permute.xlu0 121
        %4090 = vperm.xlu0 %4089, %v335
        %v4091 = vpop.permute.xlu0 %4090
        %4093 = vset.pattern.permute.xlu0 121
        %4094 = vperm.xlu0 %4093, %v336
        %v4095 = vpop.permute.xlu0 %4094
        %v4097 = vmul.f32 %v4091, %v449
        %v4098 = vmul.f32 %v4091, %v450
        %v4099 = vmul.f32 %v4095, %v451
        %v4100 = vmul.f32 %v4095, %v452
        %4105 = vrot.lane.b32.xlu0 %v4097, 72
        %v4106 = vpop.permute.xlu0 %4105
        %4107 = vrot.lane.b32.xlu0 %v4098, 72
        %v4108 = vpop.permute.xlu0 %4107
        %4109 = vrot.lane.b32.xlu0 %v4099, 72
        %v4110 = vpop.permute.xlu0 %4109
        %4111 = vrot.lane.b32.xlu0 %v4100, 72
        %v4112 = vpop.permute.xlu0 %4111
        %v4113 = vsel %vm4018, %v4106, %v4108
        %v4114 = vsel %vm4018, %v4110, %v4112
        %v4119 = vadd.f32 %v3990, %v4113
        %v4120 = vadd.f32 %v3991, %v4108
        %v4121 = vadd.f32 %v3992, %v4114
        %v4122 = vadd.f32 %v3993, %v4112
        %4123 = vset.pattern.permute.xlu0 58
        %4124 = vperm.xlu0 %4123, %v335
        %v4125 = vpop.permute.xlu0 %4124
        %4127 = vset.pattern.permute.xlu0 58
        %4128 = vperm.xlu0 %4127, %v336
        %v4129 = vpop.permute.xlu0 %4128
        %v4131 = vmul.f32 %v4125, %v449
        %v4132 = vmul.f32 %v4125, %v450
        %v4133 = vmul.f32 %v4129, %v451
        %v4134 = vmul.f32 %v4129, %v452
        %4139 = vrot.lane.b32.xlu0 %v4131, 70
        %v4140 = vpop.permute.xlu0 %4139
        %4141 = vrot.lane.b32.xlu0 %v4132, 70
        %v4142 = vpop.permute.xlu0 %4141
        %4143 = vrot.lane.b32.xlu0 %v4133, 70
        %v4144 = vpop.permute.xlu0 %4143
        %4145 = vrot.lane.b32.xlu0 %v4134, 70
        %v4146 = vpop.permute.xlu0 %4145
        %vm4147 = vcmask 572416
        %v4148 = vsel %vm4147, %v4140, %v4142
        %v4149 = vsel %vm4147, %v4144, %v4146
        %v4152 = vadd.f32 %v4023, %v4148
        %v4153 = vadd.f32 %v4024, %v4149
        %4154 = vset.pattern.permute.xlu0 122
        %4155 = vperm.xlu0 %4154, %v335
        %v4156 = vpop.permute.xlu0 %4155
        %4158 = vset.pattern.permute.xlu0 122
        %4159 = vperm.xlu0 %4158, %v336
        %v4160 = vpop.permute.xlu0 %4159
        %v4162 = vmul.f32 %v4156, %v449
        %v4163 = vmul.f32 %v4156, %v450
        %v4164 = vmul.f32 %v4160, %v451
        %v4165 = vmul.f32 %v4160, %v452
        %4170 = vrot.lane.b32.xlu0 %v4162, 70
        %v4171 = vpop.permute.xlu0 %4170
        %4172 = vrot.lane.b32.xlu0 %v4163, 70
        %v4173 = vpop.permute.xlu0 %4172
        %4174 = vrot.lane.b32.xlu0 %v4164, 70
        %v4175 = vpop.permute.xlu0 %4174
        %4176 = vrot.lane.b32.xlu0 %v4165, 70
        %v4177 = vpop.permute.xlu0 %4176
        %v4178 = vsel %vm4147, %v4171, %v4173
        %v4179 = vsel %vm4147, %v4175, %v4177
        %v4182 = vadd.f32 %v4053, %v4178
        %v4183 = vadd.f32 %v4054, %v4179
        %4184 = vset.pattern.permute.xlu0 59
        %4185 = vperm.xlu0 %4184, %v335
        %v4186 = vpop.permute.xlu0 %4185
        %4188 = vset.pattern.permute.xlu0 59
        %4189 = vperm.xlu0 %4188, %v336
        %v4190 = vpop.permute.xlu0 %4189
        %v4192 = vmul.f32 %v4186, %v449
        %v4193 = vmul.f32 %v4186, %v450
        %v4194 = vmul.f32 %v4190, %v451
        %v4195 = vmul.f32 %v4190, %v452
        %4200 = vrot.lane.b32.xlu0 %v4192, 70
        %v4201 = vpop.permute.xlu0 %4200
        %4202 = vrot.lane.b32.xlu0 %v4193, 70
        %v4203 = vpop.permute.xlu0 %4202
        %4204 = vrot.lane.b32.xlu0 %v4194, 70
        %v4205 = vpop.permute.xlu0 %4204
        %4206 = vrot.lane.b32.xlu0 %v4195, 70
        %v4207 = vpop.permute.xlu0 %4206
        %v4208 = vsel %vm4147, %v4201, %v4203
        %v4209 = vsel %vm4147, %v4205, %v4207
        %v4214 = vadd.f32 %v4085, %v4208
        %v4215 = vadd.f32 %v4086, %v4203
        %v4216 = vadd.f32 %v4087, %v4209
        %v4217 = vadd.f32 %v4088, %v4207
        %4218 = vset.pattern.permute.xlu0 123
        %4219 = vperm.xlu0 %4218, %v335
        %v4220 = vpop.permute.xlu0 %4219
        %4222 = vset.pattern.permute.xlu0 123
        %4223 = vperm.xlu0 %4222, %v336
        %v4224 = vpop.permute.xlu0 %4223
        %v4226 = vmul.f32 %v4220, %v449
        %v4227 = vmul.f32 %v4220, %v450
        %v4228 = vmul.f32 %v4224, %v451
        %v4229 = vmul.f32 %v4224, %v452
        %4234 = vrot.lane.b32.xlu0 %v4226, 70
        %v4235 = vpop.permute.xlu0 %4234
        %4236 = vrot.lane.b32.xlu0 %v4227, 70
        %v4237 = vpop.permute.xlu0 %4236
        %4238 = vrot.lane.b32.xlu0 %v4228, 70
        %v4239 = vpop.permute.xlu0 %4238
        %4240 = vrot.lane.b32.xlu0 %v4229, 70
        %v4241 = vpop.permute.xlu0 %4240
        %v4242 = vsel %vm4147, %v4235, %v4237
        %v4243 = vsel %vm4147, %v4239, %v4241
        %v4248 = vadd.f32 %v4119, %v4242
        %v4249 = vadd.f32 %v4120, %v4237
        %v4250 = vadd.f32 %v4121, %v4243
        %v4251 = vadd.f32 %v4122, %v4241
        %4252 = vset.pattern.permute.xlu0 60
        %4253 = vperm.xlu0 %4252, %v335
        %v4254 = vpop.permute.xlu0 %4253
        %4256 = vset.pattern.permute.xlu0 60
        %4257 = vperm.xlu0 %4256, %v336
        %v4258 = vpop.permute.xlu0 %4257
        %v4260 = vmul.f32 %v4254, %v449
        %v4261 = vmul.f32 %v4254, %v450
        %v4262 = vmul.f32 %v4258, %v451
        %v4263 = vmul.f32 %v4258, %v452
        %4268 = vrot.lane.b32.xlu0 %v4260, 68
        %v4269 = vpop.permute.xlu0 %4268
        %4270 = vrot.lane.b32.xlu0 %v4261, 68
        %v4271 = vpop.permute.xlu0 %4270
        %4272 = vrot.lane.b32.xlu0 %v4262, 68
        %v4273 = vpop.permute.xlu0 %4272
        %4274 = vrot.lane.b32.xlu0 %v4263, 68
        %v4275 = vpop.permute.xlu0 %4274
        %vm4276 = vcmask 556032
        %v4277 = vsel %vm4276, %v4269, %v4271
        %v4278 = vsel %vm4276, %v4273, %v4275
        %v4281 = vadd.f32 %v4152, %v4277
        %v4282 = vadd.f32 %v4153, %v4278
        %4283 = vset.pattern.permute.xlu0 124
        %4284 = vperm.xlu0 %4283, %v335
        %v4285 = vpop.permute.xlu0 %4284
        %4287 = vset.pattern.permute.xlu0 124
        %4288 = vperm.xlu0 %4287, %v336
        %v4289 = vpop.permute.xlu0 %4288
        %v4291 = vmul.f32 %v4285, %v449
        %v4292 = vmul.f32 %v4285, %v450
        %v4293 = vmul.f32 %v4289, %v451
        %v4294 = vmul.f32 %v4289, %v452
        %4299 = vrot.lane.b32.xlu0 %v4291, 68
        %v4300 = vpop.permute.xlu0 %4299
        %4301 = vrot.lane.b32.xlu0 %v4292, 68
        %v4302 = vpop.permute.xlu0 %4301
        %4303 = vrot.lane.b32.xlu0 %v4293, 68
        %v4304 = vpop.permute.xlu0 %4303
        %4305 = vrot.lane.b32.xlu0 %v4294, 68
        %v4306 = vpop.permute.xlu0 %4305
        %v4307 = vsel %vm4276, %v4300, %v4302
        %v4308 = vsel %vm4276, %v4304, %v4306
        %v4311 = vadd.f32 %v4182, %v4307
        %v4312 = vadd.f32 %v4183, %v4308
        %4313 = vset.pattern.permute.xlu0 61
        %4314 = vperm.xlu0 %4313, %v335
        %v4315 = vpop.permute.xlu0 %4314
        %4317 = vset.pattern.permute.xlu0 61
        %4318 = vperm.xlu0 %4317, %v336
        %v4319 = vpop.permute.xlu0 %4318
        %v4321 = vmul.f32 %v4315, %v449
        %v4322 = vmul.f32 %v4315, %v450
        %v4323 = vmul.f32 %v4319, %v451
        %v4324 = vmul.f32 %v4319, %v452
        %4329 = vrot.lane.b32.xlu0 %v4321, 68
        %v4330 = vpop.permute.xlu0 %4329
        %4331 = vrot.lane.b32.xlu0 %v4322, 68
        %v4332 = vpop.permute.xlu0 %4331
        %4333 = vrot.lane.b32.xlu0 %v4323, 68
        %v4334 = vpop.permute.xlu0 %4333
        %4335 = vrot.lane.b32.xlu0 %v4324, 68
        %v4336 = vpop.permute.xlu0 %4335
        %v4337 = vsel %vm4276, %v4330, %v4332
        %v4338 = vsel %vm4276, %v4334, %v4336
        %v4343 = vadd.f32 %v4214, %v4337
        %v4344 = vadd.f32 %v4215, %v4332
        %v4345 = vadd.f32 %v4216, %v4338
        %v4346 = vadd.f32 %v4217, %v4336
        %4347 = vset.pattern.permute.xlu0 125
        %4348 = vperm.xlu0 %4347, %v335
        %v4349 = vpop.permute.xlu0 %4348
        %4351 = vset.pattern.permute.xlu0 125
        %4352 = vperm.xlu0 %4351, %v336
        %v4353 = vpop.permute.xlu0 %4352
        %v4355 = vmul.f32 %v4349, %v449
        %v4356 = vmul.f32 %v4349, %v450
        %v4357 = vmul.f32 %v4353, %v451
        %v4358 = vmul.f32 %v4353, %v452
        %4363 = vrot.lane.b32.xlu0 %v4355, 68
        %v4364 = vpop.permute.xlu0 %4363
        %4365 = vrot.lane.b32.xlu0 %v4356, 68
        %v4366 = vpop.permute.xlu0 %4365
        %4367 = vrot.lane.b32.xlu0 %v4357, 68
        %v4368 = vpop.permute.xlu0 %4367
        %4369 = vrot.lane.b32.xlu0 %v4358, 68
        %v4370 = vpop.permute.xlu0 %4369
        %v4371 = vsel %vm4276, %v4364, %v4366
        %v4372 = vsel %vm4276, %v4368, %v4370
        %v4377 = vadd.f32 %v4248, %v4371
        %v4378 = vadd.f32 %v4249, %v4366
        %v4379 = vadd.f32 %v4250, %v4372
        %v4380 = vadd.f32 %v4251, %v4370
        %4381 = vset.pattern.permute.xlu0 62
        %4382 = vperm.xlu0 %4381, %v335
        %v4383 = vpop.permute.xlu0 %4382
        %4385 = vset.pattern.permute.xlu0 62
        %4386 = vperm.xlu0 %4385, %v336
        %v4387 = vpop.permute.xlu0 %4386
        %v4389 = vmul.f32 %v4383, %v449
        %v4390 = vmul.f32 %v4383, %v450
        %v4391 = vmul.f32 %v4387, %v451
        %v4392 = vmul.f32 %v4387, %v452
        %4397 = vrot.lane.b32.xlu0 %v4389, 66
        %v4398 = vpop.permute.xlu0 %4397
        %4399 = vrot.lane.b32.xlu0 %v4390, 66
        %v4400 = vpop.permute.xlu0 %4399
        %4401 = vrot.lane.b32.xlu0 %v4391, 66
        %v4402 = vpop.permute.xlu0 %4401
        %4403 = vrot.lane.b32.xlu0 %v4392, 66
        %v4404 = vpop.permute.xlu0 %4403
        %vm4405 = vcmask 539648
        %v4406 = vsel %vm4405, %v4398, %v4400
        %v4407 = vsel %vm4405, %v4402, %v4404
        %v4410 = vadd.f32 %v4281, %v4406
        %v4411 = vadd.f32 %v4282, %v4407
        %4412 = vset.pattern.permute.xlu0 126
        %4413 = vperm.xlu0 %4412, %v335
        %v4414 = vpop.permute.xlu0 %4413
        %4416 = vset.pattern.permute.xlu0 126
        %4417 = vperm.xlu0 %4416, %v336
        %v4418 = vpop.permute.xlu0 %4417
        %v4420 = vmul.f32 %v4414, %v449
        %v4421 = vmul.f32 %v4414, %v450
        %v4422 = vmul.f32 %v4418, %v451
        %v4423 = vmul.f32 %v4418, %v452
        %4428 = vrot.lane.b32.xlu0 %v4420, 66
        %v4429 = vpop.permute.xlu0 %4428
        %4430 = vrot.lane.b32.xlu0 %v4421, 66
        %v4431 = vpop.permute.xlu0 %4430
        %4432 = vrot.lane.b32.xlu0 %v4422, 66
        %v4433 = vpop.permute.xlu0 %4432
        %4434 = vrot.lane.b32.xlu0 %v4423, 66
        %v4435 = vpop.permute.xlu0 %4434
        %v4436 = vsel %vm4405, %v4429, %v4431
        %v4437 = vsel %vm4405, %v4433, %v4435
        %v4440 = vadd.f32 %v4311, %v4436
        %v4441 = vadd.f32 %v4312, %v4437
        %4442 = vset.pattern.permute.xlu0 63
        %4443 = vperm.xlu0 %4442, %v335
        %v4444 = vpop.permute.xlu0 %4443
        %4446 = vset.pattern.permute.xlu0 63
        %4447 = vperm.xlu0 %4446, %v336
        %v4448 = vpop.permute.xlu0 %4447
        %v4450 = vmul.f32 %v4444, %v449
        %v4451 = vmul.f32 %v4444, %v450
        %v4452 = vmul.f32 %v4448, %v451
        %v4453 = vmul.f32 %v4448, %v452
        %4458 = vrot.lane.b32.xlu0 %v4450, 66
        %v4459 = vpop.permute.xlu0 %4458
        %4460 = vrot.lane.b32.xlu0 %v4451, 66
        %v4461 = vpop.permute.xlu0 %4460
        %4462 = vrot.lane.b32.xlu0 %v4452, 66
        %v4463 = vpop.permute.xlu0 %4462
        %4464 = vrot.lane.b32.xlu0 %v4453, 66
        %v4465 = vpop.permute.xlu0 %4464
        %v4466 = vsel %vm4405, %v4459, %v4461
        %v4467 = vsel %vm4405, %v4463, %v4465
        %v4472 = vadd.f32 %v4343, %v4466
        %v4473 = vadd.f32 %v4344, %v4461
        %v4474 = vadd.f32 %v4345, %v4467
        %v4475 = vadd.f32 %v4346, %v4465
        %4476 = vset.pattern.permute.xlu0 127
        %4477 = vperm.xlu0 %4476, %v335
        %v4478 = vpop.permute.xlu0 %4477
        %4480 = vset.pattern.permute.xlu0 127
        %4481 = vperm.xlu0 %4480, %v336
        %v4482 = vpop.permute.xlu0 %4481
        %v4484 = vmul.f32 %v4478, %v449
        %v4485 = vmul.f32 %v4478, %v450
        %v4486 = vmul.f32 %v4482, %v451
        %v4487 = vmul.f32 %v4482, %v452
        %4492 = vrot.lane.b32.xlu0 %v4484, 66
        %v4493 = vpop.permute.xlu0 %4492
        %4494 = vrot.lane.b32.xlu0 %v4485, 66
        %v4495 = vpop.permute.xlu0 %4494
        %4496 = vrot.lane.b32.xlu0 %v4486, 66
        %v4497 = vpop.permute.xlu0 %4496
        %4498 = vrot.lane.b32.xlu0 %v4487, 66
        %v4499 = vpop.permute.xlu0 %4498
        %v4500 = vsel %vm4405, %v4493, %v4495
        %v4501 = vsel %vm4405, %v4497, %v4499
        %v4506 = vadd.f32 %v4377, %v4500
        %v4507 = vadd.f32 %v4378, %v4495
        %v4508 = vadd.f32 %v4379, %v4501
        %v4509 = vadd.f32 %v4380, %v4499
        %4514 = vrot.lane.b32.xlu0 %v4472, 127
        %v4515 = vpop.permute.xlu0 %4514
        %4516 = vrot.lane.b32.xlu0 %v4473, 127
        %v4517 = vpop.permute.xlu0 %4516
        %4518 = vrot.lane.b32.xlu0 %v4474, 127
        %v4519 = vpop.permute.xlu0 %4518
        %4520 = vrot.lane.b32.xlu0 %v4475, 127
        %v4521 = vpop.permute.xlu0 %4520
        %vm4522 = vcmask 1039360
        %v4523 = vsel %vm4522, %v4515, %v4517
        %v4524 = vsel %vm4522, %v4519, %v4521
        %v4527 = vadd.f32 %v4410, %v4523
        %v4528 = vadd.f32 %v4411, %v4524
        %4530 = vset.pattern.permute.xlu0 0
        %4531 = vperm.xlu0 %4530, %v337
        %v4532 = vpop.permute.xlu0 %4531
        %4535 = vset.pattern.permute.xlu0 0
        %4536 = vperm.xlu0 %4535, %v338
        %v4537 = vpop.permute.xlu0 %4536
        %v4539 = vadd.f32 %v4527, %v4532
        %v4540 = vadd.f32 %v4528, %v4537
        %v4541 = vmax.f32 %v4539, 0.0
        %v4542 = vmax.f32 %v4540, 0.0
        %4547 = vrot.lane.b32.xlu0 %v4506, 127
        %v4548 = vpop.permute.xlu0 %4547
        %4549 = vrot.lane.b32.xlu0 %v4507, 127
        %v4550 = vpop.permute.xlu0 %4549
        %4551 = vrot.lane.b32.xlu0 %v4508, 127
        %v4552 = vpop.permute.xlu0 %4551
        %4553 = vrot.lane.b32.xlu0 %v4509, 127
        %v4554 = vpop.permute.xlu0 %4553
        %v4555 = vsel %vm4522, %v4548, %v4550
        %v4556 = vsel %vm4522, %v4552, %v4554
        %v4559 = vadd.f32 %v4440, %v4555
        %v4560 = vadd.f32 %v4441, %v4556
        %4561 = vset.pattern.permute.xlu0 1
        %4562 = vperm.xlu0 %4561, %v337
        %v4563 = vpop.permute.xlu0 %4562
        %4565 = vset.pattern.permute.xlu0 1
        %4566 = vperm.xlu0 %4565, %v338
        %v4567 = vpop.permute.xlu0 %4566
        %v4569 = vadd.f32 %v4559, %v4563
        %v4570 = vadd.f32 %v4560, %v4567
        %v4571 = vmax.f32 %v4569, 0.0
        %v4572 = vmax.f32 %v4570, 0.0
        %v4573 = vmul.f32 %v4541, %v343
        %v4574 = vmul.f32 %v4542, %v343
        %v4575 = vmul.f32 %v4571, %v343
        %v4576 = vmul.f32 %v4572, %v343
        %4577 = vadd.xlane.f32.xlu0 %v4573
        %v4578 = vpop.xlane.xlu0 %4577
        %4579 = vadd.xlane.f32.xlu0 %v4574
        %v4580 = vpop.xlane.xlu0 %4579
        %v4581 = vadd.f32 %v4578, 0.0
        %v4582 = vadd.f32 %v4580, 0.0
        %4583 = vadd.xlane.f32.xlu0 %v4575
        %v4584 = vpop.xlane.xlu0 %4583
        %4585 = vadd.xlane.f32.xlu0 %v4576
        %v4586 = vpop.xlane.xlu0 %4585
        %v4587 = vadd.f32 %v4584, 0.0
        %v4588 = vadd.f32 %v4586, 0.0
        %vm4589 = vcmp.eq.s32.totalorder %v340, 0
        %v4590 = vsel %vm4589, 1, 0
        %v4591 = vcvt.s32.f32 %v4590
        %v4592 = vmul.f32 %v4581, %v4591
        %v4593 = vmul.f32 %v4582, %v4591
        %v4594 = vadd.f32 %v4592, 0.0
        %v4595 = vadd.f32 %v4593, 0.0
        %v4596 = vmul.f32 %v4587, %v4591
        %v4597 = vmul.f32 %v4588, %v4591
        %v4598 = vadd.f32 %v4596, 0.0
        %v4599 = vadd.f32 %v4597, 0.0
        %v4600 = vld [vmem:[%s5] sm:$0xff]
        %v4601 = vld [vmem:[%s5 + $0x8] sm:$0xff]
        %v4602 = vld [vmem:[%s5 + $0x10] sm:$0xff]
        %v4603 = vld [vmem:[%s5 + $0x18] sm:$0xff]
        %v4604 = vld [vmem:[%s5 + $0x20] sm:$0xff]
        %v4605 = vld [vmem:[%s5 + $0x28] sm:$0xff]
        %v4606 = vld [vmem:[%s5 + $0x30] sm:$0xff]
        %v4607 = vld [vmem:[%s5 + $0x38] sm:$0xff]
        %v4608 = vld [vmem:[%s5 + $0x40] sm:$0xff]
        %v4609 = vld [vmem:[%s5 + $0x48] sm:$0xff]
        %v4610 = vld [vmem:[%s5 + $0x50] sm:$0xff]
        %v4611 = vld [vmem:[%s5 + $0x58] sm:$0xff]
        %v4612 = vld [vmem:[%s5 + $0x60] sm:$0xff]
        %v4613 = vld [vmem:[%s5 + $0x68] sm:$0xff]
        %v4614 = vld [vmem:[%s5 + $0x70] sm:$0xff]
        %v4615 = vld [vmem:[%s5 + $0x78] sm:$0xff]
        %v4616 = vld [vmem:[%s6] sm:$0xff]
        %v4617 = vld [vmem:[%s6 + $0x8] sm:$0xff]
        %v4618 = vld [vmem:[%s6 + $0x10] sm:$0xff]
        %v4619 = vld [vmem:[%s6 + $0x18] sm:$0xff]
        %v4620 = vld [vmem:[%s6 + $0x20] sm:$0xff]
        %v4621 = vld [vmem:[%s6 + $0x28] sm:$0xff]
        %v4622 = vld [vmem:[%s6 + $0x30] sm:$0xff]
        %v4623 = vld [vmem:[%s6 + $0x38] sm:$0xff]
        %v4624 = vld [vmem:[%s6 + $0x40] sm:$0xff]
        %v4625 = vld [vmem:[%s6 + $0x48] sm:$0xff]
        %v4626 = vld [vmem:[%s6 + $0x50] sm:$0xff]
        %v4627 = vld [vmem:[%s6 + $0x58] sm:$0xff]
        %v4628 = vld [vmem:[%s6 + $0x60] sm:$0xff]
        %v4629 = vld [vmem:[%s6 + $0x68] sm:$0xff]
        %v4630 = vld [vmem:[%s6 + $0x70] sm:$0xff]
        %v4631 = vld [vmem:[%s6 + $0x78] sm:$0xff]
        %vm4632 = vcmask 261120
        %v4634 = vsel %vm4632, %v4600, 0
        %v4637 = vsel %vm4632, %v4601, 0
        %v4640 = vsel %vm4632, %v4602, 0
        %v4643 = vsel %vm4632, %v4603, 0
        %v4646 = vsel %vm4632, %v4604, 0
        %v4649 = vsel %vm4632, %v4605, 0
        %v4652 = vsel %vm4632, %v4606, 0
        %v4655 = vsel %vm4632, %v4607, 0
        %v4658 = vsel %vm4632, %v4608, 0
        %v4661 = vsel %vm4632, %v4609, 0
        %v4664 = vsel %vm4632, %v4610, 0
        %v4667 = vsel %vm4632, %v4611, 0
        %v4670 = vsel %vm4632, %v4612, 0
        %v4673 = vsel %vm4632, %v4613, 0
        %v4676 = vsel %vm4632, %v4614, 0
        %v4679 = vsel %vm4632, %v4615, 0
        %4681 = vmatprep.subr.mxu0 0.0
        %4682 = vmatpush1.msra.mxu0 0.0
        %4683 = vmatprep.subr.mxu0 0.0
        %4684 = vmatpush1.msra.mxu0 0.0
        %4685 = vmatprep.subr.mxu0 0.0
        %4686 = vmatpush1.msra.mxu0 0.0
        %4687 = vmatprep.subr.mxu0 0.0
        %4688 = vmatpush1.msra.mxu0 0.0
        %4689 = vmatprep.subr.mxu0 0.0
        %4690 = vmatpush1.msra.mxu0 0.0
        %4691 = vmatprep.subr.mxu0 0.0
        %4692 = vmatpush1.msra.mxu0 0.0
        %4693 = vmatprep.subr.mxu0 0.0
        %4694 = vmatpush1.msra.mxu0 0.0
        %4695 = vmatprep.subr.mxu0 0.0
        %4696 = vmatpush1.msra.mxu0 0.0
        %4697 = vmatprep.subr.mxu0 0.0
        %4698 = vmatpush1.msra.mxu0 0.0
        %4699 = vmatprep.subr.mxu0 0.0
        %4700 = vmatpush1.msra.mxu0 0.0
        %4701 = vmatprep.subr.mxu0 0.0
        %4702 = vmatpush1.msra.mxu0 0.0
        %4703 = vmatprep.subr.mxu0 0.0
        %4704 = vmatpush1.msra.mxu0 0.0
        %4705 = vmatprep.subr.mxu0 0.0
        %4706 = vmatpush1.msra.mxu0 %v4599
        %4707 = vmatprep.subr.mxu0 0.0
        %4708 = vmatpush1.msra.mxu0 %v4598
        %4709 = vmatprep.subr.mxu0 0.0
        %4710 = vmatpush1.msra.mxu0 %v4595
        %4711 = vmatprep.subr.mxu0 0.0
        %4712 = vmatpush1.msra.mxu0 %v4594
        %4713 = vmatprep.subr.mxu0 0.0
        %4714 = vmatpush2.msra.mxu0 0.0
        %4715 = vmatprep.subr.mxu0 0.0
        %4716 = vmatpush2.msra.mxu0 0.0
        %4717 = vmatprep.subr.mxu0 0.0
        %4718 = vmatpush2.msra.mxu0 0.0
        %4719 = vmatprep.subr.mxu0 0.0
        %4720 = vmatpush2.msra.mxu0 0.0
        %4721 = vmatprep.subr.mxu0 0.0
        %4722 = vmatpush2.msra.mxu0 0.0
        %4723 = vmatprep.subr.mxu0 0.0
        %4724 = vmatpush2.msra.mxu0 0.0
        %4725 = vmatprep.subr.mxu0 0.0
        %4726 = vmatpush2.msra.mxu0 0.0
        %4727 = vmatprep.subr.mxu0 0.0
        %4728 = vmatpush2.msra.mxu0 0.0
        %4729 = vmatprep.subr.mxu0 0.0
        %4730 = vmatpush2.msra.mxu0 0.0
        %4731 = vmatprep.subr.mxu0 0.0
        %4732 = vmatpush2.msra.mxu0 0.0
        %4733 = vmatprep.subr.mxu0 0.0
        %4734 = vmatpush2.msra.mxu0 0.0
        %4735 = vmatprep.subr.mxu0 0.0
        %4736 = vmatpush2.msra.mxu0 0.0
        %4737 = vmatprep.subr.mxu0 0.0
        %4738 = vmatpush2.msra.mxu0 0.0
        %4739 = vmatprep.subr.mxu0 0.0
        %4740 = vmatpush2.msra.mxu0 0.0
        %4741 = vmatprep.subr.mxu0 0.0
        %4742 = vmatpush2.msra.mxu0 0.0
        %4743 = vmatprep.subr.mxu0 0.0
        %4744 = vmatpush2.msra.mxu0 0.0
        %4745 = vmatprep.mubr.f32.mxu0 0.0
        %4746 = vmatmul.mubr.f32.gmra.mxu0 %v4634
        %v4747 = vpop.f32.mrf.mxu0
        %v4748 = vadd.f32 %v4616, %v4747
        %v4749 = vpop.f32.mrf.mxu0
        %4750 = vmatprep.mubr.f32.mxu0 0.0
        %4751 = vmatmul.mubr.f32.gmra.mxu0 %v4637
        %v4752 = vpop.f32.mrf.mxu0
        %v4753 = vadd.f32 %v4617, %v4752
        %v4754 = vpop.f32.mrf.mxu0
        %4755 = vmatprep.mubr.f32.mxu0 0.0
        %4756 = vmatmul.mubr.f32.gmra.mxu0 %v4640
        %v4757 = vpop.f32.mrf.mxu0
        %v4758 = vadd.f32 %v4618, %v4757
        %v4759 = vpop.f32.mrf.mxu0
        %4760 = vmatprep.mubr.f32.mxu0 0.0
        %4761 = vmatmul.mubr.f32.gmra.mxu0 %v4643
        %v4762 = vpop.f32.mrf.mxu0
        %v4763 = vadd.f32 %v4619, %v4762
        %v4764 = vpop.f32.mrf.mxu0
        %4765 = vmatprep.mubr.f32.mxu0 0.0
        %4766 = vmatmul.mubr.f32.gmra.mxu0 %v4646
        %v4767 = vpop.f32.mrf.mxu0
        %v4768 = vadd.f32 %v4620, %v4767
        %v4769 = vpop.f32.mrf.mxu0
        %4770 = vmatprep.mubr.f32.mxu0 0.0
        %4771 = vmatmul.mubr.f32.gmra.mxu0 %v4649
        %v4772 = vpop.f32.mrf.mxu0
        %v4773 = vadd.f32 %v4621, %v4772
        %v4774 = vpop.f32.mrf.mxu0
        %4775 = vmatprep.mubr.f32.mxu0 0.0
        %4776 = vmatmul.mubr.f32.gmra.mxu0 %v4652
        %v4777 = vpop.f32.mrf.mxu0
        %v4778 = vadd.f32 %v4622, %v4777
        %v4779 = vpop.f32.mrf.mxu0
        %4780 = vmatprep.mubr.f32.mxu0 0.0
        %4781 = vmatmul.mubr.f32.gmra.mxu0 %v4655
        %v4782 = vpop.f32.mrf.mxu0
        %v4783 = vadd.f32 %v4623, %v4782
        %v4784 = vpop.f32.mrf.mxu0
        %4785 = vmatprep.mubr.f32.mxu0 0.0
        %4786 = vmatmul.mubr.f32.gmra.mxu0 %v4658
        %v4787 = vpop.f32.mrf.mxu0
        %v4788 = vadd.f32 %v4624, %v4787
        %v4789 = vpop.f32.mrf.mxu0
        %4790 = vmatprep.mubr.f32.mxu0 0.0
        %4791 = vmatmul.mubr.f32.gmra.mxu0 %v4661
        %v4792 = vpop.f32.mrf.mxu0
        %v4793 = vadd.f32 %v4625, %v4792
        %v4794 = vpop.f32.mrf.mxu0
        %4795 = vmatprep.mubr.f32.mxu0 0.0
        %4796 = vmatmul.mubr.f32.gmra.mxu0 %v4664
        %v4797 = vpop.f32.mrf.mxu0
        %v4798 = vadd.f32 %v4626, %v4797
        %v4799 = vpop.f32.mrf.mxu0
        %4800 = vmatprep.mubr.f32.mxu0 0.0
        %4801 = vmatmul.mubr.f32.gmra.mxu0 %v4667
        %v4802 = vpop.f32.mrf.mxu0
        %v4803 = vadd.f32 %v4627, %v4802
        %v4804 = vpop.f32.mrf.mxu0
        %4805 = vmatprep.mubr.f32.mxu0 0.0
        %4806 = vmatmul.mubr.f32.gmra.mxu0 %v4670
        %v4807 = vpop.f32.mrf.mxu0
        %v4808 = vadd.f32 %v4628, %v4807
        %v4809 = vpop.f32.mrf.mxu0
        %4810 = vmatprep.mubr.f32.mxu0 0.0
        %4811 = vmatmul.mubr.f32.gmra.mxu0 %v4673
        %v4812 = vpop.f32.mrf.mxu0
        %v4813 = vadd.f32 %v4629, %v4812
        %v4814 = vpop.f32.mrf.mxu0
        %4815 = vmatprep.mubr.f32.mxu0 0.0
        %4816 = vmatmul.mubr.f32.gmra.mxu0 %v4676
        %v4817 = vpop.f32.mrf.mxu0
        %v4818 = vadd.f32 %v4630, %v4817
        %v4819 = vpop.f32.mrf.mxu0
        %4820 = vmatprep.mubr.f32.mxu0 0.0
        %4821 = vmatmul.mubr.f32.gmra.mxu0 %v4679
        %v4822 = vpop.f32.mrf.mxu0
        %v4823 = vadd.f32 %v4631, %v4822
        %v4824 = vpop.f32.mrf.mxu0
        %4825 = vdwg.mxu0
        %vm4826 = vcmask 7168
        %4827 = vst.msk [vmem:[%s333] sm:$0xff] %vm4826, %v4748
        %4828 = vst.msk [vmem:[%s333 + $0x8] sm:$0xff] %vm4826, %v4753
        %4829 = vst.msk [vmem:[%s333 + $0x10] sm:$0xff] %vm4826, %v4758
        %4830 = vst.msk [vmem:[%s333 + $0x18] sm:$0xff] %vm4826, %v4763
        %4831 = vst.msk [vmem:[%s333 + $0x20] sm:$0xff] %vm4826, %v4768
        %4832 = vst.msk [vmem:[%s333 + $0x28] sm:$0xff] %vm4826, %v4773
        %4833 = vst.msk [vmem:[%s333 + $0x30] sm:$0xff] %vm4826, %v4778
        %4834 = vst.msk [vmem:[%s333 + $0x38] sm:$0xff] %vm4826, %v4783
        %4835 = vst.msk [vmem:[%s333 + $0x40] sm:$0xff] %vm4826, %v4788
        %4836 = vst.msk [vmem:[%s333 + $0x48] sm:$0xff] %vm4826, %v4793
        %4837 = vst.msk [vmem:[%s333 + $0x50] sm:$0xff] %vm4826, %v4798
        %4838 = vst.msk [vmem:[%s333 + $0x58] sm:$0xff] %vm4826, %v4803
        %4839 = vst.msk [vmem:[%s333 + $0x60] sm:$0xff] %vm4826, %v4808
        %4840 = vst.msk [vmem:[%s333 + $0x68] sm:$0xff] %vm4826, %v4813
        %4841 = vst.msk [vmem:[%s333 + $0x70] sm:$0xff] %vm4826, %v4818
        %4842 = vst.msk [vmem:[%s333 + $0x78] sm:$0xff] %vm4826, %v4823
        %p4843 = scmp.lt.s32.totalorder %s18, 1
        %s4844 = scalar_select %p4843, %s18, 1
        %s4845 = smul.addr %s4844, 16
        %s4846 = smul.addr %s4845, 8
        %s4847 = scalar_lea.vmem %s7, %s4846
        // Predicated region
        $region90: #{tpu_custom_call.1} parent=84 // pred_check
          %p4848 = pneg %p188
        $region91: #{tpu_custom_call.1} parent=84 // pred_check_branch
          %4850 = sbr.rel (%p4848) target = $region93
        $region92: #{tpu_custom_call.1} parent=84 // pred_region
          _
        $region93: #{tpu_custom_call.1} parent=84 // pred_fallthru
          _
      $region85: #{tpu_custom_call.1} parent=5 // pred_fallthru
        _
      %p4851 = scmp.le.s32.totalorder 2, %s13
      // Predicated region
      $region94: #{tpu_custom_call.1} parent=5 // pred_check
        %p4852 = pneg %p4851
      $region95: #{tpu_custom_call.1} parent=5 // pred_check_branch
        %4854 = sbr.rel (%p4852) target = $region97
      $region96: #{tpu_custom_call.1} parent=5 // pred_region
        %s4855 = ssub.s32 %s13, 2
        // Predicated region
        $region98: #{tpu_custom_call.1} parent=96 // pred_check
          %p4856 = pneg %p194
        $region99: #{tpu_custom_call.1} parent=96 // pred_check_branch
          %4858 = sbr.rel (%p4856) target = $region101
        $region100: #{tpu_custom_call.1} parent=96 // pred_region
          %p4859 = scmp.lt.s32.totalorder %s19, 1
          %s4860 = scalar_select %p4859, %s19, 1
          %s4861 = smul.addr %s4860, 16
          %s4862 = smul.addr %s4861, 8
          %s4863 = scalar_lea.vmem %s7, %s4862
        $region101: #{tpu_custom_call.1} parent=96 // pred_fallthru
          _
      $region97: #{tpu_custom_call.1} parent=5 // pred_fallthru
        _
    $region6: #{tpu_custom_call.1} parent=1 // loop_footer
      %s17 = sadd.s32 1, %s13
    $region7: #{tpu_custom_call.1} parent=1 // loop_footer_branch
      %12 = sbr.rel target = $region3
    $region8: #{tpu_custom_call.1} parent=1 // loop_exit
      _

</llo_original>
